<compile_context>
chip_gen: v7x
topology: tpu7x:2x2x1
jax: 0.10.0
libtpu: 0.0.40
codegen_flags: <defaults>
</compile_context>

<pallas_src>
import jax
import jax.numpy as jnp
import numpy as np
from jax.experimental import pallas as pl
from jax.experimental.pallas import tpu as pltpu


def dsn_kernel(x_ref,                            # (T, B, D)
               wih_f_ref, whh_f_ref, b_f_ref,    # (D,4H), (H,4H), (1,4H)
               wih_b_ref, whh_b_ref, b_b_ref,    # (D,4H), (H,4H), (1,4H)
               wout_ref,                         # (2, H)  row0=fwd, row1=bwd
               bout_ref,                         # (1, 1)  in SMEM
               probs_ref,                        # (T, B)  lane-dense output
               zf_scr, zb_scr,                   # (T, B, 4H) hoisted projections
               hf_scr, hb_scr):                  # (T, B, H) hidden states
    T, B, D = x_ref.shape
    H = whh_f_ref.shape[0]

    whh_f = whh_f_ref[...]
    whh_b = whh_b_ref[...]

    # ---- Hoisted input projections: one big MXU matmul per direction, with the
    #      combined (bih + bhh) bias folded in (no per-step broadcast/add). ----
    x2 = x_ref[...].reshape(T * B, D)
    zf = jnp.dot(x2, wih_f_ref[...], preferred_element_type=jnp.float32) + b_f_ref[...]
    zb = jnp.dot(x2, wih_b_ref[...], preferred_element_type=jnp.float32) + b_b_ref[...]
    zf_scr[...] = zf.reshape(T, B, 4 * H)
    zb_scr[...] = zb.reshape(T, B, 4 * H)

    def gates(z, c_prev):
        # PyTorch gate order: i, f, g, o.
        # TODO(synk): for large H, reorder weight columns so each gate is a
        #             lane-aligned block instead of sub-128 slices.
        i = jax.nn.sigmoid(z[:, 0 * H:1 * H])
        f = jax.nn.sigmoid(z[:, 1 * H:2 * H])
        g = jnp.tanh(z[:, 2 * H:3 * H])
        o = jax.nn.sigmoid(z[:, 3 * H:4 * H])
        c = f * c_prev + i * g
        h = o * jnp.tanh(c)
        return h, c

    zeros = jnp.zeros((B, H), jnp.float32)

    # ---- Fused forward + backward recurrence (data-independent directions). ----
    def body(t, carry):
        hf, cf, hb, cb = carry
        idx = T - 1 - t
        zf_t = zf_scr[t] + jnp.dot(hf, whh_f, preferred_element_type=jnp.float32)
        zb_t = zb_scr[idx] + jnp.dot(hb, whh_b, preferred_element_type=jnp.float32)
        hf, cf = gates(zf_t, cf)
        hb, cb = gates(zb_t, cb)
        hf_scr[t] = hf
        hb_scr[idx] = hb
        return hf, cf, hb, cb

    jax.lax.fori_loop(0, T, body, (zeros, zeros, zeros, zeros), unroll=True)

    # ---- Output head: no concat, no N=1 MXU matmul.
    #      logits = hf . w_f + hb . w_b + bias  via VPU mul + lane reduction. ----
    wof = wout_ref[0:1, :]                       # (1, H)
    wob = wout_ref[1:2, :]                       # (1, H)
    logits = (jnp.sum(hf_scr[...] * wof, axis=-1)
              + jnp.sum(hb_scr[...] * wob, axis=-1)
              + bout_ref[0, 0])                  # (T, B)
    probs_ref[...] = jax.nn.sigmoid(logits)


def dsn_forward(x, params):
    """x: (T, B, D) float32 -> probs (T, B, 1) float32."""
    T, B, D = x.shape
    H = params["whh_f"].shape[1]                 # whh_f is PyTorch-shaped (4H, H)

    # Kernel-friendly (pre-transposed) parameter tensors.
    wih_f_t = params["wih_f"].T                  # (D, 4H)
    whh_f_t = params["whh_f"].T                  # (H, 4H)
    b_f = (params["bih_f"] + params["bhh_f"]).reshape(1, 4 * H)
    wih_b_t = params["wih_b"].T
    whh_b_t = params["whh_b"].T
    b_b = (params["bih_b"] + params["bhh_b"]).reshape(1, 4 * H)
    wout2 = params["wout"].reshape(2, H)         # row0 = fwd half, row1 = bwd half
    bout = params["bout"].reshape(1, 1)

    vmem = pl.BlockSpec(memory_space=pltpu.MemorySpace.VMEM)
    smem = pl.BlockSpec(memory_space=pltpu.MemorySpace.SMEM)

    probs2 = pl.pallas_call(
        dsn_kernel,
        out_shape=jax.ShapeDtypeStruct((T, B), jnp.float32),
        in_specs=[vmem] * 8 + [smem],
        out_specs=vmem,
        scratch_shapes=[
            pltpu.VMEM((T, B, 4 * H), jnp.float32),   # zf (hoisted fwd projections)
            pltpu.VMEM((T, B, 4 * H), jnp.float32),   # zb (hoisted bwd projections)
            pltpu.VMEM((T, B, H), jnp.float32),       # hf
            pltpu.VMEM((T, B, H), jnp.float32),       # hb
        ],
    )(x, wih_f_t, whh_f_t, b_f, wih_b_t, whh_b_t, b_b, wout2, bout)
    return probs2.reshape(T, B, 1)


# -------- pure-JAX reference (same math as torch.nn.LSTM bidirectional) ------
def _lstm_dir_ref(x, wih, whh, bih, bhh, reverse):
    T, B, _ = x.shape
    H = whh.shape[1]

    def cell(carry, x_t):
        h, c = carry
        z = x_t @ wih.T + h @ whh.T + bih + bhh
        i = jax.nn.sigmoid(z[:, 0 * H:1 * H])
        f = jax.nn.sigmoid(z[:, 1 * H:2 * H])
        g = jnp.tanh(z[:, 2 * H:3 * H])
        o = jax.nn.sigmoid(z[:, 3 * H:4 * H])
        c = f * c + i * g
        h = o * jnp.tanh(c)
        return (h, c), h

    xs = x[::-1] if reverse else x
    init = (jnp.zeros((B, H), jnp.float32), jnp.zeros((B, H), jnp.float32))
    _, hs = jax.lax.scan(cell, init, xs)
    return hs[::-1] if reverse else hs


def dsn_reference(x, p):
    hf = _lstm_dir_ref(x, p["wih_f"], p["whh_f"], p["bih_f"], p["bhh_f"], False)
    hb = _lstm_dir_ref(x, p["wih_b"], p["whh_b"], p["bih_b"], p["bhh_b"], True)
    h = jnp.concatenate([hf, hb], axis=-1)
    return jax.nn.sigmoid(h @ p["wout"].T + p["bout"])


if __name__ == "__main__":
    # Small shapes consistent with the module's forward: x (seq_len, batch, input_size)
    T, B, D, H = 8, 2, 32, 16
    key = jax.random.PRNGKey(0)
    keys = jax.random.split(key, 12)
    s = 1.0 / np.sqrt(H)

    def u(k, shape):
        return jax.random.uniform(k, shape, jnp.float32, -s, s)

    params = {
        "wih_f": u(keys[0], (4 * H, D)),
        "whh_f": u(keys[1], (4 * H, H)),
        "bih_f": u(keys[2], (4 * H,)),
        "bhh_f": u(keys[3], (4 * H,)),
        "wih_b": u(keys[4], (4 * H, D)),
        "whh_b": u(keys[5], (4 * H, H)),
        "bih_b": u(keys[6], (4 * H,)),
        "bhh_b": u(keys[7], (4 * H,)),
        "wout": u(keys[8], (1, 2 * H)),
        "bout": u(keys[9], (1,)),
    }
    x = jax.random.normal(keys[10], (T, B, D), jnp.float32)

    probs = jax.block_until_ready(dsn_forward(x, params))
    ref = jax.block_until_ready(dsn_reference(x, params))

    assert probs.shape == (T, B, 1), probs.shape
    np.testing.assert_allclose(np.asarray(probs), np.asarray(ref),
                               rtol=1e-5, atol=1e-5)
    print("KERNEL_OK")
</pallas_src>

<mosaic_0001>
module attributes {stable_mosaic.version = 11 : i64} {
  func.func @dsn_kernel(%arg0: memref<8x2x32xf32, #tpu.memory_space<vmem>>, %arg1: memref<32x64xf32, #tpu.memory_space<vmem>>, %arg2: memref<16x64xf32, #tpu.memory_space<vmem>>, %arg3: memref<1x64xf32, #tpu.memory_space<vmem>>, %arg4: memref<32x64xf32, #tpu.memory_space<vmem>>, %arg5: memref<16x64xf32, #tpu.memory_space<vmem>>, %arg6: memref<1x64xf32, #tpu.memory_space<vmem>>, %arg7: memref<2x16xf32, #tpu.memory_space<vmem>>, %arg8: memref<1x1xf32, #tpu.memory_space<smem>>, %arg9: memref<8x2xf32, #tpu.memory_space<vmem>>, %arg10: memref<8x2x64xf32, #tpu.memory_space<vmem>>, %arg11: memref<8x2x64xf32, #tpu.memory_space<vmem>>, %arg12: memref<8x2x16xf32, #tpu.memory_space<vmem>>, %arg13: memref<8x2x16xf32, #tpu.memory_space<vmem>>) attributes {dimension_semantics = [], scalar_prefetch = 0 : i64, scratch_operands = 4 : i64, tpu.core_type = #tpu.core_type<tc>} {
    %c0 = arith.constant 0 : index
    %c0_0 = arith.constant 0 : index
    %0 = vector.load %arg2[%c0, %c0_0] : memref<16x64xf32, #tpu.memory_space<vmem>>, vector<16x64xf32>
    %c0_1 = arith.constant 0 : index
    %c0_2 = arith.constant 0 : index
    %1 = vector.load %arg5[%c0_1, %c0_2] : memref<16x64xf32, #tpu.memory_space<vmem>>, vector<16x64xf32>
    %c0_3 = arith.constant 0 : index
    %c0_4 = arith.constant 0 : index
    %c0_5 = arith.constant 0 : index
    %2 = vector.load %arg0[%c0_3, %c0_4, %c0_5] : memref<8x2x32xf32, #tpu.memory_space<vmem>>, vector<8x2x32xf32>
    %3 = vector.shape_cast %2 : vector<8x2x32xf32> to vector<16x32xf32>
    %c0_6 = arith.constant 0 : index
    %c0_7 = arith.constant 0 : index
    %4 = vector.load %arg1[%c0_6, %c0_7] : memref<32x64xf32, #tpu.memory_space<vmem>>, vector<32x64xf32>
    %cst = arith.constant dense<0.000000e+00> : vector<16x64xf32>
    %5 = tpu.matmul %3, %4, %cst {dimension_numbers = #tpu.dot_dimension_numbers<[1], [0], [0], [1], [0, 0, 1, 1], [], []>} : vector<16x32xf32>, vector<32x64xf32>, vector<16x64xf32> -> vector<16x64xf32>
    %c0_8 = arith.constant 0 : index
    %c0_9 = arith.constant 0 : index
    %6 = vector.load %arg3[%c0_8, %c0_9] : memref<1x64xf32, #tpu.memory_space<vmem>>, vector<1x64xf32>
    %7 = vector.broadcast %6 : vector<1x64xf32> to vector<16x64xf32>
    %8 = arith.addf %5, %7 : vector<16x64xf32>
    %c0_10 = arith.constant 0 : index
    %c0_11 = arith.constant 0 : index
    %9 = vector.load %arg4[%c0_10, %c0_11] : memref<32x64xf32, #tpu.memory_space<vmem>>, vector<32x64xf32>
    %cst_12 = arith.constant dense<0.000000e+00> : vector<16x64xf32>
    %10 = tpu.matmul %3, %9, %cst_12 {dimension_numbers = #tpu.dot_dimension_numbers<[1], [0], [0], [1], [0, 0, 1, 1], [], []>} : vector<16x32xf32>, vector<32x64xf32>, vector<16x64xf32> -> vector<16x64xf32>
    %c0_13 = arith.constant 0 : index
    %c0_14 = arith.constant 0 : index
    %11 = vector.load %arg6[%c0_13, %c0_14] : memref<1x64xf32, #tpu.memory_space<vmem>>, vector<1x64xf32>
    %12 = vector.broadcast %11 : vector<1x64xf32> to vector<16x64xf32>
    %13 = arith.addf %10, %12 : vector<16x64xf32>
    %14 = vector.shape_cast %8 : vector<16x64xf32> to vector<8x2x64xf32>
    %c0_15 = arith.constant 0 : index
    %c0_16 = arith.constant 0 : index
    %c0_17 = arith.constant 0 : index
    %15 = vector.load %arg10[%c0_15, %c0_16, %c0_17] : memref<8x2x64xf32, #tpu.memory_space<vmem>>, vector<8x2x64xf32>
    tpu.vector_store %arg10[%c0_15, %c0_16, %c0_17], %14 {strides = array<i32>} : memref<8x2x64xf32, #tpu.memory_space<vmem>>, vector<8x2x64xf32>,
    %16 = vector.shape_cast %13 : vector<16x64xf32> to vector<8x2x64xf32>
    %c0_18 = arith.constant 0 : index
    %c0_19 = arith.constant 0 : index
    %c0_20 = arith.constant 0 : index
    %17 = vector.load %arg11[%c0_18, %c0_19, %c0_20] : memref<8x2x64xf32, #tpu.memory_space<vmem>>, vector<8x2x64xf32>
    tpu.vector_store %arg11[%c0_18, %c0_19, %c0_20], %16 {strides = array<i32>} : memref<8x2x64xf32, #tpu.memory_space<vmem>>, vector<8x2x64xf32>,
    %cst_21 = arith.constant 0.000000e+00 : f32
    %18 = vector.broadcast %cst_21 : f32 to vector<2x16xf32>
    %c0_i32 = arith.constant 0 : i32
    %c7_i32 = arith.constant 7 : i32
    %19 = arith.subi %c7_i32, %c0_i32 : i32
    %20 = arith.index_cast %c0_i32 : i32 to index
    %c0_22 = arith.constant 0 : index
    %c0_23 = arith.constant 0 : index
    %21 = vector.load %arg10[%20, %c0_22, %c0_23] : memref<8x2x64xf32, #tpu.memory_space<vmem>>, vector<1x2x64xf32>
    %22 = vector.shape_cast %21 : vector<1x2x64xf32> to vector<2x64xf32>
    %cst_24 = arith.constant dense<0.000000e+00> : vector<2x64xf32>
    %23 = tpu.matmul %18, %0, %cst_24 {dimension_numbers = #tpu.dot_dimension_numbers<[1], [0], [0], [1], [0, 0, 1, 1], [], []>} : vector<2x16xf32>, vector<16x64xf32>, vector<2x64xf32> -> vector<2x64xf32>
    %24 = arith.addf %22, %23 : vector<2x64xf32>
    %25 = arith.index_cast %19 : i32 to index
    %c0_25 = arith.constant 0 : index
    %c0_26 = arith.constant 0 : index
    %26 = vector.load %arg11[%25, %c0_25, %c0_26] : memref<8x2x64xf32, #tpu.memory_space<vmem>>, vector<1x2x64xf32>
    %27 = vector.shape_cast %26 : vector<1x2x64xf32> to vector<2x64xf32>
    %cst_27 = arith.constant dense<0.000000e+00> : vector<2x64xf32>
    %28 = tpu.matmul %18, %1, %cst_27 {dimension_numbers = #tpu.dot_dimension_numbers<[1], [0], [0], [1], [0, 0, 1, 1], [], []>} : vector<2x16xf32>, vector<16x64xf32>, vector<2x64xf32> -> vector<2x64xf32>
    %29 = arith.addf %27, %28 : vector<2x64xf32>
    %30 = vector.extract_strided_slice %24 {offsets = [0, 0], sizes = [2, 16], strides = [1, 1]} : vector<2x64xf32> to vector<2x16xf32>
    %31 = arith.negf %30 : vector<2x16xf32>
    %32 = math.exp %31 : vector<2x16xf32>
    %cst_28 = arith.constant 1.000000e+00 : f32
    %33 = vector.broadcast %cst_28 : f32 to vector<2x16xf32>
    %34 = arith.addf %33, %32 : vector<2x16xf32>
    %35 = arith.divf %33, %34 : vector<2x16xf32>
    %36 = vector.extract_strided_slice %24 {offsets = [0, 16], sizes = [2, 16], strides = [1, 1]} : vector<2x64xf32> to vector<2x16xf32>
    %37 = arith.negf %36 : vector<2x16xf32>
    %38 = math.exp %37 : vector<2x16xf32>
    %cst_29 = arith.constant 1.000000e+00 : f32
    %39 = vector.broadcast %cst_29 : f32 to vector<2x16xf32>
    %40 = arith.addf %39, %38 : vector<2x16xf32>
    %41 = arith.divf %39, %40 : vector<2x16xf32>
    %42 = vector.extract_strided_slice %24 {offsets = [0, 32], sizes = [2, 16], strides = [1, 1]} : vector<2x64xf32> to vector<2x16xf32>
    %43 = math.tanh %42 : vector<2x16xf32>
    %44 = vector.extract_strided_slice %24 {offsets = [0, 48], sizes = [2, 16], strides = [1, 1]} : vector<2x64xf32> to vector<2x16xf32>
    %45 = arith.negf %44 : vector<2x16xf32>
    %46 = math.exp %45 : vector<2x16xf32>
    %cst_30 = arith.constant 1.000000e+00 : f32
    %47 = vector.broadcast %cst_30 : f32 to vector<2x16xf32>
    %48 = arith.addf %47, %46 : vector<2x16xf32>
    %49 = arith.divf %47, %48 : vector<2x16xf32>
    %50 = arith.mulf %41, %18 : vector<2x16xf32>
    %51 = arith.mulf %35, %43 : vector<2x16xf32>
    %52 = arith.addf %50, %51 : vector<2x16xf32>
    %53 = math.tanh %52 : vector<2x16xf32>
    %54 = arith.mulf %49, %53 : vector<2x16xf32>
    %55 = vector.extract_strided_slice %29 {offsets = [0, 0], sizes = [2, 16], strides = [1, 1]} : vector<2x64xf32> to vector<2x16xf32>
    %56 = arith.negf %55 : vector<2x16xf32>
    %57 = math.exp %56 : vector<2x16xf32>
    %cst_31 = arith.constant 1.000000e+00 : f32
    %58 = vector.broadcast %cst_31 : f32 to vector<2x16xf32>
    %59 = arith.addf %58, %57 : vector<2x16xf32>
    %60 = arith.divf %58, %59 : vector<2x16xf32>
    %61 = vector.extract_strided_slice %29 {offsets = [0, 16], sizes = [2, 16], strides = [1, 1]} : vector<2x64xf32> to vector<2x16xf32>
    %62 = arith.negf %61 : vector<2x16xf32>
    %63 = math.exp %62 : vector<2x16xf32>
    %cst_32 = arith.constant 1.000000e+00 : f32
    %64 = vector.broadcast %cst_32 : f32 to vector<2x16xf32>
    %65 = arith.addf %64, %63 : vector<2x16xf32>
    %66 = arith.divf %64, %65 : vector<2x16xf32>
    %67 = vector.extract_strided_slice %29 {offsets = [0, 32], sizes = [2, 16], strides = [1, 1]} : vector<2x64xf32> to vector<2x16xf32>
    %68 = math.tanh %67 : vector<2x16xf32>
    %69 = vector.extract_strided_slice %29 {offsets = [0, 48], sizes = [2, 16], strides = [1, 1]} : vector<2x64xf32> to vector<2x16xf32>
    %70 = arith.negf %69 : vector<2x16xf32>
    %71 = math.exp %70 : vector<2x16xf32>
    %cst_33 = arith.constant 1.000000e+00 : f32
    %72 = vector.broadcast %cst_33 : f32 to vector<2x16xf32>
    %73 = arith.addf %72, %71 : vector<2x16xf32>
    %74 = arith.divf %72, %73 : vector<2x16xf32>
    %75 = arith.mulf %66, %18 : vector<2x16xf32>
    %76 = arith.mulf %60, %68 : vector<2x16xf32>
    %77 = arith.addf %75, %76 : vector<2x16xf32>
    %78 = math.tanh %77 : vector<2x16xf32>
    %79 = arith.mulf %74, %78 : vector<2x16xf32>
    %80 = arith.index_cast %c0_i32 : i32 to index
    %c0_34 = arith.constant 0 : index
    %c0_35 = arith.constant 0 : index
    %81 = vector.load %arg12[%80, %c0_34, %c0_35] : memref<8x2x16xf32, #tpu.memory_space<vmem>>, vector<1x2x16xf32>
    %82 = vector.shape_cast %81 : vector<1x2x16xf32> to vector<2x16xf32>
    %83 = vector.shape_cast %54 : vector<2x16xf32> to vector<1x2x16xf32>
    tpu.vector_store %arg12[%80, %c0_34, %c0_35], %83 {strides = array<i32>} : memref<8x2x16xf32, #tpu.memory_space<vmem>>, vector<1x2x16xf32>,
    %84 = arith.index_cast %19 : i32 to index
    %c0_36 = arith.constant 0 : index
    %c0_37 = arith.constant 0 : index
    %85 = vector.load %arg13[%84, %c0_36, %c0_37] : memref<8x2x16xf32, #tpu.memory_space<vmem>>, vector<1x2x16xf32>
    %86 = vector.shape_cast %85 : vector<1x2x16xf32> to vector<2x16xf32>
    %87 = vector.shape_cast %79 : vector<2x16xf32> to vector<1x2x16xf32>
    tpu.vector_store %arg13[%84, %c0_36, %c0_37], %87 {strides = array<i32>} : memref<8x2x16xf32, #tpu.memory_space<vmem>>, vector<1x2x16xf32>,
    %c1_i32 = arith.constant 1 : i32
    %c7_i32_38 = arith.constant 7 : i32
    %88 = arith.subi %c7_i32_38, %c1_i32 : i32
    %89 = arith.index_cast %c1_i32 : i32 to index
    %c0_39 = arith.constant 0 : index
    %c0_40 = arith.constant 0 : index
    %90 = vector.load %arg10[%89, %c0_39, %c0_40] : memref<8x2x64xf32, #tpu.memory_space<vmem>>, vector<1x2x64xf32>
    %91 = vector.shape_cast %90 : vector<1x2x64xf32> to vector<2x64xf32>
    %cst_41 = arith.constant dense<0.000000e+00> : vector<2x64xf32>
    %92 = tpu.matmul %54, %0, %cst_41 {dimension_numbers = #tpu.dot_dimension_numbers<[1], [0], [0], [1], [0, 0, 1, 1], [], []>} : vector<2x16xf32>, vector<16x64xf32>, vector<2x64xf32> -> vector<2x64xf32>
    %93 = arith.addf %91, %92 : vector<2x64xf32>
    %94 = arith.index_cast %88 : i32 to index
    %c0_42 = arith.constant 0 : index
    %c0_43 = arith.constant 0 : index
    %95 = vector.load %arg11[%94, %c0_42, %c0_43] : memref<8x2x64xf32, #tpu.memory_space<vmem>>, vector<1x2x64xf32>
    %96 = vector.shape_cast %95 : vector<1x2x64xf32> to vector<2x64xf32>
    %cst_44 = arith.constant dense<0.000000e+00> : vector<2x64xf32>
    %97 = tpu.matmul %79, %1, %cst_44 {dimension_numbers = #tpu.dot_dimension_numbers<[1], [0], [0], [1], [0, 0, 1, 1], [], []>} : vector<2x16xf32>, vector<16x64xf32>, vector<2x64xf32> -> vector<2x64xf32>
    %98 = arith.addf %96, %97 : vector<2x64xf32>
    %99 = vector.extract_strided_slice %93 {offsets = [0, 0], sizes = [2, 16], strides = [1, 1]} : vector<2x64xf32> to vector<2x16xf32>
    %100 = arith.negf %99 : vector<2x16xf32>
    %101 = math.exp %100 : vector<2x16xf32>
    %cst_45 = arith.constant 1.000000e+00 : f32
    %102 = vector.broadcast %cst_45 : f32 to vector<2x16xf32>
    %103 = arith.addf %102, %101 : vector<2x16xf32>
    %104 = arith.divf %102, %103 : vector<2x16xf32>
    %105 = vector.extract_strided_slice %93 {offsets = [0, 16], sizes = [2, 16], strides = [1, 1]} : vector<2x64xf32> to vector<2x16xf32>
    %106 = arith.negf %105 : vector<2x16xf32>
    %107 = math.exp %106 : vector<2x16xf32>
    %cst_46 = arith.constant 1.000000e+00 : f32
    %108 = vector.broadcast %cst_46 : f32 to vector<2x16xf32>
    %109 = arith.addf %108, %107 : vector<2x16xf32>
    %110 = arith.divf %108, %109 : vector<2x16xf32>
    %111 = vector.extract_strided_slice %93 {offsets = [0, 32], sizes = [2, 16], strides = [1, 1]} : vector<2x64xf32> to vector<2x16xf32>
    %112 = math.tanh %111 : vector<2x16xf32>
    %113 = vector.extract_strided_slice %93 {offsets = [0, 48], sizes = [2, 16], strides = [1, 1]} : vector<2x64xf32> to vector<2x16xf32>
    %114 = arith.negf %113 : vector<2x16xf32>
    %115 = math.exp %114 : vector<2x16xf32>
    %cst_47 = arith.constant 1.000000e+00 : f32
    %116 = vector.broadcast %cst_47 : f32 to vector<2x16xf32>
    %117 = arith.addf %116, %115 : vector<2x16xf32>
    %118 = arith.divf %116, %117 : vector<2x16xf32>
    %119 = arith.mulf %110, %52 : vector<2x16xf32>
    %120 = arith.mulf %104, %112 : vector<2x16xf32>
    %121 = arith.addf %119, %120 : vector<2x16xf32>
    %122 = math.tanh %121 : vector<2x16xf32>
    %123 = arith.mulf %118, %122 : vector<2x16xf32>
    %124 = vector.extract_strided_slice %98 {offsets = [0, 0], sizes = [2, 16], strides = [1, 1]} : vector<2x64xf32> to vector<2x16xf32>
    %125 = arith.negf %124 : vector<2x16xf32>
    %126 = math.exp %125 : vector<2x16xf32>
    %cst_48 = arith.constant 1.000000e+00 : f32
    %127 = vector.broadcast %cst_48 : f32 to vector<2x16xf32>
    %128 = arith.addf %127, %126 : vector<2x16xf32>
    %129 = arith.divf %127, %128 : vector<2x16xf32>
    %130 = vector.extract_strided_slice %98 {offsets = [0, 16], sizes = [2, 16], strides = [1, 1]} : vector<2x64xf32> to vector<2x16xf32>
    %131 = arith.negf %130 : vector<2x16xf32>
    %132 = math.exp %131 : vector<2x16xf32>
    %cst_49 = arith.constant 1.000000e+00 : f32
    %133 = vector.broadcast %cst_49 : f32 to vector<2x16xf32>
    %134 = arith.addf %133, %132 : vector<2x16xf32>
    %135 = arith.divf %133, %134 : vector<2x16xf32>
    %136 = vector.extract_strided_slice %98 {offsets = [0, 32], sizes = [2, 16], strides = [1, 1]} : vector<2x64xf32> to vector<2x16xf32>
    %137 = math.tanh %136 : vector<2x16xf32>
    %138 = vector.extract_strided_slice %98 {offsets = [0, 48], sizes = [2, 16], strides = [1, 1]} : vector<2x64xf32> to vector<2x16xf32>
    %139 = arith.negf %138 : vector<2x16xf32>
    %140 = math.exp %139 : vector<2x16xf32>
    %cst_50 = arith.constant 1.000000e+00 : f32
    %141 = vector.broadcast %cst_50 : f32 to vector<2x16xf32>
    %142 = arith.addf %141, %140 : vector<2x16xf32>
    %143 = arith.divf %141, %142 : vector<2x16xf32>
    %144 = arith.mulf %135, %77 : vector<2x16xf32>
    %145 = arith.mulf %129, %137 : vector<2x16xf32>
    %146 = arith.addf %144, %145 : vector<2x16xf32>
    %147 = math.tanh %146 : vector<2x16xf32>
    %148 = arith.mulf %143, %147 : vector<2x16xf32>
    %149 = arith.index_cast %c1_i32 : i32 to index
    %c0_51 = arith.constant 0 : index
    %c0_52 = arith.constant 0 : index
    %150 = vector.load %arg12[%149, %c0_51, %c0_52] : memref<8x2x16xf32, #tpu.memory_space<vmem>>, vector<1x2x16xf32>
    %151 = vector.shape_cast %150 : vector<1x2x16xf32> to vector<2x16xf32>
    %152 = vector.shape_cast %123 : vector<2x16xf32> to vector<1x2x16xf32>
    tpu.vector_store %arg12[%149, %c0_51, %c0_52], %152 {strides = array<i32>} : memref<8x2x16xf32, #tpu.memory_space<vmem>>, vector<1x2x16xf32>,
    %153 = arith.index_cast %88 : i32 to index
    %c0_53 = arith.constant 0 : index
    %c0_54 = arith.constant 0 : index
    %154 = vector.load %arg13[%153, %c0_53, %c0_54] : memref<8x2x16xf32, #tpu.memory_space<vmem>>, vector<1x2x16xf32>
    %155 = vector.shape_cast %154 : vector<1x2x16xf32> to vector<2x16xf32>
    %156 = vector.shape_cast %148 : vector<2x16xf32> to vector<1x2x16xf32>
    tpu.vector_store %arg13[%153, %c0_53, %c0_54], %156 {strides = array<i32>} : memref<8x2x16xf32, #tpu.memory_space<vmem>>, vector<1x2x16xf32>,
    %c2_i32 = arith.constant 2 : i32
    %c7_i32_55 = arith.constant 7 : i32
    %157 = arith.subi %c7_i32_55, %c2_i32 : i32
    %158 = arith.index_cast %c2_i32 : i32 to index
    %c0_56 = arith.constant 0 : index
    %c0_57 = arith.constant 0 : index
    %159 = vector.load %arg10[%158, %c0_56, %c0_57] : memref<8x2x64xf32, #tpu.memory_space<vmem>>, vector<1x2x64xf32>
    %160 = vector.shape_cast %159 : vector<1x2x64xf32> to vector<2x64xf32>
    %cst_58 = arith.constant dense<0.000000e+00> : vector<2x64xf32>
    %161 = tpu.matmul %123, %0, %cst_58 {dimension_numbers = #tpu.dot_dimension_numbers<[1], [0], [0], [1], [0, 0, 1, 1], [], []>} : vector<2x16xf32>, vector<16x64xf32>, vector<2x64xf32> -> vector<2x64xf32>
    %162 = arith.addf %160, %161 : vector<2x64xf32>
    %163 = arith.index_cast %157 : i32 to index
    %c0_59 = arith.constant 0 : index
    %c0_60 = arith.constant 0 : index
    %164 = vector.load %arg11[%163, %c0_59, %c0_60] : memref<8x2x64xf32, #tpu.memory_space<vmem>>, vector<1x2x64xf32>
    %165 = vector.shape_cast %164 : vector<1x2x64xf32> to vector<2x64xf32>
    %cst_61 = arith.constant dense<0.000000e+00> : vector<2x64xf32>
    %166 = tpu.matmul %148, %1, %cst_61 {dimension_numbers = #tpu.dot_dimension_numbers<[1], [0], [0], [1], [0, 0, 1, 1], [], []>} : vector<2x16xf32>, vector<16x64xf32>, vector<2x64xf32> -> vector<2x64xf32>
    %167 = arith.addf %165, %166 : vector<2x64xf32>
    %168 = vector.extract_strided_slice %162 {offsets = [0, 0], sizes = [2, 16], strides = [1, 1]} : vector<2x64xf32> to vector<2x16xf32>
    %169 = arith.negf %168 : vector<2x16xf32>
    %170 = math.exp %169 : vector<2x16xf32>
    %cst_62 = arith.constant 1.000000e+00 : f32
    %171 = vector.broadcast %cst_62 : f32 to vector<2x16xf32>
    %172 = arith.addf %171, %170 : vector<2x16xf32>
    %173 = arith.divf %171, %172 : vector<2x16xf32>
    %174 = vector.extract_strided_slice %162 {offsets = [0, 16], sizes = [2, 16], strides = [1, 1]} : vector<2x64xf32> to vector<2x16xf32>
    %175 = arith.negf %174 : vector<2x16xf32>
    %176 = math.exp %175 : vector<2x16xf32>
    %cst_63 = arith.constant 1.000000e+00 : f32
    %177 = vector.broadcast %cst_63 : f32 to vector<2x16xf32>
    %178 = arith.addf %177, %176 : vector<2x16xf32>
    %179 = arith.divf %177, %178 : vector<2x16xf32>
    %180 = vector.extract_strided_slice %162 {offsets = [0, 32], sizes = [2, 16], strides = [1, 1]} : vector<2x64xf32> to vector<2x16xf32>
    %181 = math.tanh %180 : vector<2x16xf32>
    %182 = vector.extract_strided_slice %162 {offsets = [0, 48], sizes = [2, 16], strides = [1, 1]} : vector<2x64xf32> to vector<2x16xf32>
    %183 = arith.negf %182 : vector<2x16xf32>
    %184 = math.exp %183 : vector<2x16xf32>
    %cst_64 = arith.constant 1.000000e+00 : f32
    %185 = vector.broadcast %cst_64 : f32 to vector<2x16xf32>
    %186 = arith.addf %185, %184 : vector<2x16xf32>
    %187 = arith.divf %185, %186 : vector<2x16xf32>
    %188 = arith.mulf %179, %121 : vector<2x16xf32>
    %189 = arith.mulf %173, %181 : vector<2x16xf32>
    %190 = arith.addf %188, %189 : vector<2x16xf32>
    %191 = math.tanh %190 : vector<2x16xf32>
    %192 = arith.mulf %187, %191 : vector<2x16xf32>
    %193 = vector.extract_strided_slice %167 {offsets = [0, 0], sizes = [2, 16], strides = [1, 1]} : vector<2x64xf32> to vector<2x16xf32>
    %194 = arith.negf %193 : vector<2x16xf32>
    %195 = math.exp %194 : vector<2x16xf32>
    %cst_65 = arith.constant 1.000000e+00 : f32
    %196 = vector.broadcast %cst_65 : f32 to vector<2x16xf32>
    %197 = arith.addf %196, %195 : vector<2x16xf32>
    %198 = arith.divf %196, %197 : vector<2x16xf32>
    %199 = vector.extract_strided_slice %167 {offsets = [0, 16], sizes = [2, 16], strides = [1, 1]} : vector<2x64xf32> to vector<2x16xf32>
    %200 = arith.negf %199 : vector<2x16xf32>
    %201 = math.exp %200 : vector<2x16xf32>
    %cst_66 = arith.constant 1.000000e+00 : f32
    %202 = vector.broadcast %cst_66 : f32 to vector<2x16xf32>
    %203 = arith.addf %202, %201 : vector<2x16xf32>
    %204 = arith.divf %202, %203 : vector<2x16xf32>
    %205 = vector.extract_strided_slice %167 {offsets = [0, 32], sizes = [2, 16], strides = [1, 1]} : vector<2x64xf32> to vector<2x16xf32>
    %206 = math.tanh %205 : vector<2x16xf32>
    %207 = vector.extract_strided_slice %167 {offsets = [0, 48], sizes = [2, 16], strides = [1, 1]} : vector<2x64xf32> to vector<2x16xf32>
    %208 = arith.negf %207 : vector<2x16xf32>
    %209 = math.exp %208 : vector<2x16xf32>
    %cst_67 = arith.constant 1.000000e+00 : f32
    %210 = vector.broadcast %cst_67 : f32 to vector<2x16xf32>
    %211 = arith.addf %210, %209 : vector<2x16xf32>
    %212 = arith.divf %210, %211 : vector<2x16xf32>
    %213 = arith.mulf %204, %146 : vector<2x16xf32>
    %214 = arith.mulf %198, %206 : vector<2x16xf32>
    %215 = arith.addf %213, %214 : vector<2x16xf32>
    %216 = math.tanh %215 : vector<2x16xf32>
    %217 = arith.mulf %212, %216 : vector<2x16xf32>
    %218 = arith.index_cast %c2_i32 : i32 to index
    %c0_68 = arith.constant 0 : index
    %c0_69 = arith.constant 0 : index
    %219 = vector.load %arg12[%218, %c0_68, %c0_69] : memref<8x2x16xf32, #tpu.memory_space<vmem>>, vector<1x2x16xf32>
    %220 = vector.shape_cast %219 : vector<1x2x16xf32> to vector<2x16xf32>
    %221 = vector.shape_cast %192 : vector<2x16xf32> to vector<1x2x16xf32>
    tpu.vector_store %arg12[%218, %c0_68, %c0_69], %221 {strides = array<i32>} : memref<8x2x16xf32, #tpu.memory_space<vmem>>, vector<1x2x16xf32>,
    %222 = arith.index_cast %157 : i32 to index
    %c0_70 = arith.constant 0 : index
    %c0_71 = arith.constant 0 : index
    %223 = vector.load %arg13[%222, %c0_70, %c0_71] : memref<8x2x16xf32, #tpu.memory_space<vmem>>, vector<1x2x16xf32>
    %224 = vector.shape_cast %223 : vector<1x2x16xf32> to vector<2x16xf32>
    %225 = vector.shape_cast %217 : vector<2x16xf32> to vector<1x2x16xf32>
    tpu.vector_store %arg13[%222, %c0_70, %c0_71], %225 {strides = array<i32>} : memref<8x2x16xf32, #tpu.memory_space<vmem>>, vector<1x2x16xf32>,
    %c3_i32 = arith.constant 3 : i32
    %c7_i32_72 = arith.constant 7 : i32
    %226 = arith.subi %c7_i32_72, %c3_i32 : i32
    %227 = arith.index_cast %c3_i32 : i32 to index
    %c0_73 = arith.constant 0 : index
    %c0_74 = arith.constant 0 : index
    %228 = vector.load %arg10[%227, %c0_73, %c0_74] : memref<8x2x64xf32, #tpu.memory_space<vmem>>, vector<1x2x64xf32>
    %229 = vector.shape_cast %228 : vector<1x2x64xf32> to vector<2x64xf32>
    %cst_75 = arith.constant dense<0.000000e+00> : vector<2x64xf32>
    %230 = tpu.matmul %192, %0, %cst_75 {dimension_numbers = #tpu.dot_dimension_numbers<[1], [0], [0], [1], [0, 0, 1, 1], [], []>} : vector<2x16xf32>, vector<16x64xf32>, vector<2x64xf32> -> vector<2x64xf32>
    %231 = arith.addf %229, %230 : vector<2x64xf32>
    %232 = arith.index_cast %226 : i32 to index
    %c0_76 = arith.constant 0 : index
    %c0_77 = arith.constant 0 : index
    %233 = vector.load %arg11[%232, %c0_76, %c0_77] : memref<8x2x64xf32, #tpu.memory_space<vmem>>, vector<1x2x64xf32>
    %234 = vector.shape_cast %233 : vector<1x2x64xf32> to vector<2x64xf32>
    %cst_78 = arith.constant dense<0.000000e+00> : vector<2x64xf32>
    %235 = tpu.matmul %217, %1, %cst_78 {dimension_numbers = #tpu.dot_dimension_numbers<[1], [0], [0], [1], [0, 0, 1, 1], [], []>} : vector<2x16xf32>, vector<16x64xf32>, vector<2x64xf32> -> vector<2x64xf32>
    %236 = arith.addf %234, %235 : vector<2x64xf32>
    %237 = vector.extract_strided_slice %231 {offsets = [0, 0], sizes = [2, 16], strides = [1, 1]} : vector<2x64xf32> to vector<2x16xf32>
    %238 = arith.negf %237 : vector<2x16xf32>
    %239 = math.exp %238 : vector<2x16xf32>
    %cst_79 = arith.constant 1.000000e+00 : f32
    %240 = vector.broadcast %cst_79 : f32 to vector<2x16xf32>
    %241 = arith.addf %240, %239 : vector<2x16xf32>
    %242 = arith.divf %240, %241 : vector<2x16xf32>
    %243 = vector.extract_strided_slice %231 {offsets = [0, 16], sizes = [2, 16], strides = [1, 1]} : vector<2x64xf32> to vector<2x16xf32>
    %244 = arith.negf %243 : vector<2x16xf32>
    %245 = math.exp %244 : vector<2x16xf32>
    %cst_80 = arith.constant 1.000000e+00 : f32
    %246 = vector.broadcast %cst_80 : f32 to vector<2x16xf32>
    %247 = arith.addf %246, %245 : vector<2x16xf32>
    %248 = arith.divf %246, %247 : vector<2x16xf32>
    %249 = vector.extract_strided_slice %231 {offsets = [0, 32], sizes = [2, 16], strides = [1, 1]} : vector<2x64xf32> to vector<2x16xf32>
    %250 = math.tanh %249 : vector<2x16xf32>
    %251 = vector.extract_strided_slice %231 {offsets = [0, 48], sizes = [2, 16], strides = [1, 1]} : vector<2x64xf32> to vector<2x16xf32>
    %252 = arith.negf %251 : vector<2x16xf32>
    %253 = math.exp %252 : vector<2x16xf32>
    %cst_81 = arith.constant 1.000000e+00 : f32
    %254 = vector.broadcast %cst_81 : f32 to vector<2x16xf32>
    %255 = arith.addf %254, %253 : vector<2x16xf32>
    %256 = arith.divf %254, %255 : vector<2x16xf32>
    %257 = arith.mulf %248, %190 : vector<2x16xf32>
    %258 = arith.mulf %242, %250 : vector<2x16xf32>
    %259 = arith.addf %257, %258 : vector<2x16xf32>
    %260 = math.tanh %259 : vector<2x16xf32>
    %261 = arith.mulf %256, %260 : vector<2x16xf32>
    %262 = vector.extract_strided_slice %236 {offsets = [0, 0], sizes = [2, 16], strides = [1, 1]} : vector<2x64xf32> to vector<2x16xf32>
    %263 = arith.negf %262 : vector<2x16xf32>
    %264 = math.exp %263 : vector<2x16xf32>
    %cst_82 = arith.constant 1.000000e+00 : f32
    %265 = vector.broadcast %cst_82 : f32 to vector<2x16xf32>
    %266 = arith.addf %265, %264 : vector<2x16xf32>
    %267 = arith.divf %265, %266 : vector<2x16xf32>
    %268 = vector.extract_strided_slice %236 {offsets = [0, 16], sizes = [2, 16], strides = [1, 1]} : vector<2x64xf32> to vector<2x16xf32>
    %269 = arith.negf %268 : vector<2x16xf32>
    %270 = math.exp %269 : vector<2x16xf32>
    %cst_83 = arith.constant 1.000000e+00 : f32
    %271 = vector.broadcast %cst_83 : f32 to vector<2x16xf32>
    %272 = arith.addf %271, %270 : vector<2x16xf32>
    %273 = arith.divf %271, %272 : vector<2x16xf32>
    %274 = vector.extract_strided_slice %236 {offsets = [0, 32], sizes = [2, 16], strides = [1, 1]} : vector<2x64xf32> to vector<2x16xf32>
    %275 = math.tanh %274 : vector<2x16xf32>
    %276 = vector.extract_strided_slice %236 {offsets = [0, 48], sizes = [2, 16], strides = [1, 1]} : vector<2x64xf32> to vector<2x16xf32>
    %277 = arith.negf %276 : vector<2x16xf32>
    %278 = math.exp %277 : vector<2x16xf32>
    %cst_84 = arith.constant 1.000000e+00 : f32
    %279 = vector.broadcast %cst_84 : f32 to vector<2x16xf32>
    %280 = arith.addf %279, %278 : vector<2x16xf32>
    %281 = arith.divf %279, %280 : vector<2x16xf32>
    %282 = arith.mulf %273, %215 : vector<2x16xf32>
    %283 = arith.mulf %267, %275 : vector<2x16xf32>
    %284 = arith.addf %282, %283 : vector<2x16xf32>
    %285 = math.tanh %284 : vector<2x16xf32>
    %286 = arith.mulf %281, %285 : vector<2x16xf32>
    %287 = arith.index_cast %c3_i32 : i32 to index
    %c0_85 = arith.constant 0 : index
    %c0_86 = arith.constant 0 : index
    %288 = vector.load %arg12[%287, %c0_85, %c0_86] : memref<8x2x16xf32, #tpu.memory_space<vmem>>, vector<1x2x16xf32>
    %289 = vector.shape_cast %288 : vector<1x2x16xf32> to vector<2x16xf32>
    %290 = vector.shape_cast %261 : vector<2x16xf32> to vector<1x2x16xf32>
    tpu.vector_store %arg12[%287, %c0_85, %c0_86], %290 {strides = array<i32>} : memref<8x2x16xf32, #tpu.memory_space<vmem>>, vector<1x2x16xf32>,
    %291 = arith.index_cast %226 : i32 to index
    %c0_87 = arith.constant 0 : index
    %c0_88 = arith.constant 0 : index
    %292 = vector.load %arg13[%291, %c0_87, %c0_88] : memref<8x2x16xf32, #tpu.memory_space<vmem>>, vector<1x2x16xf32>
    %293 = vector.shape_cast %292 : vector<1x2x16xf32> to vector<2x16xf32>
    %294 = vector.shape_cast %286 : vector<2x16xf32> to vector<1x2x16xf32>
    tpu.vector_store %arg13[%291, %c0_87, %c0_88], %294 {strides = array<i32>} : memref<8x2x16xf32, #tpu.memory_space<vmem>>, vector<1x2x16xf32>,
    %c4_i32 = arith.constant 4 : i32
    %c7_i32_89 = arith.constant 7 : i32
    %295 = arith.subi %c7_i32_89, %c4_i32 : i32
    %296 = arith.index_cast %c4_i32 : i32 to index
    %c0_90 = arith.constant 0 : index
    %c0_91 = arith.constant 0 : index
    %297 = vector.load %arg10[%296, %c0_90, %c0_91] : memref<8x2x64xf32, #tpu.memory_space<vmem>>, vector<1x2x64xf32>
    %298 = vector.shape_cast %297 : vector<1x2x64xf32> to vector<2x64xf32>
    %cst_92 = arith.constant dense<0.000000e+00> : vector<2x64xf32>
    %299 = tpu.matmul %261, %0, %cst_92 {dimension_numbers = #tpu.dot_dimension_numbers<[1], [0], [0], [1], [0, 0, 1, 1], [], []>} : vector<2x16xf32>, vector<16x64xf32>, vector<2x64xf32> -> vector<2x64xf32>
    %300 = arith.addf %298, %299 : vector<2x64xf32>
    %301 = arith.index_cast %295 : i32 to index
    %c0_93 = arith.constant 0 : index
    %c0_94 = arith.constant 0 : index
    %302 = vector.load %arg11[%301, %c0_93, %c0_94] : memref<8x2x64xf32, #tpu.memory_space<vmem>>, vector<1x2x64xf32>
    %303 = vector.shape_cast %302 : vector<1x2x64xf32> to vector<2x64xf32>
    %cst_95 = arith.constant dense<0.000000e+00> : vector<2x64xf32>
    %304 = tpu.matmul %286, %1, %cst_95 {dimension_numbers = #tpu.dot_dimension_numbers<[1], [0], [0], [1], [0, 0, 1, 1], [], []>} : vector<2x16xf32>, vector<16x64xf32>, vector<2x64xf32> -> vector<2x64xf32>
    %305 = arith.addf %303, %304 : vector<2x64xf32>
    %306 = vector.extract_strided_slice %300 {offsets = [0, 0], sizes = [2, 16], strides = [1, 1]} : vector<2x64xf32> to vector<2x16xf32>
    %307 = arith.negf %306 : vector<2x16xf32>
    %308 = math.exp %307 : vector<2x16xf32>
    %cst_96 = arith.constant 1.000000e+00 : f32
    %309 = vector.broadcast %cst_96 : f32 to vector<2x16xf32>
    %310 = arith.addf %309, %308 : vector<2x16xf32>
    %311 = arith.divf %309, %310 : vector<2x16xf32>
    %312 = vector.extract_strided_slice %300 {offsets = [0, 16], sizes = [2, 16], strides = [1, 1]} : vector<2x64xf32> to vector<2x16xf32>
    %313 = arith.negf %312 : vector<2x16xf32>
    %314 = math.exp %313 : vector<2x16xf32>
    %cst_97 = arith.constant 1.000000e+00 : f32
    %315 = vector.broadcast %cst_97 : f32 to vector<2x16xf32>
    %316 = arith.addf %315, %314 : vector<2x16xf32>
    %317 = arith.divf %315, %316 : vector<2x16xf32>
    %318 = vector.extract_strided_slice %300 {offsets = [0, 32], sizes = [2, 16], strides = [1, 1]} : vector<2x64xf32> to vector<2x16xf32>
    %319 = math.tanh %318 : vector<2x16xf32>
    %320 = vector.extract_strided_slice %300 {offsets = [0, 48], sizes = [2, 16], strides = [1, 1]} : vector<2x64xf32> to vector<2x16xf32>
    %321 = arith.negf %320 : vector<2x16xf32>
    %322 = math.exp %321 : vector<2x16xf32>
    %cst_98 = arith.constant 1.000000e+00 : f32
    %323 = vector.broadcast %cst_98 : f32 to vector<2x16xf32>
    %324 = arith.addf %323, %322 : vector<2x16xf32>
    %325 = arith.divf %323, %324 : vector<2x16xf32>
    %326 = arith.mulf %317, %259 : vector<2x16xf32>
    %327 = arith.mulf %311, %319 : vector<2x16xf32>
    %328 = arith.addf %326, %327 : vector<2x16xf32>
    %329 = math.tanh %328 : vector<2x16xf32>
    %330 = arith.mulf %325, %329 : vector<2x16xf32>
    %331 = vector.extract_strided_slice %305 {offsets = [0, 0], sizes = [2, 16], strides = [1, 1]} : vector<2x64xf32> to vector<2x16xf32>
    %332 = arith.negf %331 : vector<2x16xf32>
    %333 = math.exp %332 : vector<2x16xf32>
    %cst_99 = arith.constant 1.000000e+00 : f32
    %334 = vector.broadcast %cst_99 : f32 to vector<2x16xf32>
    %335 = arith.addf %334, %333 : vector<2x16xf32>
    %336 = arith.divf %334, %335 : vector<2x16xf32>
    %337 = vector.extract_strided_slice %305 {offsets = [0, 16], sizes = [2, 16], strides = [1, 1]} : vector<2x64xf32> to vector<2x16xf32>
    %338 = arith.negf %337 : vector<2x16xf32>
    %339 = math.exp %338 : vector<2x16xf32>
    %cst_100 = arith.constant 1.000000e+00 : f32
    %340 = vector.broadcast %cst_100 : f32 to vector<2x16xf32>
    %341 = arith.addf %340, %339 : vector<2x16xf32>
    %342 = arith.divf %340, %341 : vector<2x16xf32>
    %343 = vector.extract_strided_slice %305 {offsets = [0, 32], sizes = [2, 16], strides = [1, 1]} : vector<2x64xf32> to vector<2x16xf32>
    %344 = math.tanh %343 : vector<2x16xf32>
    %345 = vector.extract_strided_slice %305 {offsets = [0, 48], sizes = [2, 16], strides = [1, 1]} : vector<2x64xf32> to vector<2x16xf32>
    %346 = arith.negf %345 : vector<2x16xf32>
    %347 = math.exp %346 : vector<2x16xf32>
    %cst_101 = arith.constant 1.000000e+00 : f32
    %348 = vector.broadcast %cst_101 : f32 to vector<2x16xf32>
    %349 = arith.addf %348, %347 : vector<2x16xf32>
    %350 = arith.divf %348, %349 : vector<2x16xf32>
    %351 = arith.mulf %342, %284 : vector<2x16xf32>
    %352 = arith.mulf %336, %344 : vector<2x16xf32>
    %353 = arith.addf %351, %352 : vector<2x16xf32>
    %354 = math.tanh %353 : vector<2x16xf32>
    %355 = arith.mulf %350, %354 : vector<2x16xf32>
    %356 = arith.index_cast %c4_i32 : i32 to index
    %c0_102 = arith.constant 0 : index
    %c0_103 = arith.constant 0 : index
    %357 = vector.load %arg12[%356, %c0_102, %c0_103] : memref<8x2x16xf32, #tpu.memory_space<vmem>>, vector<1x2x16xf32>
    %358 = vector.shape_cast %357 : vector<1x2x16xf32> to vector<2x16xf32>
    %359 = vector.shape_cast %330 : vector<2x16xf32> to vector<1x2x16xf32>
    tpu.vector_store %arg12[%356, %c0_102, %c0_103], %359 {strides = array<i32>} : memref<8x2x16xf32, #tpu.memory_space<vmem>>, vector<1x2x16xf32>,
    %360 = arith.index_cast %295 : i32 to index
    %c0_104 = arith.constant 0 : index
    %c0_105 = arith.constant 0 : index
    %361 = vector.load %arg13[%360, %c0_104, %c0_105] : memref<8x2x16xf32, #tpu.memory_space<vmem>>, vector<1x2x16xf32>
    %362 = vector.shape_cast %361 : vector<1x2x16xf32> to vector<2x16xf32>
    %363 = vector.shape_cast %355 : vector<2x16xf32> to vector<1x2x16xf32>
    tpu.vector_store %arg13[%360, %c0_104, %c0_105], %363 {strides = array<i32>} : memref<8x2x16xf32, #tpu.memory_space<vmem>>, vector<1x2x16xf32>,
    %c5_i32 = arith.constant 5 : i32
    %c7_i32_106 = arith.constant 7 : i32
    %364 = arith.subi %c7_i32_106, %c5_i32 : i32
    %365 = arith.index_cast %c5_i32 : i32 to index
    %c0_107 = arith.constant 0 : index
    %c0_108 = arith.constant 0 : index
    %366 = vector.load %arg10[%365, %c0_107, %c0_108] : memref<8x2x64xf32, #tpu.memory_space<vmem>>, vector<1x2x64xf32>
    %367 = vector.shape_cast %366 : vector<1x2x64xf32> to vector<2x64xf32>
    %cst_109 = arith.constant dense<0.000000e+00> : vector<2x64xf32>
    %368 = tpu.matmul %330, %0, %cst_109 {dimension_numbers = #tpu.dot_dimension_numbers<[1], [0], [0], [1], [0, 0, 1, 1], [], []>} : vector<2x16xf32>, vector<16x64xf32>, vector<2x64xf32> -> vector<2x64xf32>
    %369 = arith.addf %367, %368 : vector<2x64xf32>
    %370 = arith.index_cast %364 : i32 to index
    %c0_110 = arith.constant 0 : index
    %c0_111 = arith.constant 0 : index
    %371 = vector.load %arg11[%370, %c0_110, %c0_111] : memref<8x2x64xf32, #tpu.memory_space<vmem>>, vector<1x2x64xf32>
    %372 = vector.shape_cast %371 : vector<1x2x64xf32> to vector<2x64xf32>
    %cst_112 = arith.constant dense<0.000000e+00> : vector<2x64xf32>
    %373 = tpu.matmul %355, %1, %cst_112 {dimension_numbers = #tpu.dot_dimension_numbers<[1], [0], [0], [1], [0, 0, 1, 1], [], []>} : vector<2x16xf32>, vector<16x64xf32>, vector<2x64xf32> -> vector<2x64xf32>
    %374 = arith.addf %372, %373 : vector<2x64xf32>
    %375 = vector.extract_strided_slice %369 {offsets = [0, 0], sizes = [2, 16], strides = [1, 1]} : vector<2x64xf32> to vector<2x16xf32>
    %376 = arith.negf %375 : vector<2x16xf32>
    %377 = math.exp %376 : vector<2x16xf32>
    %cst_113 = arith.constant 1.000000e+00 : f32
    %378 = vector.broadcast %cst_113 : f32 to vector<2x16xf32>
    %379 = arith.addf %378, %377 : vector<2x16xf32>
    %380 = arith.divf %378, %379 : vector<2x16xf32>
    %381 = vector.extract_strided_slice %369 {offsets = [0, 16], sizes = [2, 16], strides = [1, 1]} : vector<2x64xf32> to vector<2x16xf32>
    %382 = arith.negf %381 : vector<2x16xf32>
    %383 = math.exp %382 : vector<2x16xf32>
    %cst_114 = arith.constant 1.000000e+00 : f32
    %384 = vector.broadcast %cst_114 : f32 to vector<2x16xf32>
    %385 = arith.addf %384, %383 : vector<2x16xf32>
    %386 = arith.divf %384, %385 : vector<2x16xf32>
    %387 = vector.extract_strided_slice %369 {offsets = [0, 32], sizes = [2, 16], strides = [1, 1]} : vector<2x64xf32> to vector<2x16xf32>
    %388 = math.tanh %387 : vector<2x16xf32>
    %389 = vector.extract_strided_slice %369 {offsets = [0, 48], sizes = [2, 16], strides = [1, 1]} : vector<2x64xf32> to vector<2x16xf32>
    %390 = arith.negf %389 : vector<2x16xf32>
    %391 = math.exp %390 : vector<2x16xf32>
    %cst_115 = arith.constant 1.000000e+00 : f32
    %392 = vector.broadcast %cst_115 : f32 to vector<2x16xf32>
    %393 = arith.addf %392, %391 : vector<2x16xf32>
    %394 = arith.divf %392, %393 : vector<2x16xf32>
    %395 = arith.mulf %386, %328 : vector<2x16xf32>
    %396 = arith.mulf %380, %388 : vector<2x16xf32>
    %397 = arith.addf %395, %396 : vector<2x16xf32>
    %398 = math.tanh %397 : vector<2x16xf32>
    %399 = arith.mulf %394, %398 : vector<2x16xf32>
    %400 = vector.extract_strided_slice %374 {offsets = [0, 0], sizes = [2, 16], strides = [1, 1]} : vector<2x64xf32> to vector<2x16xf32>
    %401 = arith.negf %400 : vector<2x16xf32>
    %402 = math.exp %401 : vector<2x16xf32>
    %cst_116 = arith.constant 1.000000e+00 : f32
    %403 = vector.broadcast %cst_116 : f32 to vector<2x16xf32>
    %404 = arith.addf %403, %402 : vector<2x16xf32>
    %405 = arith.divf %403, %404 : vector<2x16xf32>
    %406 = vector.extract_strided_slice %374 {offsets = [0, 16], sizes = [2, 16], strides = [1, 1]} : vector<2x64xf32> to vector<2x16xf32>
    %407 = arith.negf %406 : vector<2x16xf32>
    %408 = math.exp %407 : vector<2x16xf32>
    %cst_117 = arith.constant 1.000000e+00 : f32
    %409 = vector.broadcast %cst_117 : f32 to vector<2x16xf32>
    %410 = arith.addf %409, %408 : vector<2x16xf32>
    %411 = arith.divf %409, %410 : vector<2x16xf32>
    %412 = vector.extract_strided_slice %374 {offsets = [0, 32], sizes = [2, 16], strides = [1, 1]} : vector<2x64xf32> to vector<2x16xf32>
    %413 = math.tanh %412 : vector<2x16xf32>
    %414 = vector.extract_strided_slice %374 {offsets = [0, 48], sizes = [2, 16], strides = [1, 1]} : vector<2x64xf32> to vector<2x16xf32>
    %415 = arith.negf %414 : vector<2x16xf32>
    %416 = math.exp %415 : vector<2x16xf32>
    %cst_118 = arith.constant 1.000000e+00 : f32
    %417 = vector.broadcast %cst_118 : f32 to vector<2x16xf32>
    %418 = arith.addf %417, %416 : vector<2x16xf32>
    %419 = arith.divf %417, %418 : vector<2x16xf32>
    %420 = arith.mulf %411, %353 : vector<2x16xf32>
    %421 = arith.mulf %405, %413 : vector<2x16xf32>
    %422 = arith.addf %420, %421 : vector<2x16xf32>
    %423 = math.tanh %422 : vector<2x16xf32>
    %424 = arith.mulf %419, %423 : vector<2x16xf32>
    %425 = arith.index_cast %c5_i32 : i32 to index
    %c0_119 = arith.constant 0 : index
    %c0_120 = arith.constant 0 : index
    %426 = vector.load %arg12[%425, %c0_119, %c0_120] : memref<8x2x16xf32, #tpu.memory_space<vmem>>, vector<1x2x16xf32>
    %427 = vector.shape_cast %426 : vector<1x2x16xf32> to vector<2x16xf32>
    %428 = vector.shape_cast %399 : vector<2x16xf32> to vector<1x2x16xf32>
    tpu.vector_store %arg12[%425, %c0_119, %c0_120], %428 {strides = array<i32>} : memref<8x2x16xf32, #tpu.memory_space<vmem>>, vector<1x2x16xf32>,
    %429 = arith.index_cast %364 : i32 to index
    %c0_121 = arith.constant 0 : index
    %c0_122 = arith.constant 0 : index
    %430 = vector.load %arg13[%429, %c0_121, %c0_122] : memref<8x2x16xf32, #tpu.memory_space<vmem>>, vector<1x2x16xf32>
    %431 = vector.shape_cast %430 : vector<1x2x16xf32> to vector<2x16xf32>
    %432 = vector.shape_cast %424 : vector<2x16xf32> to vector<1x2x16xf32>
    tpu.vector_store %arg13[%429, %c0_121, %c0_122], %432 {strides = array<i32>} : memref<8x2x16xf32, #tpu.memory_space<vmem>>, vector<1x2x16xf32>,
    %c6_i32 = arith.constant 6 : i32
    %c7_i32_123 = arith.constant 7 : i32
    %433 = arith.subi %c7_i32_123, %c6_i32 : i32
    %434 = arith.index_cast %c6_i32 : i32 to index
    %c0_124 = arith.constant 0 : index
    %c0_125 = arith.constant 0 : index
    %435 = vector.load %arg10[%434, %c0_124, %c0_125] : memref<8x2x64xf32, #tpu.memory_space<vmem>>, vector<1x2x64xf32>
    %436 = vector.shape_cast %435 : vector<1x2x64xf32> to vector<2x64xf32>
    %cst_126 = arith.constant dense<0.000000e+00> : vector<2x64xf32>
    %437 = tpu.matmul %399, %0, %cst_126 {dimension_numbers = #tpu.dot_dimension_numbers<[1], [0], [0], [1], [0, 0, 1, 1], [], []>} : vector<2x16xf32>, vector<16x64xf32>, vector<2x64xf32> -> vector<2x64xf32>
    %438 = arith.addf %436, %437 : vector<2x64xf32>
    %439 = arith.index_cast %433 : i32 to index
    %c0_127 = arith.constant 0 : index
    %c0_128 = arith.constant 0 : index
    %440 = vector.load %arg11[%439, %c0_127, %c0_128] : memref<8x2x64xf32, #tpu.memory_space<vmem>>, vector<1x2x64xf32>
    %441 = vector.shape_cast %440 : vector<1x2x64xf32> to vector<2x64xf32>
    %cst_129 = arith.constant dense<0.000000e+00> : vector<2x64xf32>
    %442 = tpu.matmul %424, %1, %cst_129 {dimension_numbers = #tpu.dot_dimension_numbers<[1], [0], [0], [1], [0, 0, 1, 1], [], []>} : vector<2x16xf32>, vector<16x64xf32>, vector<2x64xf32> -> vector<2x64xf32>
    %443 = arith.addf %441, %442 : vector<2x64xf32>
    %444 = vector.extract_strided_slice %438 {offsets = [0, 0], sizes = [2, 16], strides = [1, 1]} : vector<2x64xf32> to vector<2x16xf32>
    %445 = arith.negf %444 : vector<2x16xf32>
    %446 = math.exp %445 : vector<2x16xf32>
    %cst_130 = arith.constant 1.000000e+00 : f32
    %447 = vector.broadcast %cst_130 : f32 to vector<2x16xf32>
    %448 = arith.addf %447, %446 : vector<2x16xf32>
    %449 = arith.divf %447, %448 : vector<2x16xf32>
    %450 = vector.extract_strided_slice %438 {offsets = [0, 16], sizes = [2, 16], strides = [1, 1]} : vector<2x64xf32> to vector<2x16xf32>
    %451 = arith.negf %450 : vector<2x16xf32>
    %452 = math.exp %451 : vector<2x16xf32>
    %cst_131 = arith.constant 1.000000e+00 : f32
    %453 = vector.broadcast %cst_131 : f32 to vector<2x16xf32>
    %454 = arith.addf %453, %452 : vector<2x16xf32>
    %455 = arith.divf %453, %454 : vector<2x16xf32>
    %456 = vector.extract_strided_slice %438 {offsets = [0, 32], sizes = [2, 16], strides = [1, 1]} : vector<2x64xf32> to vector<2x16xf32>
    %457 = math.tanh %456 : vector<2x16xf32>
    %458 = vector.extract_strided_slice %438 {offsets = [0, 48], sizes = [2, 16], strides = [1, 1]} : vector<2x64xf32> to vector<2x16xf32>
    %459 = arith.negf %458 : vector<2x16xf32>
    %460 = math.exp %459 : vector<2x16xf32>
    %cst_132 = arith.constant 1.000000e+00 : f32
    %461 = vector.broadcast %cst_132 : f32 to vector<2x16xf32>
    %462 = arith.addf %461, %460 : vector<2x16xf32>
    %463 = arith.divf %461, %462 : vector<2x16xf32>
    %464 = arith.mulf %455, %397 : vector<2x16xf32>
    %465 = arith.mulf %449, %457 : vector<2x16xf32>
    %466 = arith.addf %464, %465 : vector<2x16xf32>
    %467 = math.tanh %466 : vector<2x16xf32>
    %468 = arith.mulf %463, %467 : vector<2x16xf32>
    %469 = vector.extract_strided_slice %443 {offsets = [0, 0], sizes = [2, 16], strides = [1, 1]} : vector<2x64xf32> to vector<2x16xf32>
    %470 = arith.negf %469 : vector<2x16xf32>
    %471 = math.exp %470 : vector<2x16xf32>
    %cst_133 = arith.constant 1.000000e+00 : f32
    %472 = vector.broadcast %cst_133 : f32 to vector<2x16xf32>
    %473 = arith.addf %472, %471 : vector<2x16xf32>
    %474 = arith.divf %472, %473 : vector<2x16xf32>
    %475 = vector.extract_strided_slice %443 {offsets = [0, 16], sizes = [2, 16], strides = [1, 1]} : vector<2x64xf32> to vector<2x16xf32>
    %476 = arith.negf %475 : vector<2x16xf32>
    %477 = math.exp %476 : vector<2x16xf32>
    %cst_134 = arith.constant 1.000000e+00 : f32
    %478 = vector.broadcast %cst_134 : f32 to vector<2x16xf32>
    %479 = arith.addf %478, %477 : vector<2x16xf32>
    %480 = arith.divf %478, %479 : vector<2x16xf32>
    %481 = vector.extract_strided_slice %443 {offsets = [0, 32], sizes = [2, 16], strides = [1, 1]} : vector<2x64xf32> to vector<2x16xf32>
    %482 = math.tanh %481 : vector<2x16xf32>
    %483 = vector.extract_strided_slice %443 {offsets = [0, 48], sizes = [2, 16], strides = [1, 1]} : vector<2x64xf32> to vector<2x16xf32>
    %484 = arith.negf %483 : vector<2x16xf32>
    %485 = math.exp %484 : vector<2x16xf32>
    %cst_135 = arith.constant 1.000000e+00 : f32
    %486 = vector.broadcast %cst_135 : f32 to vector<2x16xf32>
    %487 = arith.addf %486, %485 : vector<2x16xf32>
    %488 = arith.divf %486, %487 : vector<2x16xf32>
    %489 = arith.mulf %480, %422 : vector<2x16xf32>
    %490 = arith.mulf %474, %482 : vector<2x16xf32>
    %491 = arith.addf %489, %490 : vector<2x16xf32>
    %492 = math.tanh %491 : vector<2x16xf32>
    %493 = arith.mulf %488, %492 : vector<2x16xf32>
    %494 = arith.index_cast %c6_i32 : i32 to index
    %c0_136 = arith.constant 0 : index
    %c0_137 = arith.constant 0 : index
    %495 = vector.load %arg12[%494, %c0_136, %c0_137] : memref<8x2x16xf32, #tpu.memory_space<vmem>>, vector<1x2x16xf32>
    %496 = vector.shape_cast %495 : vector<1x2x16xf32> to vector<2x16xf32>
    %497 = vector.shape_cast %468 : vector<2x16xf32> to vector<1x2x16xf32>
    tpu.vector_store %arg12[%494, %c0_136, %c0_137], %497 {strides = array<i32>} : memref<8x2x16xf32, #tpu.memory_space<vmem>>, vector<1x2x16xf32>,
    %498 = arith.index_cast %433 : i32 to index
    %c0_138 = arith.constant 0 : index
    %c0_139 = arith.constant 0 : index
    %499 = vector.load %arg13[%498, %c0_138, %c0_139] : memref<8x2x16xf32, #tpu.memory_space<vmem>>, vector<1x2x16xf32>
    %500 = vector.shape_cast %499 : vector<1x2x16xf32> to vector<2x16xf32>
    %501 = vector.shape_cast %493 : vector<2x16xf32> to vector<1x2x16xf32>
    tpu.vector_store %arg13[%498, %c0_138, %c0_139], %501 {strides = array<i32>} : memref<8x2x16xf32, #tpu.memory_space<vmem>>, vector<1x2x16xf32>,
    %c7_i32_140 = arith.constant 7 : i32
    %c7_i32_141 = arith.constant 7 : i32
    %502 = arith.subi %c7_i32_141, %c7_i32_140 : i32
    %503 = arith.index_cast %c7_i32_140 : i32 to index
    %c0_142 = arith.constant 0 : index
    %c0_143 = arith.constant 0 : index
    %504 = vector.load %arg10[%503, %c0_142, %c0_143] : memref<8x2x64xf32, #tpu.memory_space<vmem>>, vector<1x2x64xf32>
    %505 = vector.shape_cast %504 : vector<1x2x64xf32> to vector<2x64xf32>
    %cst_144 = arith.constant dense<0.000000e+00> : vector<2x64xf32>
    %506 = tpu.matmul %468, %0, %cst_144 {dimension_numbers = #tpu.dot_dimension_numbers<[1], [0], [0], [1], [0, 0, 1, 1], [], []>} : vector<2x16xf32>, vector<16x64xf32>, vector<2x64xf32> -> vector<2x64xf32>
    %507 = arith.addf %505, %506 : vector<2x64xf32>
    %508 = arith.index_cast %502 : i32 to index
    %c0_145 = arith.constant 0 : index
    %c0_146 = arith.constant 0 : index
    %509 = vector.load %arg11[%508, %c0_145, %c0_146] : memref<8x2x64xf32, #tpu.memory_space<vmem>>, vector<1x2x64xf32>
    %510 = vector.shape_cast %509 : vector<1x2x64xf32> to vector<2x64xf32>
    %cst_147 = arith.constant dense<0.000000e+00> : vector<2x64xf32>
    %511 = tpu.matmul %493, %1, %cst_147 {dimension_numbers = #tpu.dot_dimension_numbers<[1], [0], [0], [1], [0, 0, 1, 1], [], []>} : vector<2x16xf32>, vector<16x64xf32>, vector<2x64xf32> -> vector<2x64xf32>
    %512 = arith.addf %510, %511 : vector<2x64xf32>
    %513 = vector.extract_strided_slice %507 {offsets = [0, 0], sizes = [2, 16], strides = [1, 1]} : vector<2x64xf32> to vector<2x16xf32>
    %514 = arith.negf %513 : vector<2x16xf32>
    %515 = math.exp %514 : vector<2x16xf32>
    %cst_148 = arith.constant 1.000000e+00 : f32
    %516 = vector.broadcast %cst_148 : f32 to vector<2x16xf32>
    %517 = arith.addf %516, %515 : vector<2x16xf32>
    %518 = arith.divf %516, %517 : vector<2x16xf32>
    %519 = vector.extract_strided_slice %507 {offsets = [0, 16], sizes = [2, 16], strides = [1, 1]} : vector<2x64xf32> to vector<2x16xf32>
    %520 = arith.negf %519 : vector<2x16xf32>
    %521 = math.exp %520 : vector<2x16xf32>
    %cst_149 = arith.constant 1.000000e+00 : f32
    %522 = vector.broadcast %cst_149 : f32 to vector<2x16xf32>
    %523 = arith.addf %522, %521 : vector<2x16xf32>
    %524 = arith.divf %522, %523 : vector<2x16xf32>
    %525 = vector.extract_strided_slice %507 {offsets = [0, 32], sizes = [2, 16], strides = [1, 1]} : vector<2x64xf32> to vector<2x16xf32>
    %526 = math.tanh %525 : vector<2x16xf32>
    %527 = vector.extract_strided_slice %507 {offsets = [0, 48], sizes = [2, 16], strides = [1, 1]} : vector<2x64xf32> to vector<2x16xf32>
    %528 = arith.negf %527 : vector<2x16xf32>
    %529 = math.exp %528 : vector<2x16xf32>
    %cst_150 = arith.constant 1.000000e+00 : f32
    %530 = vector.broadcast %cst_150 : f32 to vector<2x16xf32>
    %531 = arith.addf %530, %529 : vector<2x16xf32>
    %532 = arith.divf %530, %531 : vector<2x16xf32>
    %533 = arith.mulf %524, %466 : vector<2x16xf32>
    %534 = arith.mulf %518, %526 : vector<2x16xf32>
    %535 = arith.addf %533, %534 : vector<2x16xf32>
    %536 = math.tanh %535 : vector<2x16xf32>
    %537 = arith.mulf %532, %536 : vector<2x16xf32>
    %538 = vector.extract_strided_slice %512 {offsets = [0, 0], sizes = [2, 16], strides = [1, 1]} : vector<2x64xf32> to vector<2x16xf32>
    %539 = arith.negf %538 : vector<2x16xf32>
    %540 = math.exp %539 : vector<2x16xf32>
    %cst_151 = arith.constant 1.000000e+00 : f32
    %541 = vector.broadcast %cst_151 : f32 to vector<2x16xf32>
    %542 = arith.addf %541, %540 : vector<2x16xf32>
    %543 = arith.divf %541, %542 : vector<2x16xf32>
    %544 = vector.extract_strided_slice %512 {offsets = [0, 16], sizes = [2, 16], strides = [1, 1]} : vector<2x64xf32> to vector<2x16xf32>
    %545 = arith.negf %544 : vector<2x16xf32>
    %546 = math.exp %545 : vector<2x16xf32>
    %cst_152 = arith.constant 1.000000e+00 : f32
    %547 = vector.broadcast %cst_152 : f32 to vector<2x16xf32>
    %548 = arith.addf %547, %546 : vector<2x16xf32>
    %549 = arith.divf %547, %548 : vector<2x16xf32>
    %550 = vector.extract_strided_slice %512 {offsets = [0, 32], sizes = [2, 16], strides = [1, 1]} : vector<2x64xf32> to vector<2x16xf32>
    %551 = math.tanh %550 : vector<2x16xf32>
    %552 = vector.extract_strided_slice %512 {offsets = [0, 48], sizes = [2, 16], strides = [1, 1]} : vector<2x64xf32> to vector<2x16xf32>
    %553 = arith.negf %552 : vector<2x16xf32>
    %554 = math.exp %553 : vector<2x16xf32>
    %cst_153 = arith.constant 1.000000e+00 : f32
    %555 = vector.broadcast %cst_153 : f32 to vector<2x16xf32>
    %556 = arith.addf %555, %554 : vector<2x16xf32>
    %557 = arith.divf %555, %556 : vector<2x16xf32>
    %558 = arith.mulf %549, %491 : vector<2x16xf32>
    %559 = arith.mulf %543, %551 : vector<2x16xf32>
    %560 = arith.addf %558, %559 : vector<2x16xf32>
    %561 = math.tanh %560 : vector<2x16xf32>
    %562 = arith.mulf %557, %561 : vector<2x16xf32>
    %563 = arith.index_cast %c7_i32_140 : i32 to index
    %c0_154 = arith.constant 0 : index
    %c0_155 = arith.constant 0 : index
    %564 = vector.load %arg12[%563, %c0_154, %c0_155] : memref<8x2x16xf32, #tpu.memory_space<vmem>>, vector<1x2x16xf32>
    %565 = vector.shape_cast %564 : vector<1x2x16xf32> to vector<2x16xf32>
    %566 = vector.shape_cast %537 : vector<2x16xf32> to vector<1x2x16xf32>
    tpu.vector_store %arg12[%563, %c0_154, %c0_155], %566 {strides = array<i32>} : memref<8x2x16xf32, #tpu.memory_space<vmem>>, vector<1x2x16xf32>,
    %567 = arith.index_cast %502 : i32 to index
    %c0_156 = arith.constant 0 : index
    %c0_157 = arith.constant 0 : index
    %568 = vector.load %arg13[%567, %c0_156, %c0_157] : memref<8x2x16xf32, #tpu.memory_space<vmem>>, vector<1x2x16xf32>
    %569 = vector.shape_cast %568 : vector<1x2x16xf32> to vector<2x16xf32>
    %570 = vector.shape_cast %562 : vector<2x16xf32> to vector<1x2x16xf32>
    tpu.vector_store %arg13[%567, %c0_156, %c0_157], %570 {strides = array<i32>} : memref<8x2x16xf32, #tpu.memory_space<vmem>>, vector<1x2x16xf32>,
    %c8_i32 = arith.constant 8 : i32
    %c0_158 = arith.constant 0 : index
    %c0_159 = arith.constant 0 : index
    %571 = vector.load %arg7[%c0_158, %c0_159] : memref<2x16xf32, #tpu.memory_space<vmem>>, vector<1x16xf32>
    %c1 = arith.constant 1 : index
    %c0_160 = arith.constant 0 : index
    %572 = vector.load %arg7[%c1, %c0_160] : memref<2x16xf32, #tpu.memory_space<vmem>>, vector<1x16xf32>
    %c0_161 = arith.constant 0 : index
    %c0_162 = arith.constant 0 : index
    %c0_163 = arith.constant 0 : index
    %573 = vector.load %arg12[%c0_161, %c0_162, %c0_163] : memref<8x2x16xf32, #tpu.memory_space<vmem>>, vector<8x2x16xf32>
    %574 = vector.shape_cast %571 : vector<1x16xf32> to vector<1x1x16xf32>
    %575 = vector.broadcast %574 : vector<1x1x16xf32> to vector<8x2x16xf32>
    %576 = arith.mulf %573, %575 : vector<8x2x16xf32>
    %cst_164 = arith.constant dense<0.000000e+00> : vector<8x2xf32>
    %577 = vector.multi_reduction <add>, %576, %cst_164 [2] : vector<8x2x16xf32> to vector<8x2xf32>
    %c0_165 = arith.constant 0 : index
    %c0_166 = arith.constant 0 : index
    %c0_167 = arith.constant 0 : index
    %578 = vector.load %arg13[%c0_165, %c0_166, %c0_167] : memref<8x2x16xf32, #tpu.memory_space<vmem>>, vector<8x2x16xf32>
    %579 = vector.shape_cast %572 : vector<1x16xf32> to vector<1x1x16xf32>
    %580 = vector.broadcast %579 : vector<1x1x16xf32> to vector<8x2x16xf32>
    %581 = arith.mulf %578, %580 : vector<8x2x16xf32>
    %cst_168 = arith.constant dense<0.000000e+00> : vector<8x2xf32>
    %582 = vector.multi_reduction <add>, %581, %cst_168 [2] : vector<8x2x16xf32> to vector<8x2xf32>
    %583 = arith.addf %577, %582 : vector<8x2xf32>
    %c0_169 = arith.constant 0 : index
    %c0_170 = arith.constant 0 : index
    %584 = memref.load %arg8[%c0_169, %c0_170] : memref<1x1xf32, #tpu.memory_space<smem>>
    %585 = vector.broadcast %584 : f32 to vector<8x2xf32>
    %586 = arith.addf %583, %585 : vector<8x2xf32>
    %587 = arith.negf %586 : vector<8x2xf32>
    %588 = math.exp %587 : vector<8x2xf32>
    %cst_171 = arith.constant 1.000000e+00 : f32
    %589 = vector.broadcast %cst_171 : f32 to vector<8x2xf32>
    %590 = arith.addf %589, %588 : vector<8x2xf32>
    %591 = arith.divf %589, %590 : vector<8x2xf32>
    %c0_172 = arith.constant 0 : index
    %c0_173 = arith.constant 0 : index
    %592 = vector.load %arg9[%c0_172, %c0_173] : memref<8x2xf32, #tpu.memory_space<vmem>>, vector<8x2xf32>
    tpu.vector_store %arg9[%c0_172, %c0_173], %591 {strides = array<i32>} : memref<8x2xf32, #tpu.memory_space<vmem>>, vector<8x2xf32>,
    return
  }
}

</mosaic_0001>

<llo_original>
// kernel: tpu_custom_call.1
$region0: #{tpu_custom_call.1}
  #allocation0 [shape = 'u32[]', space=smem, size = 0x4, offset = 0x4, fixed_abs, tag = 'smem constant byte address 0x4 - core index']
  #allocation1 [shape = 'u32[144,128]{1,0:T(1,128)}', space=vmem, size = 0x12000, scoped, tag = 'internal scratch']
  #allocation2 [shape = 'f32[8,2,64]{2,1,0:T(2,128)}', space=vmem, size = 0x2000, scoped, tag = 'scratch operand']
  #allocation3 [shape = 'f32[8,2,64]{2,1,0:T(2,128)}', space=vmem, size = 0x2000, scoped, tag = 'scratch operand']
  #allocation4 [shape = 'f32[8,2,16]{2,1,0:T(2,128)}', space=vmem, size = 0x2000, scoped, tag = 'scratch operand']
  #allocation5 [shape = 'f32[8,2,16]{2,1,0:T(2,128)}', space=vmem, size = 0x2000, scoped, tag = 'scratch operand']
  #allocation6 [shape = 'f32[1,1]{1,0:T(1,128)S(6)}', space=smem, size = 0x200, scoped, tag = 'scoped memory for tpu_custom_call.1']
  %s0 = inlined_call_operand.hbm [shape: f32[8,2,32], index: 0, kind: input, shape index: {}]
  %s1 = inlined_call_operand.hbm [shape: f32[32,64], index: 1, kind: input, shape index: {}]
  %s2 = inlined_call_operand.hbm [shape: f32[16,64], index: 2, kind: input, shape index: {}]
  %s3 = inlined_call_operand.vmem [shape: f32[1,64], index: 3, kind: input, shape index: {}]
  %s4 = inlined_call_operand.hbm [shape: f32[32,64], index: 4, kind: input, shape index: {}]
  %s5 = inlined_call_operand.vmem [shape: f32[16,64], index: 5, kind: input, shape index: {}]
  %s6 = inlined_call_operand.vmem [shape: f32[1,64], index: 6, kind: input, shape index: {}]
  %s7 = inlined_call_operand.vmem [shape: f32[2,16], index: 7, kind: input, shape index: {}]
  %s8 = inlined_call_operand.<no memory space> [shape: f32[1,1], index: 8, kind: input, shape index: {}]
  %s9 = inlined_call_operand.vmem [shape: f32[8,2], index: 9, kind: output, shape index: {}]
  %s10 = sld [smem:[#allocation0]]
  $region62: #{tpu_custom_call.1} parent=0
    _
  %s12 = ssub.s32 1, %s10
  %s13 = scalar_select 0, %s12, %s10
  %14 = sst [smem:[#allocation6]] %s8
  $region1: #{tpu_custom_call.1} parent=0
    #allocation7 [shape = 'u8[8192]{0}', space=vmem, size = 0x2000, scoped, tag = 'input window, operand 0, single buffered']
    #allocation8 [shape = 's32[1]{0}', space=sflag, size = 0x4, scoped, tag = 'scoped memory for tpu_custom_call.1']
    #allocation9 [shape = 'u8[16384]{0}', space=vmem, size = 0x4000, scoped, tag = 'input window, operand 1, single buffered']
    #allocation10 [shape = 's32[1]{0}', space=sflag, size = 0x4, scoped, tag = 'scoped memory for tpu_custom_call.1']
    #allocation11 [shape = 'u8[8192]{0}', space=vmem, size = 0x2000, scoped, tag = 'input window, operand 2, single buffered']
    #allocation12 [shape = 'u8[16384]{0}', space=vmem, size = 0x4000, scoped, tag = 'input window, operand 4, single buffered']
    #allocation13 [shape = 's32[1]{0}', space=sflag, size = 0x4, scoped, tag = 'scoped memory for tpu_custom_call.1']
    %15 = vsyncpa [#allocation8], 0
    %16 = vsyncpa [#allocation10], 0
    %17 = vsyncpa [#allocation13], 0
    // Predicated region
    $region2: #{tpu_custom_call.1} parent=1 // pred_check
      _
    $region3: #{tpu_custom_call.1} parent=1 // pred_check_branch
      %19 = sbr.rel (0) target = $region5
    $region4: #{tpu_custom_call.1} parent=1 // pred_region
      %s21 = ssub.s32 256, 256
      %22 = vsyncadd [#allocation8], %s21
      %s23 = sshll.u32 [#allocation7], 4
      %s24 = int_to_ptr.vmem [resolvable:$true] %s23
      %29 = dma.hbm_to_vmem [thread:$0]  %s0, 256, %s24, [#allocation8], 32, 32, 2
    $region5: #{tpu_custom_call.1} parent=1 // pred_fallthru
      _
    // Predicated region
    $region6: #{tpu_custom_call.1} parent=1 // pred_check
      _
    $region7: #{tpu_custom_call.1} parent=1 // pred_check_branch
      %31 = sbr.rel (0) target = $region9
    $region8: #{tpu_custom_call.1} parent=1 // pred_region
      %s33 = ssub.s32 512, 512
      %34 = vsyncadd [#allocation10], %s33
      %s35 = sshll.u32 [#allocation9], 4
      %s36 = int_to_ptr.vmem [resolvable:$true] %s35
      %41 = dma.hbm_to_vmem [thread:$0]  %s1, 512, %s36, [#allocation10], 128, 128, 8
    $region9: #{tpu_custom_call.1} parent=1 // pred_fallthru
      _
    // Predicated region
    $region10: #{tpu_custom_call.1} parent=1 // pred_check
      _
    $region11: #{tpu_custom_call.1} parent=1 // pred_check_branch
      %43 = sbr.rel (0) target = $region13
    $region12: #{tpu_custom_call.1} parent=1 // pred_region
      %s45 = ssub.s32 256, 256
      %46 = vsyncadd [#allocation10], %s45
      %s47 = sshll.u32 [#allocation11], 4
      %s48 = int_to_ptr.vmem [resolvable:$true] %s47
      %53 = dma.hbm_to_vmem [thread:$0]  %s2, 256, %s48, [#allocation10], 128, 128, 8
    $region13: #{tpu_custom_call.1} parent=1 // pred_fallthru
      _
    // Predicated region
    $region14: #{tpu_custom_call.1} parent=1 // pred_check
      _
    $region15: #{tpu_custom_call.1} parent=1 // pred_check_branch
      %55 = sbr.rel (0) target = $region17
    $region16: #{tpu_custom_call.1} parent=1 // pred_region
      _
    $region17: #{tpu_custom_call.1} parent=1 // pred_fallthru
      _
    // Predicated region
    $region18: #{tpu_custom_call.1} parent=1 // pred_check
      _
    $region19: #{tpu_custom_call.1} parent=1 // pred_check_branch
      %57 = sbr.rel (0) target = $region21
    $region20: #{tpu_custom_call.1} parent=1 // pred_region
      %s59 = ssub.s32 512, 512
      %60 = vsyncadd [#allocation13], %s59
      %s61 = sshll.u32 [#allocation12], 4
      %s62 = int_to_ptr.vmem [resolvable:$true] %s61
      %67 = dma.hbm_to_vmem [thread:$0]  %s4, 512, %s62, [#allocation13], 128, 128, 8
    $region21: #{tpu_custom_call.1} parent=1 // pred_fallthru
      _
    // Predicated region
    $region22: #{tpu_custom_call.1} parent=1 // pred_check
      _
    $region23: #{tpu_custom_call.1} parent=1 // pred_check_branch
      %69 = sbr.rel (0) target = $region25
    $region24: #{tpu_custom_call.1} parent=1 // pred_region
      _
    $region25: #{tpu_custom_call.1} parent=1 // pred_fallthru
      _
    // Predicated region
    $region26: #{tpu_custom_call.1} parent=1 // pred_check
      _
    $region27: #{tpu_custom_call.1} parent=1 // pred_check_branch
      %71 = sbr.rel (0) target = $region29
    $region28: #{tpu_custom_call.1} parent=1 // pred_region
      _
    $region29: #{tpu_custom_call.1} parent=1 // pred_fallthru
      _
    // Predicated region
    $region30: #{tpu_custom_call.1} parent=1 // pred_check
      _
    $region31: #{tpu_custom_call.1} parent=1 // pred_check_branch
      %73 = sbr.rel (0) target = $region33
    $region32: #{tpu_custom_call.1} parent=1 // pred_region
      _
    $region33: #{tpu_custom_call.1} parent=1 // pred_fallthru
      _
    // Predicated region
    $region34: #{tpu_custom_call.1} parent=1 // pred_check
      _
    $region35: #{tpu_custom_call.1} parent=1 // pred_check_branch
      %75 = sbr.rel (0) target = $region37
    $region36: #{tpu_custom_call.1} parent=1 // pred_region
      _
    $region37: #{tpu_custom_call.1} parent=1 // pred_fallthru
      _
    // Predicated region
    $region38: #{tpu_custom_call.1} parent=1 // pred_check
      _
    $region39: #{tpu_custom_call.1} parent=1 // pred_check_branch
      %77 = sbr.rel (0) target = $region41
    $region40: #{tpu_custom_call.1} parent=1 // pred_region
      %78 = dma.done [#allocation8], 256
    $region41: #{tpu_custom_call.1} parent=1 // pred_fallthru
      _
    // Predicated region
    $region42: #{tpu_custom_call.1} parent=1 // pred_check
      _
    $region43: #{tpu_custom_call.1} parent=1 // pred_check_branch
      %80 = sbr.rel (0) target = $region45
    $region44: #{tpu_custom_call.1} parent=1 // pred_region
      %81 = dma.done [#allocation10], 512
    $region45: #{tpu_custom_call.1} parent=1 // pred_fallthru
      _
    // Predicated region
    $region46: #{tpu_custom_call.1} parent=1 // pred_check
      _
    $region47: #{tpu_custom_call.1} parent=1 // pred_check_branch
      %83 = sbr.rel (0) target = $region49
    $region48: #{tpu_custom_call.1} parent=1 // pred_region
      %84 = dma.done [#allocation10], 256
    $region49: #{tpu_custom_call.1} parent=1 // pred_fallthru
      _
    // Predicated region
    $region50: #{tpu_custom_call.1} parent=1 // pred_check
      _
    $region51: #{tpu_custom_call.1} parent=1 // pred_check_branch
      %86 = sbr.rel (0) target = $region53
    $region52: #{tpu_custom_call.1} parent=1 // pred_region
      %87 = dma.done [#allocation13], 512
    $region53: #{tpu_custom_call.1} parent=1 // pred_fallthru
      _
    %v88 = vld [vmem:[#allocation11] sm:$0xff]
    %v89 = vld [vmem:[#allocation11 + $0x8] sm:$0xff]
    %v90 = vld [vmem:[%s5] sm:$0xff]
    %v91 = vld [vmem:[%s5 + $0x8] sm:$0xff]
    %v92 = vld [vmem:[#allocation7] sm:$0x3]
    %v93 = vld [vmem:[#allocation7 + $0x2] sm:$0x3]
    %v94 = vld [vmem:[#allocation7 + $0x4] sm:$0x3]
    %v95 = vld [vmem:[#allocation7 + $0x6] sm:$0x3]
    %v96 = vld [vmem:[#allocation7 + $0x8] sm:$0x3]
    %v97 = vld [vmem:[#allocation7 + $0xa] sm:$0x3]
    %v98 = vld [vmem:[#allocation7 + $0xc] sm:$0x3]
    %v99 = vld [vmem:[#allocation7 + $0xe] sm:$0x3]
    %v100 = vld [vmem:[#allocation9] sm:$0xff]
    %v101 = vld [vmem:[#allocation9 + $0x8] sm:$0xff]
    %v102 = vld [vmem:[#allocation9 + $0x10] sm:$0xff]
    %v103 = vld [vmem:[#allocation9 + $0x18] sm:$0xff]
    %v104 = vld [vmem:[%s3] sm:$0x1]
    %v106 = vlaneseq
    %v107 = vshrl.u32 %v106, 7
    %v108 = vsub.s32 0, %v107
    %v109 = vrot.slane %v104, %v108
    %v119 = vcombine.low %v92, %v93
    %v120 = vcombine.low %v94, %v95
    %v122 = vunpack.c.l.s4 1983009808
    %v123 = vunpack.c.0.s8 %v122
    %v124 = vlaneseq
    %v125 = vshrl.u32 %v124, 7
    %v126 = vsub.s32 %v123, %v125
    %v127 = vrot.slane %v119, %v126
    %v129 = vunpack.c.l.s4 1983009808
    %v130 = vunpack.c.0.s8 %v129
    %v131 = vlaneseq
    %v132 = vshrl.u32 %v131, 7
    %v133 = vsub.s32 %v130, %v132
    %v134 = vrot.slane %v120, %v133
    %v135 = vcombine.low %v127, %v134
    %v136 = vcombine.low %v96, %v97
    %v137 = vcombine.low %v98, %v99
    %v139 = vunpack.c.l.s4 1983009808
    %v140 = vunpack.c.0.s8 %v139
    %v141 = vlaneseq
    %v142 = vshrl.u32 %v141, 7
    %v143 = vsub.s32 %v140, %v142
    %v144 = vrot.slane %v136, %v143
    %v146 = vunpack.c.l.s4 1983009808
    %v147 = vunpack.c.0.s8 %v146
    %v148 = vlaneseq
    %v149 = vshrl.u32 %v148, 7
    %v150 = vsub.s32 %v147, %v149
    %v151 = vrot.slane %v137, %v150
    %v152 = vcombine.low %v144, %v151
    %vm153 = vcmask 261120
    %v154 = vsel %vm153, %v135, 0
    %v156 = vsel %vm153, %v152, 0
    %158 = vmatprep.subr.mxu0 0.0
    %159 = vmatpush1.msra.mxu0 %v100
    %160 = vmatprep.subr.mxu0 0.0
    %161 = vmatpush1.msra.mxu0 %v101
    %162 = vmatprep.subr.mxu0 0.0
    %163 = vmatpush1.msra.mxu0 %v102
    %164 = vmatprep.subr.mxu0 0.0
    %165 = vmatpush1.msra.mxu0 %v103
    %166 = vmatprep.subr.mxu0 0.0
    %167 = vmatpush1.msra.mxu0 0.0
    %168 = vmatprep.subr.mxu0 0.0
    %169 = vmatpush1.msra.mxu0 0.0
    %170 = vmatprep.subr.mxu0 0.0
    %171 = vmatpush1.msra.mxu0 0.0
    %172 = vmatprep.subr.mxu0 0.0
    %173 = vmatpush1.msra.mxu0 0.0
    %174 = vmatprep.subr.mxu0 0.0
    %175 = vmatpush1.msra.mxu0 0.0
    %176 = vmatprep.subr.mxu0 0.0
    %177 = vmatpush1.msra.mxu0 0.0
    %178 = vmatprep.subr.mxu0 0.0
    %179 = vmatpush1.msra.mxu0 0.0
    %180 = vmatprep.subr.mxu0 0.0
    %181 = vmatpush1.msra.mxu0 0.0
    %182 = vmatprep.subr.mxu0 0.0
    %183 = vmatpush1.msra.mxu0 0.0
    %184 = vmatprep.subr.mxu0 0.0
    %185 = vmatpush1.msra.mxu0 0.0
    %186 = vmatprep.subr.mxu0 0.0
    %187 = vmatpush1.msra.mxu0 0.0
    %188 = vmatprep.subr.mxu0 0.0
    %189 = vmatpush1.msra.mxu0 0.0
    %190 = vmatprep.subr.mxu0 0.0
    %191 = vmatpush1.msra.mxu0 0.0
    %192 = vmatprep.subr.mxu0 0.0
    %193 = vmatpush1.msra.mxu0 0.0
    %194 = vmatprep.subr.mxu0 0.0
    %195 = vmatpush1.msra.mxu0 0.0
    %196 = vmatprep.subr.mxu0 0.0
    %197 = vmatpush1.msra.mxu0 0.0
    %198 = vmatprep.subr.mxu0 0.0
    %199 = vmatpush1.msra.mxu0 0.0
    %200 = vmatprep.subr.mxu0 0.0
    %201 = vmatpush1.msra.mxu0 0.0
    %202 = vmatprep.subr.mxu0 0.0
    %203 = vmatpush1.msra.mxu0 0.0
    %204 = vmatprep.subr.mxu0 0.0
    %205 = vmatpush1.msra.mxu0 0.0
    %206 = vmatprep.subr.mxu0 0.0
    %207 = vmatpush1.msra.mxu0 0.0
    %208 = vmatprep.subr.mxu0 0.0
    %209 = vmatpush1.msra.mxu0 0.0
    %210 = vmatprep.subr.mxu0 0.0
    %211 = vmatpush1.msra.mxu0 0.0
    %212 = vmatprep.subr.mxu0 0.0
    %213 = vmatpush1.msra.mxu0 0.0
    %214 = vmatprep.subr.mxu0 0.0
    %215 = vmatpush1.msra.mxu0 0.0
    %216 = vmatprep.subr.mxu0 0.0
    %217 = vmatpush1.msra.mxu0 0.0
    %218 = vmatprep.subr.mxu0 0.0
    %219 = vmatpush1.msra.mxu0 0.0
    %220 = vmatprep.subr.mxu0 0.0
    %221 = vmatpush1.msra.mxu0 0.0
    %222 = vmatprep.mubr.f32.mxu0 0.0
    %223 = vmatmul.mubr.f32.gmra.mrb[0].mxu0 %v154
    %v224 = vpop.f32.mrb[0].mxu0
    %v225 = vadd.f32 %v109, %v224
    %v226 = vpop.f32.mrb[0].mxu0
    %227 = vmatprep.mubr.f32.mxu0 0.0
    %228 = vmatmul.mubr.f32.gmra.mrb[0].mxu0 %v156
    %v229 = vpop.f32.mrb[0].mxu0
    %v230 = vadd.f32 %v109, %v229
    %v231 = vpop.f32.mrb[0].mxu0
    %232 = vdwg.mxu0
    %v233 = vld [vmem:[#allocation12] sm:$0xff]
    %v234 = vld [vmem:[#allocation12 + $0x8] sm:$0xff]
    %v235 = vld [vmem:[#allocation12 + $0x10] sm:$0xff]
    %v236 = vld [vmem:[#allocation12 + $0x18] sm:$0xff]
    %v237 = vld [vmem:[%s6] sm:$0x1]
    %v239 = vlaneseq
    %v240 = vshrl.u32 %v239, 7
    %v241 = vsub.s32 0, %v240
    %v242 = vrot.slane %v237, %v241
    %244 = vmatprep.subr.mxu0 0.0
    %245 = vmatpush1.msra.mxu0 %v233
    %246 = vmatprep.subr.mxu0 0.0
    %247 = vmatpush1.msra.mxu0 %v234
    %248 = vmatprep.subr.mxu0 0.0
    %249 = vmatpush1.msra.mxu0 %v235
    %250 = vmatprep.subr.mxu0 0.0
    %251 = vmatpush1.msra.mxu0 %v236
    %252 = vmatprep.subr.mxu0 0.0
    %253 = vmatpush1.msra.mxu0 0.0
    %254 = vmatprep.subr.mxu0 0.0
    %255 = vmatpush1.msra.mxu0 0.0
    %256 = vmatprep.subr.mxu0 0.0
    %257 = vmatpush1.msra.mxu0 0.0
    %258 = vmatprep.subr.mxu0 0.0
    %259 = vmatpush1.msra.mxu0 0.0
    %260 = vmatprep.subr.mxu0 0.0
    %261 = vmatpush1.msra.mxu0 0.0
    %262 = vmatprep.subr.mxu0 0.0
    %263 = vmatpush1.msra.mxu0 0.0
    %264 = vmatprep.subr.mxu0 0.0
    %265 = vmatpush1.msra.mxu0 0.0
    %266 = vmatprep.subr.mxu0 0.0
    %267 = vmatpush1.msra.mxu0 0.0
    %268 = vmatprep.subr.mxu0 0.0
    %269 = vmatpush1.msra.mxu0 0.0
    %270 = vmatprep.subr.mxu0 0.0
    %271 = vmatpush1.msra.mxu0 0.0
    %272 = vmatprep.subr.mxu0 0.0
    %273 = vmatpush1.msra.mxu0 0.0
    %274 = vmatprep.subr.mxu0 0.0
    %275 = vmatpush1.msra.mxu0 0.0
    %276 = vmatprep.subr.mxu0 0.0
    %277 = vmatpush1.msra.mxu0 0.0
    %278 = vmatprep.subr.mxu0 0.0
    %279 = vmatpush1.msra.mxu0 0.0
    %280 = vmatprep.subr.mxu0 0.0
    %281 = vmatpush1.msra.mxu0 0.0
    %282 = vmatprep.subr.mxu0 0.0
    %283 = vmatpush1.msra.mxu0 0.0
    %284 = vmatprep.subr.mxu0 0.0
    %285 = vmatpush1.msra.mxu0 0.0
    %286 = vmatprep.subr.mxu0 0.0
    %287 = vmatpush1.msra.mxu0 0.0
    %288 = vmatprep.subr.mxu0 0.0
    %289 = vmatpush1.msra.mxu0 0.0
    %290 = vmatprep.subr.mxu0 0.0
    %291 = vmatpush1.msra.mxu0 0.0
    %292 = vmatprep.subr.mxu0 0.0
    %293 = vmatpush1.msra.mxu0 0.0
    %294 = vmatprep.subr.mxu0 0.0
    %295 = vmatpush1.msra.mxu0 0.0
    %296 = vmatprep.subr.mxu0 0.0
    %297 = vmatpush1.msra.mxu0 0.0
    %298 = vmatprep.subr.mxu0 0.0
    %299 = vmatpush1.msra.mxu0 0.0
    %300 = vmatprep.subr.mxu0 0.0
    %301 = vmatpush1.msra.mxu0 0.0
    %302 = vmatprep.subr.mxu0 0.0
    %303 = vmatpush1.msra.mxu0 0.0
    %304 = vmatprep.subr.mxu0 0.0
    %305 = vmatpush1.msra.mxu0 0.0
    %306 = vmatprep.subr.mxu0 0.0
    %307 = vmatpush1.msra.mxu0 0.0
    %308 = vmatprep.mubr.f32.mxu0 0.0
    %309 = vmatmul.mubr.f32.gmra.mrb[0].mxu0 %v154
    %v310 = vpop.f32.mrb[0].mxu0
    %v311 = vadd.f32 %v242, %v310
    %v312 = vpop.f32.mrb[0].mxu0
    %313 = vmatprep.mubr.f32.mxu0 0.0
    %314 = vmatmul.mubr.f32.gmra.mrb[0].mxu0 %v156
    %v315 = vpop.f32.mrb[0].mxu0
    %v316 = vadd.f32 %v242, %v315
    %v317 = vpop.f32.mrb[0].mxu0
    %318 = vdwg.mxu0
    %v321 = vcombine.high %v225, %v225
    %v323 = vunpack.c.l.s4 1983009808
    %v324 = vunpack.c.0.s8 %v323
    %v325 = vlaneseq
    %v326 = vshrl.u32 %v325, 7
    %v327 = vsub.s32 %v324, %v326
    %v328 = vrot.slane %v225, %v327
    %v330 = vunpack.c.l.s4 1983009808
    %v331 = vunpack.c.0.s8 %v330
    %v332 = vlaneseq
    %v333 = vshrl.u32 %v332, 7
    %v334 = vsub.s32 %v331, %v333
    %v335 = vrot.slane %v321, %v334
    %v336 = vcombine.high %v328, %v328
    %v337 = vcombine.high %v335, %v335
    %v338 = vcombine.high %v230, %v230
    %v340 = vunpack.c.l.s4 1983009808
    %v341 = vunpack.c.0.s8 %v340
    %v342 = vlaneseq
    %v343 = vshrl.u32 %v342, 7
    %v344 = vsub.s32 %v341, %v343
    %v345 = vrot.slane %v230, %v344
    %v347 = vunpack.c.l.s4 1983009808
    %v348 = vunpack.c.0.s8 %v347
    %v349 = vlaneseq
    %v350 = vshrl.u32 %v349, 7
    %v351 = vsub.s32 %v348, %v350
    %v352 = vrot.slane %v338, %v351
    %v353 = vcombine.high %v345, %v345
    %v354 = vcombine.high %v352, %v352
    %vm363 = vcmask 517120
    %364 = vst.msk [vmem:[#allocation2] sm:$0x3] %vm363, %v328
    %365 = vst.msk [vmem:[#allocation2 + $0x2] sm:$0x3] %vm363, %v336
    %366 = vst.msk [vmem:[#allocation2 + $0x4] sm:$0x3] %vm363, %v335
    %367 = vst.msk [vmem:[#allocation2 + $0x6] sm:$0x3] %vm363, %v337
    %368 = vst.msk [vmem:[#allocation2 + $0x8] sm:$0x3] %vm363, %v345
    %369 = vst.msk [vmem:[#allocation2 + $0xa] sm:$0x3] %vm363, %v353
    %370 = vst.msk [vmem:[#allocation2 + $0xc] sm:$0x3] %vm363, %v352
    %371 = vst.msk [vmem:[#allocation2 + $0xe] sm:$0x3] %vm363, %v354
    %v374 = vcombine.high %v311, %v311
    %v376 = vunpack.c.l.s4 1983009808
    %v377 = vunpack.c.0.s8 %v376
    %v378 = vlaneseq
    %v379 = vshrl.u32 %v378, 7
    %v380 = vsub.s32 %v377, %v379
    %v381 = vrot.slane %v311, %v380
    %v383 = vunpack.c.l.s4 1983009808
    %v384 = vunpack.c.0.s8 %v383
    %v385 = vlaneseq
    %v386 = vshrl.u32 %v385, 7
    %v387 = vsub.s32 %v384, %v386
    %v388 = vrot.slane %v374, %v387
    %v389 = vcombine.high %v381, %v381
    %v390 = vcombine.high %v388, %v388
    %v391 = vcombine.high %v316, %v316
    %v393 = vunpack.c.l.s4 1983009808
    %v394 = vunpack.c.0.s8 %v393
    %v395 = vlaneseq
    %v396 = vshrl.u32 %v395, 7
    %v397 = vsub.s32 %v394, %v396
    %v398 = vrot.slane %v316, %v397
    %v400 = vunpack.c.l.s4 1983009808
    %v401 = vunpack.c.0.s8 %v400
    %v402 = vlaneseq
    %v403 = vshrl.u32 %v402, 7
    %v404 = vsub.s32 %v401, %v403
    %v405 = vrot.slane %v391, %v404
    %v406 = vcombine.high %v398, %v398
    %v407 = vcombine.high %v405, %v405
    %416 = vst.msk [vmem:[#allocation3] sm:$0x3] %vm363, %v381
    %417 = vst.msk [vmem:[#allocation3 + $0x2] sm:$0x3] %vm363, %v389
    %418 = vst.msk [vmem:[#allocation3 + $0x4] sm:$0x3] %vm363, %v388
    %419 = vst.msk [vmem:[#allocation3 + $0x6] sm:$0x3] %vm363, %v390
    %420 = vst.msk [vmem:[#allocation3 + $0x8] sm:$0x3] %vm363, %v398
    %421 = vst.msk [vmem:[#allocation3 + $0xa] sm:$0x3] %vm363, %v406
    %422 = vst.msk [vmem:[#allocation3 + $0xc] sm:$0x3] %vm363, %v405
    %423 = vst.msk [vmem:[#allocation3 + $0xe] sm:$0x3] %vm363, %v407
    %v424 = vld [vmem:[#allocation2] sm:$0x3]
    %vm425 = vcmask 130048
    %v427 = vsel %vm425, 0.0, 0
    %429 = vmatprep.subr.mxu0 0.0
    %430 = vmatpush1.msra.mxu0 %v88
    %431 = vmatprep.subr.mxu0 0.0
    %432 = vmatpush1.msra.mxu0 %v89
    %433 = vmatprep.subr.mxu0 0.0
    %434 = vmatpush1.msra.mxu0 0.0
    %435 = vmatprep.subr.mxu0 0.0
    %436 = vmatpush1.msra.mxu0 0.0
    %437 = vmatprep.subr.mxu0 0.0
    %438 = vmatpush1.msra.mxu0 0.0
    %439 = vmatprep.subr.mxu0 0.0
    %440 = vmatpush1.msra.mxu0 0.0
    %441 = vmatprep.subr.mxu0 0.0
    %442 = vmatpush1.msra.mxu0 0.0
    %443 = vmatprep.subr.mxu0 0.0
    %444 = vmatpush1.msra.mxu0 0.0
    %445 = vmatprep.subr.mxu0 0.0
    %446 = vmatpush1.msra.mxu0 0.0
    %447 = vmatprep.subr.mxu0 0.0
    %448 = vmatpush1.msra.mxu0 0.0
    %449 = vmatprep.subr.mxu0 0.0
    %450 = vmatpush1.msra.mxu0 0.0
    %451 = vmatprep.subr.mxu0 0.0
    %452 = vmatpush1.msra.mxu0 0.0
    %453 = vmatprep.subr.mxu0 0.0
    %454 = vmatpush1.msra.mxu0 0.0
    %455 = vmatprep.subr.mxu0 0.0
    %456 = vmatpush1.msra.mxu0 0.0
    %457 = vmatprep.subr.mxu0 0.0
    %458 = vmatpush1.msra.mxu0 0.0
    %459 = vmatprep.subr.mxu0 0.0
    %460 = vmatpush1.msra.mxu0 0.0
    %461 = vmatprep.subr.mxu0 0.0
    %462 = vmatpush1.msra.mxu0 0.0
    %463 = vmatprep.subr.mxu0 0.0
    %464 = vmatpush1.msra.mxu0 0.0
    %465 = vmatprep.subr.mxu0 0.0
    %466 = vmatpush1.msra.mxu0 0.0
    %467 = vmatprep.subr.mxu0 0.0
    %468 = vmatpush1.msra.mxu0 0.0
    %469 = vmatprep.subr.mxu0 0.0
    %470 = vmatpush1.msra.mxu0 0.0
    %471 = vmatprep.subr.mxu0 0.0
    %472 = vmatpush1.msra.mxu0 0.0
    %473 = vmatprep.subr.mxu0 0.0
    %474 = vmatpush1.msra.mxu0 0.0
    %475 = vmatprep.subr.mxu0 0.0
    %476 = vmatpush1.msra.mxu0 0.0
    %477 = vmatprep.subr.mxu0 0.0
    %478 = vmatpush1.msra.mxu0 0.0
    %479 = vmatprep.subr.mxu0 0.0
    %480 = vmatpush1.msra.mxu0 0.0
    %481 = vmatprep.subr.mxu0 0.0
    %482 = vmatpush1.msra.mxu0 0.0
    %483 = vmatprep.subr.mxu0 0.0
    %484 = vmatpush1.msra.mxu0 0.0
    %485 = vmatprep.subr.mxu0 0.0
    %486 = vmatpush1.msra.mxu0 0.0
    %487 = vmatprep.subr.mxu0 0.0
    %488 = vmatpush1.msra.mxu0 0.0
    %489 = vmatprep.subr.mxu0 0.0
    %490 = vmatpush1.msra.mxu0 0.0
    %491 = vmatprep.subr.mxu0 0.0
    %492 = vmatpush1.msra.mxu0 0.0
    %493 = vmatprep.mubr.f32.mxu0 0.0
    %494 = vmatmul.mubr.f32.gmra.mrb[0].mxu0 %v427
    %v495 = vpop.f32.mrb[0].mxu0
    %v496 = vadd.f32 0.0, %v495
    %v497 = vpop.f32.mrb[0].mxu0
    %498 = vdwg.mxu0
    %v499 = vadd.f32 %v424, %v496
    %s500 = scalar_lea.vmem [#allocation3], 14
    %v501 = vld [vmem:[%s500] sm:$0x3]
    %502 = vmatprep.subr.mxu0 0.0
    %503 = vmatpush1.msra.mxu0 %v90
    %504 = vmatprep.subr.mxu0 0.0
    %505 = vmatpush1.msra.mxu0 %v91
    %506 = vmatprep.subr.mxu0 0.0
    %507 = vmatpush1.msra.mxu0 0.0
    %508 = vmatprep.subr.mxu0 0.0
    %509 = vmatpush1.msra.mxu0 0.0
    %510 = vmatprep.subr.mxu0 0.0
    %511 = vmatpush1.msra.mxu0 0.0
    %512 = vmatprep.subr.mxu0 0.0
    %513 = vmatpush1.msra.mxu0 0.0
    %514 = vmatprep.subr.mxu0 0.0
    %515 = vmatpush1.msra.mxu0 0.0
    %516 = vmatprep.subr.mxu0 0.0
    %517 = vmatpush1.msra.mxu0 0.0
    %518 = vmatprep.subr.mxu0 0.0
    %519 = vmatpush1.msra.mxu0 0.0
    %520 = vmatprep.subr.mxu0 0.0
    %521 = vmatpush1.msra.mxu0 0.0
    %522 = vmatprep.subr.mxu0 0.0
    %523 = vmatpush1.msra.mxu0 0.0
    %524 = vmatprep.subr.mxu0 0.0
    %525 = vmatpush1.msra.mxu0 0.0
    %526 = vmatprep.subr.mxu0 0.0
    %527 = vmatpush1.msra.mxu0 0.0
    %528 = vmatprep.subr.mxu0 0.0
    %529 = vmatpush1.msra.mxu0 0.0
    %530 = vmatprep.subr.mxu0 0.0
    %531 = vmatpush1.msra.mxu0 0.0
    %532 = vmatprep.subr.mxu0 0.0
    %533 = vmatpush1.msra.mxu0 0.0
    %534 = vmatprep.subr.mxu0 0.0
    %535 = vmatpush1.msra.mxu0 0.0
    %536 = vmatprep.subr.mxu0 0.0
    %537 = vmatpush1.msra.mxu0 0.0
    %538 = vmatprep.subr.mxu0 0.0
    %539 = vmatpush1.msra.mxu0 0.0
    %540 = vmatprep.subr.mxu0 0.0
    %541 = vmatpush1.msra.mxu0 0.0
    %542 = vmatprep.subr.mxu0 0.0
    %543 = vmatpush1.msra.mxu0 0.0
    %544 = vmatprep.subr.mxu0 0.0
    %545 = vmatpush1.msra.mxu0 0.0
    %546 = vmatprep.subr.mxu0 0.0
    %547 = vmatpush1.msra.mxu0 0.0
    %548 = vmatprep.subr.mxu0 0.0
    %549 = vmatpush1.msra.mxu0 0.0
    %550 = vmatprep.subr.mxu0 0.0
    %551 = vmatpush1.msra.mxu0 0.0
    %552 = vmatprep.subr.mxu0 0.0
    %553 = vmatpush1.msra.mxu0 0.0
    %554 = vmatprep.subr.mxu0 0.0
    %555 = vmatpush1.msra.mxu0 0.0
    %556 = vmatprep.subr.mxu0 0.0
    %557 = vmatpush1.msra.mxu0 0.0
    %558 = vmatprep.subr.mxu0 0.0
    %559 = vmatpush1.msra.mxu0 0.0
    %560 = vmatprep.subr.mxu0 0.0
    %561 = vmatpush1.msra.mxu0 0.0
    %562 = vmatprep.subr.mxu0 0.0
    %563 = vmatpush1.msra.mxu0 0.0
    %564 = vmatprep.subr.mxu0 0.0
    %565 = vmatpush1.msra.mxu0 0.0
    %566 = vmatprep.mubr.f32.mxu0 0.0
    %567 = vmatmul.mubr.f32.gmra.mrb[0].mxu0 %v427
    %v568 = vpop.f32.mrb[0].mxu0
    %v569 = vadd.f32 0.0, %v568
    %v570 = vpop.f32.mrb[0].mxu0
    %571 = vdwg.mxu0
    %v572 = vadd.f32 %v501, %v569
    %v573 = vxor.u32 %v499, 2147483648
    %v574 = vmul.f32 %v573, 1.442695
    %v575 = vpow.pop %v574
    %v576 = vadd.f32 %v575, 1.0
    %v577 = vrcp.pop %v576
    %v578 = vmul.f32 1.0, %v577
    %v579 = vtanh.pop %v499
    %v580 = vmul.f32 %v578, 0.0
    %582 = vrot.lane.b32.xlu0 %v579, 96
    %v583 = vpop.permute.xlu0 %582
    %v585 = vmul.f32 %v578, %v583
    %587 = vrot.lane.b32.xlu0 %v585, 16
    %v588 = vpop.permute.xlu0 %587
    %v590 = vadd.f32 %v580, %v588
    %v591 = vtanh.pop %v590
    %593 = vrot.lane.b32.xlu0 %v591, 32
    %v594 = vpop.permute.xlu0 %593
    %v596 = vmul.f32 %v578, %v594
    %v597 = vxor.u32 %v572, 2147483648
    %v598 = vmul.f32 %v597, 1.442695
    %v599 = vpow.pop %v598
    %v600 = vadd.f32 %v599, 1.0
    %v601 = vrcp.pop %v600
    %v602 = vmul.f32 1.0, %v601
    %v603 = vtanh.pop %v572
    %v604 = vmul.f32 %v602, 0.0
    %606 = vrot.lane.b32.xlu0 %v603, 96
    %v607 = vpop.permute.xlu0 %606
    %v609 = vmul.f32 %v602, %v607
    %611 = vrot.lane.b32.xlu0 %v609, 16
    %v612 = vpop.permute.xlu0 %611
    %v614 = vadd.f32 %v604, %v612
    %v615 = vtanh.pop %v614
    %617 = vrot.lane.b32.xlu0 %v615, 32
    %v618 = vpop.permute.xlu0 %617
    %v620 = vmul.f32 %v602, %v618
    %622 = vrot.lane.b32.xlu0 %v596, 80
    %v623 = vpop.permute.xlu0 %622
    %vm625 = vcmask 123904
    %626 = vst.msk [vmem:[#allocation4] sm:$0x3] %vm625, %v623
    %628 = vrot.lane.b32.xlu0 %v620, 80
    %v629 = vpop.permute.xlu0 %628
    %s631 = scalar_lea.vmem [#allocation5], 14
    %632 = vst.msk [vmem:[%s631] sm:$0x3] %vm625, %v629
    %s633 = scalar_lea.vmem [#allocation2], 2
    %v634 = vld [vmem:[%s633] sm:$0x3]
    %v635 = vsel %vm425, %v623, 0
    %637 = vmatprep.subr.mxu0 0.0
    %638 = vmatpush1.msra.mxu0 %v88
    %639 = vmatprep.subr.mxu0 0.0
    %640 = vmatpush1.msra.mxu0 %v89
    %641 = vmatprep.subr.mxu0 0.0
    %642 = vmatpush1.msra.mxu0 0.0
    %643 = vmatprep.subr.mxu0 0.0
    %644 = vmatpush1.msra.mxu0 0.0
    %645 = vmatprep.subr.mxu0 0.0
    %646 = vmatpush1.msra.mxu0 0.0
    %647 = vmatprep.subr.mxu0 0.0
    %648 = vmatpush1.msra.mxu0 0.0
    %649 = vmatprep.subr.mxu0 0.0
    %650 = vmatpush1.msra.mxu0 0.0
    %651 = vmatprep.subr.mxu0 0.0
    %652 = vmatpush1.msra.mxu0 0.0
    %653 = vmatprep.subr.mxu0 0.0
    %654 = vmatpush1.msra.mxu0 0.0
    %655 = vmatprep.subr.mxu0 0.0
    %656 = vmatpush1.msra.mxu0 0.0
    %657 = vmatprep.subr.mxu0 0.0
    %658 = vmatpush1.msra.mxu0 0.0
    %659 = vmatprep.subr.mxu0 0.0
    %660 = vmatpush1.msra.mxu0 0.0
    %661 = vmatprep.subr.mxu0 0.0
    %662 = vmatpush1.msra.mxu0 0.0
    %663 = vmatprep.subr.mxu0 0.0
    %664 = vmatpush1.msra.mxu0 0.0
    %665 = vmatprep.subr.mxu0 0.0
    %666 = vmatpush1.msra.mxu0 0.0
    %667 = vmatprep.subr.mxu0 0.0
    %668 = vmatpush1.msra.mxu0 0.0
    %669 = vmatprep.subr.mxu0 0.0
    %670 = vmatpush1.msra.mxu0 0.0
    %671 = vmatprep.subr.mxu0 0.0
    %672 = vmatpush1.msra.mxu0 0.0
    %673 = vmatprep.subr.mxu0 0.0
    %674 = vmatpush1.msra.mxu0 0.0
    %675 = vmatprep.subr.mxu0 0.0
    %676 = vmatpush1.msra.mxu0 0.0
    %677 = vmatprep.subr.mxu0 0.0
    %678 = vmatpush1.msra.mxu0 0.0
    %679 = vmatprep.subr.mxu0 0.0
    %680 = vmatpush1.msra.mxu0 0.0
    %681 = vmatprep.subr.mxu0 0.0
    %682 = vmatpush1.msra.mxu0 0.0
    %683 = vmatprep.subr.mxu0 0.0
    %684 = vmatpush1.msra.mxu0 0.0
    %685 = vmatprep.subr.mxu0 0.0
    %686 = vmatpush1.msra.mxu0 0.0
    %687 = vmatprep.subr.mxu0 0.0
    %688 = vmatpush1.msra.mxu0 0.0
    %689 = vmatprep.subr.mxu0 0.0
    %690 = vmatpush1.msra.mxu0 0.0
    %691 = vmatprep.subr.mxu0 0.0
    %692 = vmatpush1.msra.mxu0 0.0
    %693 = vmatprep.subr.mxu0 0.0
    %694 = vmatpush1.msra.mxu0 0.0
    %695 = vmatprep.subr.mxu0 0.0
    %696 = vmatpush1.msra.mxu0 0.0
    %697 = vmatprep.subr.mxu0 0.0
    %698 = vmatpush1.msra.mxu0 0.0
    %699 = vmatprep.subr.mxu0 0.0
    %700 = vmatpush1.msra.mxu0 0.0
    %701 = vmatprep.mubr.f32.mxu0 0.0
    %702 = vmatmul.mubr.f32.gmra.mrb[0].mxu0 %v635
    %v703 = vpop.f32.mrb[0].mxu0
    %v704 = vadd.f32 0.0, %v703
    %v705 = vpop.f32.mrb[0].mxu0
    %706 = vdwg.mxu0
    %v707 = vadd.f32 %v634, %v704
    %s708 = scalar_lea.vmem [#allocation3], 12
    %v709 = vld [vmem:[%s708] sm:$0x3]
    %v710 = vsel %vm425, %v629, 0
    %712 = vmatprep.subr.mxu0 0.0
    %713 = vmatpush1.msra.mxu0 %v90
    %714 = vmatprep.subr.mxu0 0.0
    %715 = vmatpush1.msra.mxu0 %v91
    %716 = vmatprep.subr.mxu0 0.0
    %717 = vmatpush1.msra.mxu0 0.0
    %718 = vmatprep.subr.mxu0 0.0
    %719 = vmatpush1.msra.mxu0 0.0
    %720 = vmatprep.subr.mxu0 0.0
    %721 = vmatpush1.msra.mxu0 0.0
    %722 = vmatprep.subr.mxu0 0.0
    %723 = vmatpush1.msra.mxu0 0.0
    %724 = vmatprep.subr.mxu0 0.0
    %725 = vmatpush1.msra.mxu0 0.0
    %726 = vmatprep.subr.mxu0 0.0
    %727 = vmatpush1.msra.mxu0 0.0
    %728 = vmatprep.subr.mxu0 0.0
    %729 = vmatpush1.msra.mxu0 0.0
    %730 = vmatprep.subr.mxu0 0.0
    %731 = vmatpush1.msra.mxu0 0.0
    %732 = vmatprep.subr.mxu0 0.0
    %733 = vmatpush1.msra.mxu0 0.0
    %734 = vmatprep.subr.mxu0 0.0
    %735 = vmatpush1.msra.mxu0 0.0
    %736 = vmatprep.subr.mxu0 0.0
    %737 = vmatpush1.msra.mxu0 0.0
    %738 = vmatprep.subr.mxu0 0.0
    %739 = vmatpush1.msra.mxu0 0.0
    %740 = vmatprep.subr.mxu0 0.0
    %741 = vmatpush1.msra.mxu0 0.0
    %742 = vmatprep.subr.mxu0 0.0
    %743 = vmatpush1.msra.mxu0 0.0
    %744 = vmatprep.subr.mxu0 0.0
    %745 = vmatpush1.msra.mxu0 0.0
    %746 = vmatprep.subr.mxu0 0.0
    %747 = vmatpush1.msra.mxu0 0.0
    %748 = vmatprep.subr.mxu0 0.0
    %749 = vmatpush1.msra.mxu0 0.0
    %750 = vmatprep.subr.mxu0 0.0
    %751 = vmatpush1.msra.mxu0 0.0
    %752 = vmatprep.subr.mxu0 0.0
    %753 = vmatpush1.msra.mxu0 0.0
    %754 = vmatprep.subr.mxu0 0.0
    %755 = vmatpush1.msra.mxu0 0.0
    %756 = vmatprep.subr.mxu0 0.0
    %757 = vmatpush1.msra.mxu0 0.0
    %758 = vmatprep.subr.mxu0 0.0
    %759 = vmatpush1.msra.mxu0 0.0
    %760 = vmatprep.subr.mxu0 0.0
    %761 = vmatpush1.msra.mxu0 0.0
    %762 = vmatprep.subr.mxu0 0.0
    %763 = vmatpush1.msra.mxu0 0.0
    %764 = vmatprep.subr.mxu0 0.0
    %765 = vmatpush1.msra.mxu0 0.0
    %766 = vmatprep.subr.mxu0 0.0
    %767 = vmatpush1.msra.mxu0 0.0
    %768 = vmatprep.subr.mxu0 0.0
    %769 = vmatpush1.msra.mxu0 0.0
    %770 = vmatprep.subr.mxu0 0.0
    %771 = vmatpush1.msra.mxu0 0.0
    %772 = vmatprep.subr.mxu0 0.0
    %773 = vmatpush1.msra.mxu0 0.0
    %774 = vmatprep.subr.mxu0 0.0
    %775 = vmatpush1.msra.mxu0 0.0
    %776 = vmatprep.mubr.f32.mxu0 0.0
    %777 = vmatmul.mubr.f32.gmra.mrb[0].mxu0 %v710
    %v778 = vpop.f32.mrb[0].mxu0
    %v779 = vadd.f32 0.0, %v778
    %v780 = vpop.f32.mrb[0].mxu0
    %781 = vdwg.mxu0
    %v782 = vadd.f32 %v709, %v779
    %v783 = vxor.u32 %v707, 2147483648
    %v784 = vmul.f32 %v783, 1.442695
    %v785 = vpow.pop %v784
    %v786 = vadd.f32 %v785, 1.0
    %v787 = vrcp.pop %v786
    %v788 = vmul.f32 1.0, %v787
    %v789 = vtanh.pop %v707
    %v790 = vmul.f32 %v788, %v590
    %792 = vrot.lane.b32.xlu0 %v789, 96
    %v793 = vpop.permute.xlu0 %792
    %v795 = vmul.f32 %v788, %v793
    %797 = vrot.lane.b32.xlu0 %v795, 16
    %v798 = vpop.permute.xlu0 %797
    %v800 = vadd.f32 %v790, %v798
    %v801 = vtanh.pop %v800
    %803 = vrot.lane.b32.xlu0 %v801, 32
    %v804 = vpop.permute.xlu0 %803
    %v806 = vmul.f32 %v788, %v804
    %v807 = vxor.u32 %v782, 2147483648
    %v808 = vmul.f32 %v807, 1.442695
    %v809 = vpow.pop %v808
    %v810 = vadd.f32 %v809, 1.0
    %v811 = vrcp.pop %v810
    %v812 = vmul.f32 1.0, %v811
    %v813 = vtanh.pop %v782
    %v814 = vmul.f32 %v812, %v614
    %816 = vrot.lane.b32.xlu0 %v813, 96
    %v817 = vpop.permute.xlu0 %816
    %v819 = vmul.f32 %v812, %v817
    %821 = vrot.lane.b32.xlu0 %v819, 16
    %v822 = vpop.permute.xlu0 %821
    %v824 = vadd.f32 %v814, %v822
    %v825 = vtanh.pop %v824
    %827 = vrot.lane.b32.xlu0 %v825, 32
    %v828 = vpop.permute.xlu0 %827
    %v830 = vmul.f32 %v812, %v828
    %832 = vrot.lane.b32.xlu0 %v806, 80
    %v833 = vpop.permute.xlu0 %832
    %s835 = scalar_lea.vmem [#allocation4], 2
    %836 = vst.msk [vmem:[%s835] sm:$0x3] %vm625, %v833
    %838 = vrot.lane.b32.xlu0 %v830, 80
    %v839 = vpop.permute.xlu0 %838
    %s841 = scalar_lea.vmem [#allocation5], 12
    %842 = vst.msk [vmem:[%s841] sm:$0x3] %vm625, %v839
    %s843 = scalar_lea.vmem [#allocation2], 4
    %v844 = vld [vmem:[%s843] sm:$0x3]
    %v845 = vsel %vm425, %v833, 0
    %847 = vmatprep.subr.mxu0 0.0
    %848 = vmatpush1.msra.mxu0 %v88
    %849 = vmatprep.subr.mxu0 0.0
    %850 = vmatpush1.msra.mxu0 %v89
    %851 = vmatprep.subr.mxu0 0.0
    %852 = vmatpush1.msra.mxu0 0.0
    %853 = vmatprep.subr.mxu0 0.0
    %854 = vmatpush1.msra.mxu0 0.0
    %855 = vmatprep.subr.mxu0 0.0
    %856 = vmatpush1.msra.mxu0 0.0
    %857 = vmatprep.subr.mxu0 0.0
    %858 = vmatpush1.msra.mxu0 0.0
    %859 = vmatprep.subr.mxu0 0.0
    %860 = vmatpush1.msra.mxu0 0.0
    %861 = vmatprep.subr.mxu0 0.0
    %862 = vmatpush1.msra.mxu0 0.0
    %863 = vmatprep.subr.mxu0 0.0
    %864 = vmatpush1.msra.mxu0 0.0
    %865 = vmatprep.subr.mxu0 0.0
    %866 = vmatpush1.msra.mxu0 0.0
    %867 = vmatprep.subr.mxu0 0.0
    %868 = vmatpush1.msra.mxu0 0.0
    %869 = vmatprep.subr.mxu0 0.0
    %870 = vmatpush1.msra.mxu0 0.0
    %871 = vmatprep.subr.mxu0 0.0
    %872 = vmatpush1.msra.mxu0 0.0
    %873 = vmatprep.subr.mxu0 0.0
    %874 = vmatpush1.msra.mxu0 0.0
    %875 = vmatprep.subr.mxu0 0.0
    %876 = vmatpush1.msra.mxu0 0.0
    %877 = vmatprep.subr.mxu0 0.0
    %878 = vmatpush1.msra.mxu0 0.0
    %879 = vmatprep.subr.mxu0 0.0
    %880 = vmatpush1.msra.mxu0 0.0
    %881 = vmatprep.subr.mxu0 0.0
    %882 = vmatpush1.msra.mxu0 0.0
    %883 = vmatprep.subr.mxu0 0.0
    %884 = vmatpush1.msra.mxu0 0.0
    %885 = vmatprep.subr.mxu0 0.0
    %886 = vmatpush1.msra.mxu0 0.0
    %887 = vmatprep.subr.mxu0 0.0
    %888 = vmatpush1.msra.mxu0 0.0
    %889 = vmatprep.subr.mxu0 0.0
    %890 = vmatpush1.msra.mxu0 0.0
    %891 = vmatprep.subr.mxu0 0.0
    %892 = vmatpush1.msra.mxu0 0.0
    %893 = vmatprep.subr.mxu0 0.0
    %894 = vmatpush1.msra.mxu0 0.0
    %895 = vmatprep.subr.mxu0 0.0
    %896 = vmatpush1.msra.mxu0 0.0
    %897 = vmatprep.subr.mxu0 0.0
    %898 = vmatpush1.msra.mxu0 0.0
    %899 = vmatprep.subr.mxu0 0.0
    %900 = vmatpush1.msra.mxu0 0.0
    %901 = vmatprep.subr.mxu0 0.0
    %902 = vmatpush1.msra.mxu0 0.0
    %903 = vmatprep.subr.mxu0 0.0
    %904 = vmatpush1.msra.mxu0 0.0
    %905 = vmatprep.subr.mxu0 0.0
    %906 = vmatpush1.msra.mxu0 0.0
    %907 = vmatprep.subr.mxu0 0.0
    %908 = vmatpush1.msra.mxu0 0.0
    %909 = vmatprep.subr.mxu0 0.0
    %910 = vmatpush1.msra.mxu0 0.0
    %911 = vmatprep.mubr.f32.mxu0 0.0
    %912 = vmatmul.mubr.f32.gmra.mrb[0].mxu0 %v845
    %v913 = vpop.f32.mrb[0].mxu0
    %v914 = vadd.f32 0.0, %v913
    %v915 = vpop.f32.mrb[0].mxu0
    %916 = vdwg.mxu0
    %v917 = vadd.f32 %v844, %v914
    %s918 = scalar_lea.vmem [#allocation3], 10
    %v919 = vld [vmem:[%s918] sm:$0x3]
    %v920 = vsel %vm425, %v839, 0
    %922 = vmatprep.subr.mxu0 0.0
    %923 = vmatpush1.msra.mxu0 %v90
    %924 = vmatprep.subr.mxu0 0.0
    %925 = vmatpush1.msra.mxu0 %v91
    %926 = vmatprep.subr.mxu0 0.0
    %927 = vmatpush1.msra.mxu0 0.0
    %928 = vmatprep.subr.mxu0 0.0
    %929 = vmatpush1.msra.mxu0 0.0
    %930 = vmatprep.subr.mxu0 0.0
    %931 = vmatpush1.msra.mxu0 0.0
    %932 = vmatprep.subr.mxu0 0.0
    %933 = vmatpush1.msra.mxu0 0.0
    %934 = vmatprep.subr.mxu0 0.0
    %935 = vmatpush1.msra.mxu0 0.0
    %936 = vmatprep.subr.mxu0 0.0
    %937 = vmatpush1.msra.mxu0 0.0
    %938 = vmatprep.subr.mxu0 0.0
    %939 = vmatpush1.msra.mxu0 0.0
    %940 = vmatprep.subr.mxu0 0.0
    %941 = vmatpush1.msra.mxu0 0.0
    %942 = vmatprep.subr.mxu0 0.0
    %943 = vmatpush1.msra.mxu0 0.0
    %944 = vmatprep.subr.mxu0 0.0
    %945 = vmatpush1.msra.mxu0 0.0
    %946 = vmatprep.subr.mxu0 0.0
    %947 = vmatpush1.msra.mxu0 0.0
    %948 = vmatprep.subr.mxu0 0.0
    %949 = vmatpush1.msra.mxu0 0.0
    %950 = vmatprep.subr.mxu0 0.0
    %951 = vmatpush1.msra.mxu0 0.0
    %952 = vmatprep.subr.mxu0 0.0
    %953 = vmatpush1.msra.mxu0 0.0
    %954 = vmatprep.subr.mxu0 0.0
    %955 = vmatpush1.msra.mxu0 0.0
    %956 = vmatprep.subr.mxu0 0.0
    %957 = vmatpush1.msra.mxu0 0.0
    %958 = vmatprep.subr.mxu0 0.0
    %959 = vmatpush1.msra.mxu0 0.0
    %960 = vmatprep.subr.mxu0 0.0
    %961 = vmatpush1.msra.mxu0 0.0
    %962 = vmatprep.subr.mxu0 0.0
    %963 = vmatpush1.msra.mxu0 0.0
    %964 = vmatprep.subr.mxu0 0.0
    %965 = vmatpush1.msra.mxu0 0.0
    %966 = vmatprep.subr.mxu0 0.0
    %967 = vmatpush1.msra.mxu0 0.0
    %968 = vmatprep.subr.mxu0 0.0
    %969 = vmatpush1.msra.mxu0 0.0
    %970 = vmatprep.subr.mxu0 0.0
    %971 = vmatpush1.msra.mxu0 0.0
    %972 = vmatprep.subr.mxu0 0.0
    %973 = vmatpush1.msra.mxu0 0.0
    %974 = vmatprep.subr.mxu0 0.0
    %975 = vmatpush1.msra.mxu0 0.0
    %976 = vmatprep.subr.mxu0 0.0
    %977 = vmatpush1.msra.mxu0 0.0
    %978 = vmatprep.subr.mxu0 0.0
    %979 = vmatpush1.msra.mxu0 0.0
    %980 = vmatprep.subr.mxu0 0.0
    %981 = vmatpush1.msra.mxu0 0.0
    %982 = vmatprep.subr.mxu0 0.0
    %983 = vmatpush1.msra.mxu0 0.0
    %984 = vmatprep.subr.mxu0 0.0
    %985 = vmatpush1.msra.mxu0 0.0
    %986 = vmatprep.mubr.f32.mxu0 0.0
    %987 = vmatmul.mubr.f32.gmra.mrb[0].mxu0 %v920
    %v988 = vpop.f32.mrb[0].mxu0
    %v989 = vadd.f32 0.0, %v988
    %v990 = vpop.f32.mrb[0].mxu0
    %991 = vdwg.mxu0
    %v992 = vadd.f32 %v919, %v989
    %v993 = vxor.u32 %v917, 2147483648
    %v994 = vmul.f32 %v993, 1.442695
    %v995 = vpow.pop %v994
    %v996 = vadd.f32 %v995, 1.0
    %v997 = vrcp.pop %v996
    %v998 = vmul.f32 1.0, %v997
    %v999 = vtanh.pop %v917
    %v1000 = vmul.f32 %v998, %v800
    %1002 = vrot.lane.b32.xlu0 %v999, 96
    %v1003 = vpop.permute.xlu0 %1002
    %v1005 = vmul.f32 %v998, %v1003
    %1007 = vrot.lane.b32.xlu0 %v1005, 16
    %v1008 = vpop.permute.xlu0 %1007
    %v1010 = vadd.f32 %v1000, %v1008
    %v1011 = vtanh.pop %v1010
    %1013 = vrot.lane.b32.xlu0 %v1011, 32
    %v1014 = vpop.permute.xlu0 %1013
    %v1016 = vmul.f32 %v998, %v1014
    %v1017 = vxor.u32 %v992, 2147483648
    %v1018 = vmul.f32 %v1017, 1.442695
    %v1019 = vpow.pop %v1018
    %v1020 = vadd.f32 %v1019, 1.0
    %v1021 = vrcp.pop %v1020
    %v1022 = vmul.f32 1.0, %v1021
    %v1023 = vtanh.pop %v992
    %v1024 = vmul.f32 %v1022, %v824
    %1026 = vrot.lane.b32.xlu0 %v1023, 96
    %v1027 = vpop.permute.xlu0 %1026
    %v1029 = vmul.f32 %v1022, %v1027
    %1031 = vrot.lane.b32.xlu0 %v1029, 16
    %v1032 = vpop.permute.xlu0 %1031
    %v1034 = vadd.f32 %v1024, %v1032
    %v1035 = vtanh.pop %v1034
    %1037 = vrot.lane.b32.xlu0 %v1035, 32
    %v1038 = vpop.permute.xlu0 %1037
    %v1040 = vmul.f32 %v1022, %v1038
    %1042 = vrot.lane.b32.xlu0 %v1016, 80
    %v1043 = vpop.permute.xlu0 %1042
    %s1045 = scalar_lea.vmem [#allocation4], 4
    %1046 = vst.msk [vmem:[%s1045] sm:$0x3] %vm625, %v1043
    %1048 = vrot.lane.b32.xlu0 %v1040, 80
    %v1049 = vpop.permute.xlu0 %1048
    %s1051 = scalar_lea.vmem [#allocation5], 10
    %1052 = vst.msk [vmem:[%s1051] sm:$0x3] %vm625, %v1049
    %s1053 = scalar_lea.vmem [#allocation2], 6
    %v1054 = vld [vmem:[%s1053] sm:$0x3]
    %v1055 = vsel %vm425, %v1043, 0
    %1057 = vmatprep.subr.mxu0 0.0
    %1058 = vmatpush1.msra.mxu0 %v88
    %1059 = vmatprep.subr.mxu0 0.0
    %1060 = vmatpush1.msra.mxu0 %v89
    %1061 = vmatprep.subr.mxu0 0.0
    %1062 = vmatpush1.msra.mxu0 0.0
    %1063 = vmatprep.subr.mxu0 0.0
    %1064 = vmatpush1.msra.mxu0 0.0
    %1065 = vmatprep.subr.mxu0 0.0
    %1066 = vmatpush1.msra.mxu0 0.0
    %1067 = vmatprep.subr.mxu0 0.0
    %1068 = vmatpush1.msra.mxu0 0.0
    %1069 = vmatprep.subr.mxu0 0.0
    %1070 = vmatpush1.msra.mxu0 0.0
    %1071 = vmatprep.subr.mxu0 0.0
    %1072 = vmatpush1.msra.mxu0 0.0
    %1073 = vmatprep.subr.mxu0 0.0
    %1074 = vmatpush1.msra.mxu0 0.0
    %1075 = vmatprep.subr.mxu0 0.0
    %1076 = vmatpush1.msra.mxu0 0.0
    %1077 = vmatprep.subr.mxu0 0.0
    %1078 = vmatpush1.msra.mxu0 0.0
    %1079 = vmatprep.subr.mxu0 0.0
    %1080 = vmatpush1.msra.mxu0 0.0
    %1081 = vmatprep.subr.mxu0 0.0
    %1082 = vmatpush1.msra.mxu0 0.0
    %1083 = vmatprep.subr.mxu0 0.0
    %1084 = vmatpush1.msra.mxu0 0.0
    %1085 = vmatprep.subr.mxu0 0.0
    %1086 = vmatpush1.msra.mxu0 0.0
    %1087 = vmatprep.subr.mxu0 0.0
    %1088 = vmatpush1.msra.mxu0 0.0
    %1089 = vmatprep.subr.mxu0 0.0
    %1090 = vmatpush1.msra.mxu0 0.0
    %1091 = vmatprep.subr.mxu0 0.0
    %1092 = vmatpush1.msra.mxu0 0.0
    %1093 = vmatprep.subr.mxu0 0.0
    %1094 = vmatpush1.msra.mxu0 0.0
    %1095 = vmatprep.subr.mxu0 0.0
    %1096 = vmatpush1.msra.mxu0 0.0
    %1097 = vmatprep.subr.mxu0 0.0
    %1098 = vmatpush1.msra.mxu0 0.0
    %1099 = vmatprep.subr.mxu0 0.0
    %1100 = vmatpush1.msra.mxu0 0.0
    %1101 = vmatprep.subr.mxu0 0.0
    %1102 = vmatpush1.msra.mxu0 0.0
    %1103 = vmatprep.subr.mxu0 0.0
    %1104 = vmatpush1.msra.mxu0 0.0
    %1105 = vmatprep.subr.mxu0 0.0
    %1106 = vmatpush1.msra.mxu0 0.0
    %1107 = vmatprep.subr.mxu0 0.0
    %1108 = vmatpush1.msra.mxu0 0.0
    %1109 = vmatprep.subr.mxu0 0.0
    %1110 = vmatpush1.msra.mxu0 0.0
    %1111 = vmatprep.subr.mxu0 0.0
    %1112 = vmatpush1.msra.mxu0 0.0
    %1113 = vmatprep.subr.mxu0 0.0
    %1114 = vmatpush1.msra.mxu0 0.0
    %1115 = vmatprep.subr.mxu0 0.0
    %1116 = vmatpush1.msra.mxu0 0.0
    %1117 = vmatprep.subr.mxu0 0.0
    %1118 = vmatpush1.msra.mxu0 0.0
    %1119 = vmatprep.subr.mxu0 0.0
    %1120 = vmatpush1.msra.mxu0 0.0
    %1121 = vmatprep.mubr.f32.mxu0 0.0
    %1122 = vmatmul.mubr.f32.gmra.mrb[0].mxu0 %v1055
    %v1123 = vpop.f32.mrb[0].mxu0
    %v1124 = vadd.f32 0.0, %v1123
    %v1125 = vpop.f32.mrb[0].mxu0
    %1126 = vdwg.mxu0
    %v1127 = vadd.f32 %v1054, %v1124
    %s1128 = scalar_lea.vmem [#allocation3], 8
    %v1129 = vld [vmem:[%s1128] sm:$0x3]
    %v1130 = vsel %vm425, %v1049, 0
    %1132 = vmatprep.subr.mxu0 0.0
    %1133 = vmatpush1.msra.mxu0 %v90
    %1134 = vmatprep.subr.mxu0 0.0
    %1135 = vmatpush1.msra.mxu0 %v91
    %1136 = vmatprep.subr.mxu0 0.0
    %1137 = vmatpush1.msra.mxu0 0.0
    %1138 = vmatprep.subr.mxu0 0.0
    %1139 = vmatpush1.msra.mxu0 0.0
    %1140 = vmatprep.subr.mxu0 0.0
    %1141 = vmatpush1.msra.mxu0 0.0
    %1142 = vmatprep.subr.mxu0 0.0
    %1143 = vmatpush1.msra.mxu0 0.0
    %1144 = vmatprep.subr.mxu0 0.0
    %1145 = vmatpush1.msra.mxu0 0.0
    %1146 = vmatprep.subr.mxu0 0.0
    %1147 = vmatpush1.msra.mxu0 0.0
    %1148 = vmatprep.subr.mxu0 0.0
    %1149 = vmatpush1.msra.mxu0 0.0
    %1150 = vmatprep.subr.mxu0 0.0
    %1151 = vmatpush1.msra.mxu0 0.0
    %1152 = vmatprep.subr.mxu0 0.0
    %1153 = vmatpush1.msra.mxu0 0.0
    %1154 = vmatprep.subr.mxu0 0.0
    %1155 = vmatpush1.msra.mxu0 0.0
    %1156 = vmatprep.subr.mxu0 0.0
    %1157 = vmatpush1.msra.mxu0 0.0
    %1158 = vmatprep.subr.mxu0 0.0
    %1159 = vmatpush1.msra.mxu0 0.0
    %1160 = vmatprep.subr.mxu0 0.0
    %1161 = vmatpush1.msra.mxu0 0.0
    %1162 = vmatprep.subr.mxu0 0.0
    %1163 = vmatpush1.msra.mxu0 0.0
    %1164 = vmatprep.subr.mxu0 0.0
    %1165 = vmatpush1.msra.mxu0 0.0
    %1166 = vmatprep.subr.mxu0 0.0
    %1167 = vmatpush1.msra.mxu0 0.0
    %1168 = vmatprep.subr.mxu0 0.0
    %1169 = vmatpush1.msra.mxu0 0.0
    %1170 = vmatprep.subr.mxu0 0.0
    %1171 = vmatpush1.msra.mxu0 0.0
    %1172 = vmatprep.subr.mxu0 0.0
    %1173 = vmatpush1.msra.mxu0 0.0
    %1174 = vmatprep.subr.mxu0 0.0
    %1175 = vmatpush1.msra.mxu0 0.0
    %1176 = vmatprep.subr.mxu0 0.0
    %1177 = vmatpush1.msra.mxu0 0.0
    %1178 = vmatprep.subr.mxu0 0.0
    %1179 = vmatpush1.msra.mxu0 0.0
    %1180 = vmatprep.subr.mxu0 0.0
    %1181 = vmatpush1.msra.mxu0 0.0
    %1182 = vmatprep.subr.mxu0 0.0
    %1183 = vmatpush1.msra.mxu0 0.0
    %1184 = vmatprep.subr.mxu0 0.0
    %1185 = vmatpush1.msra.mxu0 0.0
    %1186 = vmatprep.subr.mxu0 0.0
    %1187 = vmatpush1.msra.mxu0 0.0
    %1188 = vmatprep.subr.mxu0 0.0
    %1189 = vmatpush1.msra.mxu0 0.0
    %1190 = vmatprep.subr.mxu0 0.0
    %1191 = vmatpush1.msra.mxu0 0.0
    %1192 = vmatprep.subr.mxu0 0.0
    %1193 = vmatpush1.msra.mxu0 0.0
    %1194 = vmatprep.subr.mxu0 0.0
    %1195 = vmatpush1.msra.mxu0 0.0
    %1196 = vmatprep.mubr.f32.mxu0 0.0
    %1197 = vmatmul.mubr.f32.gmra.mrb[0].mxu0 %v1130
    %v1198 = vpop.f32.mrb[0].mxu0
    %v1199 = vadd.f32 0.0, %v1198
    %v1200 = vpop.f32.mrb[0].mxu0
    %1201 = vdwg.mxu0
    %v1202 = vadd.f32 %v1129, %v1199
    %v1203 = vxor.u32 %v1127, 2147483648
    %v1204 = vmul.f32 %v1203, 1.442695
    %v1205 = vpow.pop %v1204
    %v1206 = vadd.f32 %v1205, 1.0
    %v1207 = vrcp.pop %v1206
    %v1208 = vmul.f32 1.0, %v1207
    %v1209 = vtanh.pop %v1127
    %v1210 = vmul.f32 %v1208, %v1010
    %1212 = vrot.lane.b32.xlu0 %v1209, 96
    %v1213 = vpop.permute.xlu0 %1212
    %v1215 = vmul.f32 %v1208, %v1213
    %1217 = vrot.lane.b32.xlu0 %v1215, 16
    %v1218 = vpop.permute.xlu0 %1217
    %v1220 = vadd.f32 %v1210, %v1218
    %v1221 = vtanh.pop %v1220
    %1223 = vrot.lane.b32.xlu0 %v1221, 32
    %v1224 = vpop.permute.xlu0 %1223
    %v1226 = vmul.f32 %v1208, %v1224
    %v1227 = vxor.u32 %v1202, 2147483648
    %v1228 = vmul.f32 %v1227, 1.442695
    %v1229 = vpow.pop %v1228
    %v1230 = vadd.f32 %v1229, 1.0
    %v1231 = vrcp.pop %v1230
    %v1232 = vmul.f32 1.0, %v1231
    %v1233 = vtanh.pop %v1202
    %v1234 = vmul.f32 %v1232, %v1034
    %1236 = vrot.lane.b32.xlu0 %v1233, 96
    %v1237 = vpop.permute.xlu0 %1236
    %v1239 = vmul.f32 %v1232, %v1237
    %1241 = vrot.lane.b32.xlu0 %v1239, 16
    %v1242 = vpop.permute.xlu0 %1241
    %v1244 = vadd.f32 %v1234, %v1242
    %v1245 = vtanh.pop %v1244
    %1247 = vrot.lane.b32.xlu0 %v1245, 32
    %v1248 = vpop.permute.xlu0 %1247
    %v1250 = vmul.f32 %v1232, %v1248
    %1252 = vrot.lane.b32.xlu0 %v1226, 80
    %v1253 = vpop.permute.xlu0 %1252
    %s1255 = scalar_lea.vmem [#allocation4], 6
    %1256 = vst.msk [vmem:[%s1255] sm:$0x3] %vm625, %v1253
    %1258 = vrot.lane.b32.xlu0 %v1250, 80
    %v1259 = vpop.permute.xlu0 %1258
    %s1261 = scalar_lea.vmem [#allocation5], 8
    %1262 = vst.msk [vmem:[%s1261] sm:$0x3] %vm625, %v1259
    %s1263 = scalar_lea.vmem [#allocation2], 8
    %v1264 = vld [vmem:[%s1263] sm:$0x3]
    %v1265 = vsel %vm425, %v1253, 0
    %1267 = vmatprep.subr.mxu0 0.0
    %1268 = vmatpush1.msra.mxu0 %v88
    %1269 = vmatprep.subr.mxu0 0.0
    %1270 = vmatpush1.msra.mxu0 %v89
    %1271 = vmatprep.subr.mxu0 0.0
    %1272 = vmatpush1.msra.mxu0 0.0
    %1273 = vmatprep.subr.mxu0 0.0
    %1274 = vmatpush1.msra.mxu0 0.0
    %1275 = vmatprep.subr.mxu0 0.0
    %1276 = vmatpush1.msra.mxu0 0.0
    %1277 = vmatprep.subr.mxu0 0.0
    %1278 = vmatpush1.msra.mxu0 0.0
    %1279 = vmatprep.subr.mxu0 0.0
    %1280 = vmatpush1.msra.mxu0 0.0
    %1281 = vmatprep.subr.mxu0 0.0
    %1282 = vmatpush1.msra.mxu0 0.0
    %1283 = vmatprep.subr.mxu0 0.0
    %1284 = vmatpush1.msra.mxu0 0.0
    %1285 = vmatprep.subr.mxu0 0.0
    %1286 = vmatpush1.msra.mxu0 0.0
    %1287 = vmatprep.subr.mxu0 0.0
    %1288 = vmatpush1.msra.mxu0 0.0
    %1289 = vmatprep.subr.mxu0 0.0
    %1290 = vmatpush1.msra.mxu0 0.0
    %1291 = vmatprep.subr.mxu0 0.0
    %1292 = vmatpush1.msra.mxu0 0.0
    %1293 = vmatprep.subr.mxu0 0.0
    %1294 = vmatpush1.msra.mxu0 0.0
    %1295 = vmatprep.subr.mxu0 0.0
    %1296 = vmatpush1.msra.mxu0 0.0
    %1297 = vmatprep.subr.mxu0 0.0
    %1298 = vmatpush1.msra.mxu0 0.0
    %1299 = vmatprep.subr.mxu0 0.0
    %1300 = vmatpush1.msra.mxu0 0.0
    %1301 = vmatprep.subr.mxu0 0.0
    %1302 = vmatpush1.msra.mxu0 0.0
    %1303 = vmatprep.subr.mxu0 0.0
    %1304 = vmatpush1.msra.mxu0 0.0
    %1305 = vmatprep.subr.mxu0 0.0
    %1306 = vmatpush1.msra.mxu0 0.0
    %1307 = vmatprep.subr.mxu0 0.0
    %1308 = vmatpush1.msra.mxu0 0.0
    %1309 = vmatprep.subr.mxu0 0.0
    %1310 = vmatpush1.msra.mxu0 0.0
    %1311 = vmatprep.subr.mxu0 0.0
    %1312 = vmatpush1.msra.mxu0 0.0
    %1313 = vmatprep.subr.mxu0 0.0
    %1314 = vmatpush1.msra.mxu0 0.0
    %1315 = vmatprep.subr.mxu0 0.0
    %1316 = vmatpush1.msra.mxu0 0.0
    %1317 = vmatprep.subr.mxu0 0.0
    %1318 = vmatpush1.msra.mxu0 0.0
    %1319 = vmatprep.subr.mxu0 0.0
    %1320 = vmatpush1.msra.mxu0 0.0
    %1321 = vmatprep.subr.mxu0 0.0
    %1322 = vmatpush1.msra.mxu0 0.0
    %1323 = vmatprep.subr.mxu0 0.0
    %1324 = vmatpush1.msra.mxu0 0.0
    %1325 = vmatprep.subr.mxu0 0.0
    %1326 = vmatpush1.msra.mxu0 0.0
    %1327 = vmatprep.subr.mxu0 0.0
    %1328 = vmatpush1.msra.mxu0 0.0
    %1329 = vmatprep.subr.mxu0 0.0
    %1330 = vmatpush1.msra.mxu0 0.0
    %1331 = vmatprep.mubr.f32.mxu0 0.0
    %1332 = vmatmul.mubr.f32.gmra.mrb[0].mxu0 %v1265
    %v1333 = vpop.f32.mrb[0].mxu0
    %v1334 = vadd.f32 0.0, %v1333
    %v1335 = vpop.f32.mrb[0].mxu0
    %1336 = vdwg.mxu0
    %v1337 = vadd.f32 %v1264, %v1334
    %s1338 = scalar_lea.vmem [#allocation3], 6
    %v1339 = vld [vmem:[%s1338] sm:$0x3]
    %v1340 = vsel %vm425, %v1259, 0
    %1342 = vmatprep.subr.mxu0 0.0
    %1343 = vmatpush1.msra.mxu0 %v90
    %1344 = vmatprep.subr.mxu0 0.0
    %1345 = vmatpush1.msra.mxu0 %v91
    %1346 = vmatprep.subr.mxu0 0.0
    %1347 = vmatpush1.msra.mxu0 0.0
    %1348 = vmatprep.subr.mxu0 0.0
    %1349 = vmatpush1.msra.mxu0 0.0
    %1350 = vmatprep.subr.mxu0 0.0
    %1351 = vmatpush1.msra.mxu0 0.0
    %1352 = vmatprep.subr.mxu0 0.0
    %1353 = vmatpush1.msra.mxu0 0.0
    %1354 = vmatprep.subr.mxu0 0.0
    %1355 = vmatpush1.msra.mxu0 0.0
    %1356 = vmatprep.subr.mxu0 0.0
    %1357 = vmatpush1.msra.mxu0 0.0
    %1358 = vmatprep.subr.mxu0 0.0
    %1359 = vmatpush1.msra.mxu0 0.0
    %1360 = vmatprep.subr.mxu0 0.0
    %1361 = vmatpush1.msra.mxu0 0.0
    %1362 = vmatprep.subr.mxu0 0.0
    %1363 = vmatpush1.msra.mxu0 0.0
    %1364 = vmatprep.subr.mxu0 0.0
    %1365 = vmatpush1.msra.mxu0 0.0
    %1366 = vmatprep.subr.mxu0 0.0
    %1367 = vmatpush1.msra.mxu0 0.0
    %1368 = vmatprep.subr.mxu0 0.0
    %1369 = vmatpush1.msra.mxu0 0.0
    %1370 = vmatprep.subr.mxu0 0.0
    %1371 = vmatpush1.msra.mxu0 0.0
    %1372 = vmatprep.subr.mxu0 0.0
    %1373 = vmatpush1.msra.mxu0 0.0
    %1374 = vmatprep.subr.mxu0 0.0
    %1375 = vmatpush1.msra.mxu0 0.0
    %1376 = vmatprep.subr.mxu0 0.0
    %1377 = vmatpush1.msra.mxu0 0.0
    %1378 = vmatprep.subr.mxu0 0.0
    %1379 = vmatpush1.msra.mxu0 0.0
    %1380 = vmatprep.subr.mxu0 0.0
    %1381 = vmatpush1.msra.mxu0 0.0
    %1382 = vmatprep.subr.mxu0 0.0
    %1383 = vmatpush1.msra.mxu0 0.0
    %1384 = vmatprep.subr.mxu0 0.0
    %1385 = vmatpush1.msra.mxu0 0.0
    %1386 = vmatprep.subr.mxu0 0.0
    %1387 = vmatpush1.msra.mxu0 0.0
    %1388 = vmatprep.subr.mxu0 0.0
    %1389 = vmatpush1.msra.mxu0 0.0
    %1390 = vmatprep.subr.mxu0 0.0
    %1391 = vmatpush1.msra.mxu0 0.0
    %1392 = vmatprep.subr.mxu0 0.0
    %1393 = vmatpush1.msra.mxu0 0.0
    %1394 = vmatprep.subr.mxu0 0.0
    %1395 = vmatpush1.msra.mxu0 0.0
    %1396 = vmatprep.subr.mxu0 0.0
    %1397 = vmatpush1.msra.mxu0 0.0
    %1398 = vmatprep.subr.mxu0 0.0
    %1399 = vmatpush1.msra.mxu0 0.0
    %1400 = vmatprep.subr.mxu0 0.0
    %1401 = vmatpush1.msra.mxu0 0.0
    %1402 = vmatprep.subr.mxu0 0.0
    %1403 = vmatpush1.msra.mxu0 0.0
    %1404 = vmatprep.subr.mxu0 0.0
    %1405 = vmatpush1.msra.mxu0 0.0
    %1406 = vmatprep.mubr.f32.mxu0 0.0
    %1407 = vmatmul.mubr.f32.gmra.mrb[0].mxu0 %v1340
    %v1408 = vpop.f32.mrb[0].mxu0
    %v1409 = vadd.f32 0.0, %v1408
    %v1410 = vpop.f32.mrb[0].mxu0
    %1411 = vdwg.mxu0
    %v1412 = vadd.f32 %v1339, %v1409
    %v1413 = vxor.u32 %v1337, 2147483648
    %v1414 = vmul.f32 %v1413, 1.442695
    %v1415 = vpow.pop %v1414
    %v1416 = vadd.f32 %v1415, 1.0
    %v1417 = vrcp.pop %v1416
    %v1418 = vmul.f32 1.0, %v1417
    %v1419 = vtanh.pop %v1337
    %v1420 = vmul.f32 %v1418, %v1220
    %1422 = vrot.lane.b32.xlu0 %v1419, 96
    %v1423 = vpop.permute.xlu0 %1422
    %v1425 = vmul.f32 %v1418, %v1423
    %1427 = vrot.lane.b32.xlu0 %v1425, 16
    %v1428 = vpop.permute.xlu0 %1427
    %v1430 = vadd.f32 %v1420, %v1428
    %v1431 = vtanh.pop %v1430
    %1433 = vrot.lane.b32.xlu0 %v1431, 32
    %v1434 = vpop.permute.xlu0 %1433
    %v1436 = vmul.f32 %v1418, %v1434
    %v1437 = vxor.u32 %v1412, 2147483648
    %v1438 = vmul.f32 %v1437, 1.442695
    %v1439 = vpow.pop %v1438
    %v1440 = vadd.f32 %v1439, 1.0
    %v1441 = vrcp.pop %v1440
    %v1442 = vmul.f32 1.0, %v1441
    %v1443 = vtanh.pop %v1412
    %v1444 = vmul.f32 %v1442, %v1244
    %1446 = vrot.lane.b32.xlu0 %v1443, 96
    %v1447 = vpop.permute.xlu0 %1446
    %v1449 = vmul.f32 %v1442, %v1447
    %1451 = vrot.lane.b32.xlu0 %v1449, 16
    %v1452 = vpop.permute.xlu0 %1451
    %v1454 = vadd.f32 %v1444, %v1452
    %v1455 = vtanh.pop %v1454
    %1457 = vrot.lane.b32.xlu0 %v1455, 32
    %v1458 = vpop.permute.xlu0 %1457
    %v1460 = vmul.f32 %v1442, %v1458
    %1462 = vrot.lane.b32.xlu0 %v1436, 80
    %v1463 = vpop.permute.xlu0 %1462
    %s1465 = scalar_lea.vmem [#allocation4], 8
    %1466 = vst.msk [vmem:[%s1465] sm:$0x3] %vm625, %v1463
    %1468 = vrot.lane.b32.xlu0 %v1460, 80
    %v1469 = vpop.permute.xlu0 %1468
    %s1471 = scalar_lea.vmem [#allocation5], 6
    %1472 = vst.msk [vmem:[%s1471] sm:$0x3] %vm625, %v1469
    %s1473 = scalar_lea.vmem [#allocation2], 10
    %v1474 = vld [vmem:[%s1473] sm:$0x3]
    %v1475 = vsel %vm425, %v1463, 0
    %1477 = vmatprep.subr.mxu0 0.0
    %1478 = vmatpush1.msra.mxu0 %v88
    %1479 = vmatprep.subr.mxu0 0.0
    %1480 = vmatpush1.msra.mxu0 %v89
    %1481 = vmatprep.subr.mxu0 0.0
    %1482 = vmatpush1.msra.mxu0 0.0
    %1483 = vmatprep.subr.mxu0 0.0
    %1484 = vmatpush1.msra.mxu0 0.0
    %1485 = vmatprep.subr.mxu0 0.0
    %1486 = vmatpush1.msra.mxu0 0.0
    %1487 = vmatprep.subr.mxu0 0.0
    %1488 = vmatpush1.msra.mxu0 0.0
    %1489 = vmatprep.subr.mxu0 0.0
    %1490 = vmatpush1.msra.mxu0 0.0
    %1491 = vmatprep.subr.mxu0 0.0
    %1492 = vmatpush1.msra.mxu0 0.0
    %1493 = vmatprep.subr.mxu0 0.0
    %1494 = vmatpush1.msra.mxu0 0.0
    %1495 = vmatprep.subr.mxu0 0.0
    %1496 = vmatpush1.msra.mxu0 0.0
    %1497 = vmatprep.subr.mxu0 0.0
    %1498 = vmatpush1.msra.mxu0 0.0
    %1499 = vmatprep.subr.mxu0 0.0
    %1500 = vmatpush1.msra.mxu0 0.0
    %1501 = vmatprep.subr.mxu0 0.0
    %1502 = vmatpush1.msra.mxu0 0.0
    %1503 = vmatprep.subr.mxu0 0.0
    %1504 = vmatpush1.msra.mxu0 0.0
    %1505 = vmatprep.subr.mxu0 0.0
    %1506 = vmatpush1.msra.mxu0 0.0
    %1507 = vmatprep.subr.mxu0 0.0
    %1508 = vmatpush1.msra.mxu0 0.0
    %1509 = vmatprep.subr.mxu0 0.0
    %1510 = vmatpush1.msra.mxu0 0.0
    %1511 = vmatprep.subr.mxu0 0.0
    %1512 = vmatpush1.msra.mxu0 0.0
    %1513 = vmatprep.subr.mxu0 0.0
    %1514 = vmatpush1.msra.mxu0 0.0
    %1515 = vmatprep.subr.mxu0 0.0
    %1516 = vmatpush1.msra.mxu0 0.0
    %1517 = vmatprep.subr.mxu0 0.0
    %1518 = vmatpush1.msra.mxu0 0.0
    %1519 = vmatprep.subr.mxu0 0.0
    %1520 = vmatpush1.msra.mxu0 0.0
    %1521 = vmatprep.subr.mxu0 0.0
    %1522 = vmatpush1.msra.mxu0 0.0
    %1523 = vmatprep.subr.mxu0 0.0
    %1524 = vmatpush1.msra.mxu0 0.0
    %1525 = vmatprep.subr.mxu0 0.0
    %1526 = vmatpush1.msra.mxu0 0.0
    %1527 = vmatprep.subr.mxu0 0.0
    %1528 = vmatpush1.msra.mxu0 0.0
    %1529 = vmatprep.subr.mxu0 0.0
    %1530 = vmatpush1.msra.mxu0 0.0
    %1531 = vmatprep.subr.mxu0 0.0
    %1532 = vmatpush1.msra.mxu0 0.0
    %1533 = vmatprep.subr.mxu0 0.0
    %1534 = vmatpush1.msra.mxu0 0.0
    %1535 = vmatprep.subr.mxu0 0.0
    %1536 = vmatpush1.msra.mxu0 0.0
    %1537 = vmatprep.subr.mxu0 0.0
    %1538 = vmatpush1.msra.mxu0 0.0
    %1539 = vmatprep.subr.mxu0 0.0
    %1540 = vmatpush1.msra.mxu0 0.0
    %1541 = vmatprep.mubr.f32.mxu0 0.0
    %1542 = vmatmul.mubr.f32.gmra.mrb[0].mxu0 %v1475
    %v1543 = vpop.f32.mrb[0].mxu0
    %v1544 = vadd.f32 0.0, %v1543
    %v1545 = vpop.f32.mrb[0].mxu0
    %1546 = vdwg.mxu0
    %v1547 = vadd.f32 %v1474, %v1544
    %s1548 = scalar_lea.vmem [#allocation3], 4
    %v1549 = vld [vmem:[%s1548] sm:$0x3]
    %v1550 = vsel %vm425, %v1469, 0
    %1552 = vmatprep.subr.mxu0 0.0
    %1553 = vmatpush1.msra.mxu0 %v90
    %1554 = vmatprep.subr.mxu0 0.0
    %1555 = vmatpush1.msra.mxu0 %v91
    %1556 = vmatprep.subr.mxu0 0.0
    %1557 = vmatpush1.msra.mxu0 0.0
    %1558 = vmatprep.subr.mxu0 0.0
    %1559 = vmatpush1.msra.mxu0 0.0
    %1560 = vmatprep.subr.mxu0 0.0
    %1561 = vmatpush1.msra.mxu0 0.0
    %1562 = vmatprep.subr.mxu0 0.0
    %1563 = vmatpush1.msra.mxu0 0.0
    %1564 = vmatprep.subr.mxu0 0.0
    %1565 = vmatpush1.msra.mxu0 0.0
    %1566 = vmatprep.subr.mxu0 0.0
    %1567 = vmatpush1.msra.mxu0 0.0
    %1568 = vmatprep.subr.mxu0 0.0
    %1569 = vmatpush1.msra.mxu0 0.0
    %1570 = vmatprep.subr.mxu0 0.0
    %1571 = vmatpush1.msra.mxu0 0.0
    %1572 = vmatprep.subr.mxu0 0.0
    %1573 = vmatpush1.msra.mxu0 0.0
    %1574 = vmatprep.subr.mxu0 0.0
    %1575 = vmatpush1.msra.mxu0 0.0
    %1576 = vmatprep.subr.mxu0 0.0
    %1577 = vmatpush1.msra.mxu0 0.0
    %1578 = vmatprep.subr.mxu0 0.0
    %1579 = vmatpush1.msra.mxu0 0.0
    %1580 = vmatprep.subr.mxu0 0.0
    %1581 = vmatpush1.msra.mxu0 0.0
    %1582 = vmatprep.subr.mxu0 0.0
    %1583 = vmatpush1.msra.mxu0 0.0
    %1584 = vmatprep.subr.mxu0 0.0
    %1585 = vmatpush1.msra.mxu0 0.0
    %1586 = vmatprep.subr.mxu0 0.0
    %1587 = vmatpush1.msra.mxu0 0.0
    %1588 = vmatprep.subr.mxu0 0.0
    %1589 = vmatpush1.msra.mxu0 0.0
    %1590 = vmatprep.subr.mxu0 0.0
    %1591 = vmatpush1.msra.mxu0 0.0
    %1592 = vmatprep.subr.mxu0 0.0
    %1593 = vmatpush1.msra.mxu0 0.0
    %1594 = vmatprep.subr.mxu0 0.0
    %1595 = vmatpush1.msra.mxu0 0.0
    %1596 = vmatprep.subr.mxu0 0.0
    %1597 = vmatpush1.msra.mxu0 0.0
    %1598 = vmatprep.subr.mxu0 0.0
    %1599 = vmatpush1.msra.mxu0 0.0
    %1600 = vmatprep.subr.mxu0 0.0
    %1601 = vmatpush1.msra.mxu0 0.0
    %1602 = vmatprep.subr.mxu0 0.0
    %1603 = vmatpush1.msra.mxu0 0.0
    %1604 = vmatprep.subr.mxu0 0.0
    %1605 = vmatpush1.msra.mxu0 0.0
    %1606 = vmatprep.subr.mxu0 0.0
    %1607 = vmatpush1.msra.mxu0 0.0
    %1608 = vmatprep.subr.mxu0 0.0
    %1609 = vmatpush1.msra.mxu0 0.0
    %1610 = vmatprep.subr.mxu0 0.0
    %1611 = vmatpush1.msra.mxu0 0.0
    %1612 = vmatprep.subr.mxu0 0.0
    %1613 = vmatpush1.msra.mxu0 0.0
    %1614 = vmatprep.subr.mxu0 0.0
    %1615 = vmatpush1.msra.mxu0 0.0
    %1616 = vmatprep.mubr.f32.mxu0 0.0
    %1617 = vmatmul.mubr.f32.gmra.mrb[0].mxu0 %v1550
    %v1618 = vpop.f32.mrb[0].mxu0
    %v1619 = vadd.f32 0.0, %v1618
    %v1620 = vpop.f32.mrb[0].mxu0
    %1621 = vdwg.mxu0
    %v1622 = vadd.f32 %v1549, %v1619
    %v1623 = vxor.u32 %v1547, 2147483648
    %v1624 = vmul.f32 %v1623, 1.442695
    %v1625 = vpow.pop %v1624
    %v1626 = vadd.f32 %v1625, 1.0
    %v1627 = vrcp.pop %v1626
    %v1628 = vmul.f32 1.0, %v1627
    %v1629 = vtanh.pop %v1547
    %v1630 = vmul.f32 %v1628, %v1430
    %1632 = vrot.lane.b32.xlu0 %v1629, 96
    %v1633 = vpop.permute.xlu0 %1632
    %v1635 = vmul.f32 %v1628, %v1633
    %1637 = vrot.lane.b32.xlu0 %v1635, 16
    %v1638 = vpop.permute.xlu0 %1637
    %v1640 = vadd.f32 %v1630, %v1638
    %v1641 = vtanh.pop %v1640
    %1643 = vrot.lane.b32.xlu0 %v1641, 32
    %v1644 = vpop.permute.xlu0 %1643
    %v1646 = vmul.f32 %v1628, %v1644
    %v1647 = vxor.u32 %v1622, 2147483648
    %v1648 = vmul.f32 %v1647, 1.442695
    %v1649 = vpow.pop %v1648
    %v1650 = vadd.f32 %v1649, 1.0
    %v1651 = vrcp.pop %v1650
    %v1652 = vmul.f32 1.0, %v1651
    %v1653 = vtanh.pop %v1622
    %v1654 = vmul.f32 %v1652, %v1454
    %1656 = vrot.lane.b32.xlu0 %v1653, 96
    %v1657 = vpop.permute.xlu0 %1656
    %v1659 = vmul.f32 %v1652, %v1657
    %1661 = vrot.lane.b32.xlu0 %v1659, 16
    %v1662 = vpop.permute.xlu0 %1661
    %v1664 = vadd.f32 %v1654, %v1662
    %v1665 = vtanh.pop %v1664
    %1667 = vrot.lane.b32.xlu0 %v1665, 32
    %v1668 = vpop.permute.xlu0 %1667
    %v1670 = vmul.f32 %v1652, %v1668
    %1672 = vrot.lane.b32.xlu0 %v1646, 80
    %v1673 = vpop.permute.xlu0 %1672
    %s1675 = scalar_lea.vmem [#allocation4], 10
    %1676 = vst.msk [vmem:[%s1675] sm:$0x3] %vm625, %v1673
    %1678 = vrot.lane.b32.xlu0 %v1670, 80
    %v1679 = vpop.permute.xlu0 %1678
    %s1681 = scalar_lea.vmem [#allocation5], 4
    %1682 = vst.msk [vmem:[%s1681] sm:$0x3] %vm625, %v1679
    %s1683 = scalar_lea.vmem [#allocation2], 12
    %v1684 = vld [vmem:[%s1683] sm:$0x3]
    %v1685 = vsel %vm425, %v1673, 0
    %1687 = vmatprep.subr.mxu0 0.0
    %1688 = vmatpush1.msra.mxu0 %v88
    %1689 = vmatprep.subr.mxu0 0.0
    %1690 = vmatpush1.msra.mxu0 %v89
    %1691 = vmatprep.subr.mxu0 0.0
    %1692 = vmatpush1.msra.mxu0 0.0
    %1693 = vmatprep.subr.mxu0 0.0
    %1694 = vmatpush1.msra.mxu0 0.0
    %1695 = vmatprep.subr.mxu0 0.0
    %1696 = vmatpush1.msra.mxu0 0.0
    %1697 = vmatprep.subr.mxu0 0.0
    %1698 = vmatpush1.msra.mxu0 0.0
    %1699 = vmatprep.subr.mxu0 0.0
    %1700 = vmatpush1.msra.mxu0 0.0
    %1701 = vmatprep.subr.mxu0 0.0
    %1702 = vmatpush1.msra.mxu0 0.0
    %1703 = vmatprep.subr.mxu0 0.0
    %1704 = vmatpush1.msra.mxu0 0.0
    %1705 = vmatprep.subr.mxu0 0.0
    %1706 = vmatpush1.msra.mxu0 0.0
    %1707 = vmatprep.subr.mxu0 0.0
    %1708 = vmatpush1.msra.mxu0 0.0
    %1709 = vmatprep.subr.mxu0 0.0
    %1710 = vmatpush1.msra.mxu0 0.0
    %1711 = vmatprep.subr.mxu0 0.0
    %1712 = vmatpush1.msra.mxu0 0.0
    %1713 = vmatprep.subr.mxu0 0.0
    %1714 = vmatpush1.msra.mxu0 0.0
    %1715 = vmatprep.subr.mxu0 0.0
    %1716 = vmatpush1.msra.mxu0 0.0
    %1717 = vmatprep.subr.mxu0 0.0
    %1718 = vmatpush1.msra.mxu0 0.0
    %1719 = vmatprep.subr.mxu0 0.0
    %1720 = vmatpush1.msra.mxu0 0.0
    %1721 = vmatprep.subr.mxu0 0.0
    %1722 = vmatpush1.msra.mxu0 0.0
    %1723 = vmatprep.subr.mxu0 0.0
    %1724 = vmatpush1.msra.mxu0 0.0
    %1725 = vmatprep.subr.mxu0 0.0
    %1726 = vmatpush1.msra.mxu0 0.0
    %1727 = vmatprep.subr.mxu0 0.0
    %1728 = vmatpush1.msra.mxu0 0.0
    %1729 = vmatprep.subr.mxu0 0.0
    %1730 = vmatpush1.msra.mxu0 0.0
    %1731 = vmatprep.subr.mxu0 0.0
    %1732 = vmatpush1.msra.mxu0 0.0
    %1733 = vmatprep.subr.mxu0 0.0
    %1734 = vmatpush1.msra.mxu0 0.0
    %1735 = vmatprep.subr.mxu0 0.0
    %1736 = vmatpush1.msra.mxu0 0.0
    %1737 = vmatprep.subr.mxu0 0.0
    %1738 = vmatpush1.msra.mxu0 0.0
    %1739 = vmatprep.subr.mxu0 0.0
    %1740 = vmatpush1.msra.mxu0 0.0
    %1741 = vmatprep.subr.mxu0 0.0
    %1742 = vmatpush1.msra.mxu0 0.0
    %1743 = vmatprep.subr.mxu0 0.0
    %1744 = vmatpush1.msra.mxu0 0.0
    %1745 = vmatprep.subr.mxu0 0.0
    %1746 = vmatpush1.msra.mxu0 0.0
    %1747 = vmatprep.subr.mxu0 0.0
    %1748 = vmatpush1.msra.mxu0 0.0
    %1749 = vmatprep.subr.mxu0 0.0
    %1750 = vmatpush1.msra.mxu0 0.0
    %1751 = vmatprep.mubr.f32.mxu0 0.0
    %1752 = vmatmul.mubr.f32.gmra.mrb[0].mxu0 %v1685
    %v1753 = vpop.f32.mrb[0].mxu0
    %v1754 = vadd.f32 0.0, %v1753
    %v1755 = vpop.f32.mrb[0].mxu0
    %1756 = vdwg.mxu0
    %v1757 = vadd.f32 %v1684, %v1754
    %s1758 = scalar_lea.vmem [#allocation3], 2
    %v1759 = vld [vmem:[%s1758] sm:$0x3]
    %v1760 = vsel %vm425, %v1679, 0
    %1762 = vmatprep.subr.mxu0 0.0
    %1763 = vmatpush1.msra.mxu0 %v90
    %1764 = vmatprep.subr.mxu0 0.0
    %1765 = vmatpush1.msra.mxu0 %v91
    %1766 = vmatprep.subr.mxu0 0.0
    %1767 = vmatpush1.msra.mxu0 0.0
    %1768 = vmatprep.subr.mxu0 0.0
    %1769 = vmatpush1.msra.mxu0 0.0
    %1770 = vmatprep.subr.mxu0 0.0
    %1771 = vmatpush1.msra.mxu0 0.0
    %1772 = vmatprep.subr.mxu0 0.0
    %1773 = vmatpush1.msra.mxu0 0.0
    %1774 = vmatprep.subr.mxu0 0.0
    %1775 = vmatpush1.msra.mxu0 0.0
    %1776 = vmatprep.subr.mxu0 0.0
    %1777 = vmatpush1.msra.mxu0 0.0
    %1778 = vmatprep.subr.mxu0 0.0
    %1779 = vmatpush1.msra.mxu0 0.0
    %1780 = vmatprep.subr.mxu0 0.0
    %1781 = vmatpush1.msra.mxu0 0.0
    %1782 = vmatprep.subr.mxu0 0.0
    %1783 = vmatpush1.msra.mxu0 0.0
    %1784 = vmatprep.subr.mxu0 0.0
    %1785 = vmatpush1.msra.mxu0 0.0
    %1786 = vmatprep.subr.mxu0 0.0
    %1787 = vmatpush1.msra.mxu0 0.0
    %1788 = vmatprep.subr.mxu0 0.0
    %1789 = vmatpush1.msra.mxu0 0.0
    %1790 = vmatprep.subr.mxu0 0.0
    %1791 = vmatpush1.msra.mxu0 0.0
    %1792 = vmatprep.subr.mxu0 0.0
    %1793 = vmatpush1.msra.mxu0 0.0
    %1794 = vmatprep.subr.mxu0 0.0
    %1795 = vmatpush1.msra.mxu0 0.0
    %1796 = vmatprep.subr.mxu0 0.0
    %1797 = vmatpush1.msra.mxu0 0.0
    %1798 = vmatprep.subr.mxu0 0.0
    %1799 = vmatpush1.msra.mxu0 0.0
    %1800 = vmatprep.subr.mxu0 0.0
    %1801 = vmatpush1.msra.mxu0 0.0
    %1802 = vmatprep.subr.mxu0 0.0
    %1803 = vmatpush1.msra.mxu0 0.0
    %1804 = vmatprep.subr.mxu0 0.0
    %1805 = vmatpush1.msra.mxu0 0.0
    %1806 = vmatprep.subr.mxu0 0.0
    %1807 = vmatpush1.msra.mxu0 0.0
    %1808 = vmatprep.subr.mxu0 0.0
    %1809 = vmatpush1.msra.mxu0 0.0
    %1810 = vmatprep.subr.mxu0 0.0
    %1811 = vmatpush1.msra.mxu0 0.0
    %1812 = vmatprep.subr.mxu0 0.0
    %1813 = vmatpush1.msra.mxu0 0.0
    %1814 = vmatprep.subr.mxu0 0.0
    %1815 = vmatpush1.msra.mxu0 0.0
    %1816 = vmatprep.subr.mxu0 0.0
    %1817 = vmatpush1.msra.mxu0 0.0
    %1818 = vmatprep.subr.mxu0 0.0
    %1819 = vmatpush1.msra.mxu0 0.0
    %1820 = vmatprep.subr.mxu0 0.0
    %1821 = vmatpush1.msra.mxu0 0.0
    %1822 = vmatprep.subr.mxu0 0.0
    %1823 = vmatpush1.msra.mxu0 0.0
    %1824 = vmatprep.subr.mxu0 0.0
    %1825 = vmatpush1.msra.mxu0 0.0
    %1826 = vmatprep.mubr.f32.mxu0 0.0
    %1827 = vmatmul.mubr.f32.gmra.mrb[0].mxu0 %v1760
    %v1828 = vpop.f32.mrb[0].mxu0
    %v1829 = vadd.f32 0.0, %v1828
    %v1830 = vpop.f32.mrb[0].mxu0
    %1831 = vdwg.mxu0
    %v1832 = vadd.f32 %v1759, %v1829
    %v1833 = vxor.u32 %v1757, 2147483648
    %v1834 = vmul.f32 %v1833, 1.442695
    %v1835 = vpow.pop %v1834
    %v1836 = vadd.f32 %v1835, 1.0
    %v1837 = vrcp.pop %v1836
    %v1838 = vmul.f32 1.0, %v1837
    %v1839 = vtanh.pop %v1757
    %v1840 = vmul.f32 %v1838, %v1640
    %1842 = vrot.lane.b32.xlu0 %v1839, 96
    %v1843 = vpop.permute.xlu0 %1842
    %v1845 = vmul.f32 %v1838, %v1843
    %1847 = vrot.lane.b32.xlu0 %v1845, 16
    %v1848 = vpop.permute.xlu0 %1847
    %v1850 = vadd.f32 %v1840, %v1848
    %v1851 = vtanh.pop %v1850
    %1853 = vrot.lane.b32.xlu0 %v1851, 32
    %v1854 = vpop.permute.xlu0 %1853
    %v1856 = vmul.f32 %v1838, %v1854
    %v1857 = vxor.u32 %v1832, 2147483648
    %v1858 = vmul.f32 %v1857, 1.442695
    %v1859 = vpow.pop %v1858
    %v1860 = vadd.f32 %v1859, 1.0
    %v1861 = vrcp.pop %v1860
    %v1862 = vmul.f32 1.0, %v1861
    %v1863 = vtanh.pop %v1832
    %v1864 = vmul.f32 %v1862, %v1664
    %1866 = vrot.lane.b32.xlu0 %v1863, 96
    %v1867 = vpop.permute.xlu0 %1866
    %v1869 = vmul.f32 %v1862, %v1867
    %1871 = vrot.lane.b32.xlu0 %v1869, 16
    %v1872 = vpop.permute.xlu0 %1871
    %v1874 = vadd.f32 %v1864, %v1872
    %v1875 = vtanh.pop %v1874
    %1877 = vrot.lane.b32.xlu0 %v1875, 32
    %v1878 = vpop.permute.xlu0 %1877
    %v1880 = vmul.f32 %v1862, %v1878
    %1882 = vrot.lane.b32.xlu0 %v1856, 80
    %v1883 = vpop.permute.xlu0 %1882
    %s1885 = scalar_lea.vmem [#allocation4], 12
    %1886 = vst.msk [vmem:[%s1885] sm:$0x3] %vm625, %v1883
    %1888 = vrot.lane.b32.xlu0 %v1880, 80
    %v1889 = vpop.permute.xlu0 %1888
    %s1891 = scalar_lea.vmem [#allocation5], 2
    %1892 = vst.msk [vmem:[%s1891] sm:$0x3] %vm625, %v1889
    %s1893 = scalar_lea.vmem [#allocation2], 14
    %v1894 = vld [vmem:[%s1893] sm:$0x3]
    %v1895 = vsel %vm425, %v1883, 0
    %1897 = vmatprep.subr.mxu0 0.0
    %1898 = vmatpush1.msra.mxu0 %v88
    %1899 = vmatprep.subr.mxu0 0.0
    %1900 = vmatpush1.msra.mxu0 %v89
    %1901 = vmatprep.subr.mxu0 0.0
    %1902 = vmatpush1.msra.mxu0 0.0
    %1903 = vmatprep.subr.mxu0 0.0
    %1904 = vmatpush1.msra.mxu0 0.0
    %1905 = vmatprep.subr.mxu0 0.0
    %1906 = vmatpush1.msra.mxu0 0.0
    %1907 = vmatprep.subr.mxu0 0.0
    %1908 = vmatpush1.msra.mxu0 0.0
    %1909 = vmatprep.subr.mxu0 0.0
    %1910 = vmatpush1.msra.mxu0 0.0
    %1911 = vmatprep.subr.mxu0 0.0
    %1912 = vmatpush1.msra.mxu0 0.0
    %1913 = vmatprep.subr.mxu0 0.0
    %1914 = vmatpush1.msra.mxu0 0.0
    %1915 = vmatprep.subr.mxu0 0.0
    %1916 = vmatpush1.msra.mxu0 0.0
    %1917 = vmatprep.subr.mxu0 0.0
    %1918 = vmatpush1.msra.mxu0 0.0
    %1919 = vmatprep.subr.mxu0 0.0
    %1920 = vmatpush1.msra.mxu0 0.0
    %1921 = vmatprep.subr.mxu0 0.0
    %1922 = vmatpush1.msra.mxu0 0.0
    %1923 = vmatprep.subr.mxu0 0.0
    %1924 = vmatpush1.msra.mxu0 0.0
    %1925 = vmatprep.subr.mxu0 0.0
    %1926 = vmatpush1.msra.mxu0 0.0
    %1927 = vmatprep.subr.mxu0 0.0
    %1928 = vmatpush1.msra.mxu0 0.0
    %1929 = vmatprep.subr.mxu0 0.0
    %1930 = vmatpush1.msra.mxu0 0.0
    %1931 = vmatprep.subr.mxu0 0.0
    %1932 = vmatpush1.msra.mxu0 0.0
    %1933 = vmatprep.subr.mxu0 0.0
    %1934 = vmatpush1.msra.mxu0 0.0
    %1935 = vmatprep.subr.mxu0 0.0
    %1936 = vmatpush1.msra.mxu0 0.0
    %1937 = vmatprep.subr.mxu0 0.0
    %1938 = vmatpush1.msra.mxu0 0.0
    %1939 = vmatprep.subr.mxu0 0.0
    %1940 = vmatpush1.msra.mxu0 0.0
    %1941 = vmatprep.subr.mxu0 0.0
    %1942 = vmatpush1.msra.mxu0 0.0
    %1943 = vmatprep.subr.mxu0 0.0
    %1944 = vmatpush1.msra.mxu0 0.0
    %1945 = vmatprep.subr.mxu0 0.0
    %1946 = vmatpush1.msra.mxu0 0.0
    %1947 = vmatprep.subr.mxu0 0.0
    %1948 = vmatpush1.msra.mxu0 0.0
    %1949 = vmatprep.subr.mxu0 0.0
    %1950 = vmatpush1.msra.mxu0 0.0
    %1951 = vmatprep.subr.mxu0 0.0
    %1952 = vmatpush1.msra.mxu0 0.0
    %1953 = vmatprep.subr.mxu0 0.0
    %1954 = vmatpush1.msra.mxu0 0.0
    %1955 = vmatprep.subr.mxu0 0.0
    %1956 = vmatpush1.msra.mxu0 0.0
    %1957 = vmatprep.subr.mxu0 0.0
    %1958 = vmatpush1.msra.mxu0 0.0
    %1959 = vmatprep.subr.mxu0 0.0
    %1960 = vmatpush1.msra.mxu0 0.0
    %1961 = vmatprep.mubr.f32.mxu0 0.0
    %1962 = vmatmul.mubr.f32.gmra.mrb[0].mxu0 %v1895
    %v1963 = vpop.f32.mrb[0].mxu0
    %v1964 = vadd.f32 0.0, %v1963
    %v1965 = vpop.f32.mrb[0].mxu0
    %1966 = vdwg.mxu0
    %v1967 = vadd.f32 %v1894, %v1964
    %v1968 = vld [vmem:[#allocation3] sm:$0x3]
    %v1969 = vsel %vm425, %v1889, 0
    %1971 = vmatprep.subr.mxu0 0.0
    %1972 = vmatpush1.msra.mxu0 %v90
    %1973 = vmatprep.subr.mxu0 0.0
    %1974 = vmatpush1.msra.mxu0 %v91
    %1975 = vmatprep.subr.mxu0 0.0
    %1976 = vmatpush1.msra.mxu0 0.0
    %1977 = vmatprep.subr.mxu0 0.0
    %1978 = vmatpush1.msra.mxu0 0.0
    %1979 = vmatprep.subr.mxu0 0.0
    %1980 = vmatpush1.msra.mxu0 0.0
    %1981 = vmatprep.subr.mxu0 0.0
    %1982 = vmatpush1.msra.mxu0 0.0
    %1983 = vmatprep.subr.mxu0 0.0
    %1984 = vmatpush1.msra.mxu0 0.0
    %1985 = vmatprep.subr.mxu0 0.0
    %1986 = vmatpush1.msra.mxu0 0.0
    %1987 = vmatprep.subr.mxu0 0.0
    %1988 = vmatpush1.msra.mxu0 0.0
    %1989 = vmatprep.subr.mxu0 0.0
    %1990 = vmatpush1.msra.mxu0 0.0
    %1991 = vmatprep.subr.mxu0 0.0
    %1992 = vmatpush1.msra.mxu0 0.0
    %1993 = vmatprep.subr.mxu0 0.0
    %1994 = vmatpush1.msra.mxu0 0.0
    %1995 = vmatprep.subr.mxu0 0.0
    %1996 = vmatpush1.msra.mxu0 0.0
    %1997 = vmatprep.subr.mxu0 0.0
    %1998 = vmatpush1.msra.mxu0 0.0
    %1999 = vmatprep.subr.mxu0 0.0
    %2000 = vmatpush1.msra.mxu0 0.0
    %2001 = vmatprep.subr.mxu0 0.0
    %2002 = vmatpush1.msra.mxu0 0.0
    %2003 = vmatprep.subr.mxu0 0.0
    %2004 = vmatpush1.msra.mxu0 0.0
    %2005 = vmatprep.subr.mxu0 0.0
    %2006 = vmatpush1.msra.mxu0 0.0
    %2007 = vmatprep.subr.mxu0 0.0
    %2008 = vmatpush1.msra.mxu0 0.0
    %2009 = vmatprep.subr.mxu0 0.0
    %2010 = vmatpush1.msra.mxu0 0.0
    %2011 = vmatprep.subr.mxu0 0.0
    %2012 = vmatpush1.msra.mxu0 0.0
    %2013 = vmatprep.subr.mxu0 0.0
    %2014 = vmatpush1.msra.mxu0 0.0
    %2015 = vmatprep.subr.mxu0 0.0
    %2016 = vmatpush1.msra.mxu0 0.0
    %2017 = vmatprep.subr.mxu0 0.0
    %2018 = vmatpush1.msra.mxu0 0.0
    %2019 = vmatprep.subr.mxu0 0.0
    %2020 = vmatpush1.msra.mxu0 0.0
    %2021 = vmatprep.subr.mxu0 0.0
    %2022 = vmatpush1.msra.mxu0 0.0
    %2023 = vmatprep.subr.mxu0 0.0
    %2024 = vmatpush1.msra.mxu0 0.0
    %2025 = vmatprep.subr.mxu0 0.0
    %2026 = vmatpush1.msra.mxu0 0.0
    %2027 = vmatprep.subr.mxu0 0.0
    %2028 = vmatpush1.msra.mxu0 0.0
    %2029 = vmatprep.subr.mxu0 0.0
    %2030 = vmatpush1.msra.mxu0 0.0
    %2031 = vmatprep.subr.mxu0 0.0
    %2032 = vmatpush1.msra.mxu0 0.0
    %2033 = vmatprep.subr.mxu0 0.0
    %2034 = vmatpush1.msra.mxu0 0.0
    %2035 = vmatprep.mubr.f32.mxu0 0.0
    %2036 = vmatmul.mubr.f32.gmra.mrb[0].mxu0 %v1969
    %v2037 = vpop.f32.mrb[0].mxu0
    %v2038 = vadd.f32 0.0, %v2037
    %v2039 = vpop.f32.mrb[0].mxu0
    %2040 = vdwg.mxu0
    %v2041 = vadd.f32 %v1968, %v2038
    %v2042 = vxor.u32 %v1967, 2147483648
    %v2043 = vmul.f32 %v2042, 1.442695
    %v2044 = vpow.pop %v2043
    %v2045 = vadd.f32 %v2044, 1.0
    %v2046 = vrcp.pop %v2045
    %v2047 = vmul.f32 1.0, %v2046
    %v2048 = vtanh.pop %v1967
    %v2049 = vmul.f32 %v2047, %v1850
    %2051 = vrot.lane.b32.xlu0 %v2048, 96
    %v2052 = vpop.permute.xlu0 %2051
    %v2054 = vmul.f32 %v2047, %v2052
    %2056 = vrot.lane.b32.xlu0 %v2054, 16
    %v2057 = vpop.permute.xlu0 %2056
    %v2059 = vadd.f32 %v2049, %v2057
    %v2060 = vtanh.pop %v2059
    %2062 = vrot.lane.b32.xlu0 %v2060, 32
    %v2063 = vpop.permute.xlu0 %2062
    %v2065 = vmul.f32 %v2047, %v2063
    %v2066 = vxor.u32 %v2041, 2147483648
    %v2067 = vmul.f32 %v2066, 1.442695
    %v2068 = vpow.pop %v2067
    %v2069 = vadd.f32 %v2068, 1.0
    %v2070 = vrcp.pop %v2069
    %v2071 = vmul.f32 1.0, %v2070
    %v2072 = vtanh.pop %v2041
    %v2073 = vmul.f32 %v2071, %v1874
    %2075 = vrot.lane.b32.xlu0 %v2072, 96
    %v2076 = vpop.permute.xlu0 %2075
    %v2078 = vmul.f32 %v2071, %v2076
    %2080 = vrot.lane.b32.xlu0 %v2078, 16
    %v2081 = vpop.permute.xlu0 %2080
    %v2083 = vadd.f32 %v2073, %v2081
    %v2084 = vtanh.pop %v2083
    %2086 = vrot.lane.b32.xlu0 %v2084, 32
    %v2087 = vpop.permute.xlu0 %2086
    %v2089 = vmul.f32 %v2071, %v2087
    %2091 = vrot.lane.b32.xlu0 %v2065, 80
    %v2092 = vpop.permute.xlu0 %2091
    %s2094 = scalar_lea.vmem [#allocation4], 14
    %2095 = vst.msk [vmem:[%s2094] sm:$0x3] %vm625, %v2092
    %2097 = vrot.lane.b32.xlu0 %v2089, 80
    %v2098 = vpop.permute.xlu0 %2097
    %2100 = vst.msk [vmem:[#allocation5] sm:$0x3] %vm625, %v2098
    %v2101 = vld [vmem:[%s7] sm:$0x1]
    %v2102 = vld [vmem:[%s7 + $0x1] sm:$0x1]
    %v2103 = vld [vmem:[#allocation4] sm:$0x3]
    %v2104 = vld [vmem:[#allocation4 + $0x2] sm:$0x3]
    %v2105 = vld [vmem:[#allocation4 + $0x4] sm:$0x3]
    %v2106 = vld [vmem:[#allocation4 + $0x6] sm:$0x3]
    %v2107 = vld [vmem:[#allocation4 + $0x8] sm:$0x3]
    %v2108 = vld [vmem:[#allocation4 + $0xa] sm:$0x3]
    %v2109 = vld [vmem:[#allocation4 + $0xc] sm:$0x3]
    %v2110 = vld [vmem:[#allocation4 + $0xe] sm:$0x3]
    %v2111 = vlaneseq
    %v2112 = vshrl.u32 %v2111, 7
    %v2113 = vsub.s32 0, %v2112
    %v2114 = vrot.slane %v2101, %v2113
    %v2115 = vmul.f32 %v2103, %v2114
    %v2116 = vmul.f32 %v2104, %v2114
    %v2117 = vmul.f32 %v2105, %v2114
    %v2118 = vmul.f32 %v2106, %v2114
    %v2119 = vmul.f32 %v2107, %v2114
    %v2120 = vmul.f32 %v2108, %v2114
    %v2121 = vmul.f32 %v2109, %v2114
    %v2122 = vmul.f32 %v2110, %v2114
    %v2123 = vsel %vm625, %v2115, 0.0
    %2124 = vadd.xlane.f32.xlu0 %v2123
    %v2125 = vpop.xlane.xlu0 %2124
    %v2126 = vsel %vm625, %v2116, 0.0
    %2127 = vadd.xlane.f32.xlu0 %v2126
    %v2128 = vpop.xlane.xlu0 %2127
    %v2129 = vsel %vm625, %v2117, 0.0
    %2130 = vadd.xlane.f32.xlu0 %v2129
    %v2131 = vpop.xlane.xlu0 %2130
    %v2132 = vsel %vm625, %v2118, 0.0
    %2133 = vadd.xlane.f32.xlu0 %v2132
    %v2134 = vpop.xlane.xlu0 %2133
    %v2135 = vsel %vm625, %v2119, 0.0
    %2136 = vadd.xlane.f32.xlu0 %v2135
    %v2137 = vpop.xlane.xlu0 %2136
    %v2138 = vsel %vm625, %v2120, 0.0
    %2139 = vadd.xlane.f32.xlu0 %v2138
    %v2140 = vpop.xlane.xlu0 %2139
    %v2141 = vsel %vm625, %v2121, 0.0
    %2142 = vadd.xlane.f32.xlu0 %v2141
    %v2143 = vpop.xlane.xlu0 %2142
    %v2144 = vsel %vm625, %v2122, 0.0
    %2145 = vadd.xlane.f32.xlu0 %v2144
    %v2146 = vpop.xlane.xlu0 %2145
    %v2147 = vld [vmem:[#allocation5] sm:$0x3]
    %v2148 = vld [vmem:[#allocation5 + $0x2] sm:$0x3]
    %v2149 = vld [vmem:[#allocation5 + $0x4] sm:$0x3]
    %v2150 = vld [vmem:[#allocation5 + $0x6] sm:$0x3]
    %v2151 = vld [vmem:[#allocation5 + $0x8] sm:$0x3]
    %v2152 = vld [vmem:[#allocation5 + $0xa] sm:$0x3]
    %v2153 = vld [vmem:[#allocation5 + $0xc] sm:$0x3]
    %v2154 = vld [vmem:[#allocation5 + $0xe] sm:$0x3]
    %v2155 = vlaneseq
    %v2156 = vshrl.u32 %v2155, 7
    %v2157 = vsub.s32 0, %v2156
    %v2158 = vrot.slane %v2102, %v2157
    %v2159 = vmul.f32 %v2147, %v2158
    %v2160 = vmul.f32 %v2148, %v2158
    %v2161 = vmul.f32 %v2149, %v2158
    %v2162 = vmul.f32 %v2150, %v2158
    %v2163 = vmul.f32 %v2151, %v2158
    %v2164 = vmul.f32 %v2152, %v2158
    %v2165 = vmul.f32 %v2153, %v2158
    %v2166 = vmul.f32 %v2154, %v2158
    %v2167 = vsel %vm625, %v2159, 0.0
    %2168 = vadd.xlane.f32.xlu0 %v2167
    %v2169 = vpop.xlane.xlu0 %2168
    %v2170 = vsel %vm625, %v2160, 0.0
    %2171 = vadd.xlane.f32.xlu0 %v2170
    %v2172 = vpop.xlane.xlu0 %2171
    %v2173 = vsel %vm625, %v2161, 0.0
    %2174 = vadd.xlane.f32.xlu0 %v2173
    %v2175 = vpop.xlane.xlu0 %2174
    %v2176 = vsel %vm625, %v2162, 0.0
    %2177 = vadd.xlane.f32.xlu0 %v2176
    %v2178 = vpop.xlane.xlu0 %2177
    %v2179 = vsel %vm625, %v2163, 0.0
    %2180 = vadd.xlane.f32.xlu0 %v2179
    %v2181 = vpop.xlane.xlu0 %2180
    %v2182 = vsel %vm625, %v2164, 0.0
    %2183 = vadd.xlane.f32.xlu0 %v2182
    %v2184 = vpop.xlane.xlu0 %2183
    %v2185 = vsel %vm625, %v2165, 0.0
    %2186 = vadd.xlane.f32.xlu0 %v2185
    %v2187 = vpop.xlane.xlu0 %2186
    %v2188 = vsel %vm625, %v2166, 0.0
    %2189 = vadd.xlane.f32.xlu0 %v2188
    %v2190 = vpop.xlane.xlu0 %2189
    %v2191 = vadd.f32 %v2125, %v2169
    %v2192 = vadd.f32 %v2128, %v2172
    %v2193 = vadd.f32 %v2131, %v2175
    %v2194 = vadd.f32 %v2134, %v2178
    %v2195 = vadd.f32 %v2137, %v2181
    %v2196 = vadd.f32 %v2140, %v2184
    %v2197 = vadd.f32 %v2143, %v2187
    %v2198 = vadd.f32 %v2146, %v2190
    %s2199 = sld [smem:[#allocation6]]
    %v2200 = vstv %s2199
    %v2201 = vadd.f32 %v2191, %v2200
    %v2202 = vadd.f32 %v2192, %v2200
    %v2203 = vadd.f32 %v2193, %v2200
    %v2204 = vadd.f32 %v2194, %v2200
    %v2205 = vadd.f32 %v2195, %v2200
    %v2206 = vadd.f32 %v2196, %v2200
    %v2207 = vadd.f32 %v2197, %v2200
    %v2208 = vadd.f32 %v2198, %v2200
    %v2209 = vxor.u32 %v2201, 2147483648
    %v2210 = vxor.u32 %v2202, 2147483648
    %v2211 = vxor.u32 %v2203, 2147483648
    %v2212 = vxor.u32 %v2204, 2147483648
    %v2213 = vxor.u32 %v2205, 2147483648
    %v2214 = vxor.u32 %v2206, 2147483648
    %v2215 = vxor.u32 %v2207, 2147483648
    %v2216 = vxor.u32 %v2208, 2147483648
    %v2217 = vmul.f32 %v2209, 1.442695
    %v2218 = vpow.pop %v2217
    %v2219 = vmul.f32 %v2210, 1.442695
    %v2220 = vpow.pop %v2219
    %v2221 = vmul.f32 %v2211, 1.442695
    %v2222 = vpow.pop %v2221
    %v2223 = vmul.f32 %v2212, 1.442695
    %v2224 = vpow.pop %v2223
    %v2225 = vmul.f32 %v2213, 1.442695
    %v2226 = vpow.pop %v2225
    %v2227 = vmul.f32 %v2214, 1.442695
    %v2228 = vpow.pop %v2227
    %v2229 = vmul.f32 %v2215, 1.442695
    %v2230 = vpow.pop %v2229
    %v2231 = vmul.f32 %v2216, 1.442695
    %v2232 = vpow.pop %v2231
    %v2233 = vadd.f32 %v2218, 1.0
    %v2234 = vadd.f32 %v2220, 1.0
    %v2235 = vadd.f32 %v2222, 1.0
    %v2236 = vadd.f32 %v2224, 1.0
    %v2237 = vadd.f32 %v2226, 1.0
    %v2238 = vadd.f32 %v2228, 1.0
    %v2239 = vadd.f32 %v2230, 1.0
    %v2240 = vadd.f32 %v2232, 1.0
    %v2241 = vrcp.pop %v2233
    %v2242 = vmul.f32 1.0, %v2241
    %v2243 = vrcp.pop %v2234
    %v2244 = vmul.f32 1.0, %v2243
    %v2245 = vrcp.pop %v2235
    %v2246 = vmul.f32 1.0, %v2245
    %v2247 = vrcp.pop %v2236
    %v2248 = vmul.f32 1.0, %v2247
    %v2249 = vrcp.pop %v2237
    %v2250 = vmul.f32 1.0, %v2249
    %v2251 = vrcp.pop %v2238
    %v2252 = vmul.f32 1.0, %v2251
    %v2253 = vrcp.pop %v2239
    %v2254 = vmul.f32 1.0, %v2253
    %v2255 = vrcp.pop %v2240
    %v2256 = vmul.f32 1.0, %v2255
    %v2265 = vlaneseq
    %v2266 = vand.u32 %v2265, 127
    %v2267 = vlaneseq
    %v2268 = vshrl.u32 %v2267, 7
    %v2269 = vsub.s32 %v2266, %v2268
    %v2270 = vrot.slane %v2242, %v2269
    %v2271 = vlaneseq
    %v2272 = vshrl.u32 %v2271, 7
    %v2273 = vsub.s32 %v2266, %v2272
    %v2274 = vrot.slane %v2244, %v2273
    %v2275 = vlaneseq
    %v2276 = vshrl.u32 %v2275, 7
    %v2277 = vsub.s32 %v2266, %v2276
    %v2278 = vrot.slane %v2246, %v2277
    %v2279 = vlaneseq
    %v2280 = vshrl.u32 %v2279, 7
    %v2281 = vsub.s32 %v2266, %v2280
    %v2282 = vrot.slane %v2248, %v2281
    %v2283 = vlaneseq
    %v2284 = vshrl.u32 %v2283, 7
    %v2285 = vsub.s32 %v2266, %v2284
    %v2286 = vrot.slane %v2250, %v2285
    %v2287 = vlaneseq
    %v2288 = vshrl.u32 %v2287, 7
    %v2289 = vsub.s32 %v2266, %v2288
    %v2290 = vrot.slane %v2252, %v2289
    %v2291 = vlaneseq
    %v2292 = vshrl.u32 %v2291, 7
    %v2293 = vsub.s32 %v2266, %v2292
    %v2294 = vrot.slane %v2254, %v2293
    %v2295 = vlaneseq
    %v2296 = vshrl.u32 %v2295, 7
    %v2297 = vsub.s32 %v2266, %v2296
    %v2298 = vrot.slane %v2256, %v2297
    %vm2299 = vcmask 1041409
    %v2300 = vsel %vm2299, %v2274, %v2270
    %vm2301 = vcmask 1042434
    %v2302 = vsel %vm2301, %v2278, %v2300
    %vm2303 = vcmask 1043459
    %v2304 = vsel %vm2303, %v2282, %v2302
    %vm2305 = vcmask 1044484
    %v2306 = vsel %vm2305, %v2286, %v2304
    %vm2307 = vcmask 1045509
    %v2308 = vsel %vm2307, %v2290, %v2306
    %vm2309 = vcmask 1046534
    %v2310 = vsel %vm2309, %v2294, %v2308
    %vm2311 = vcmask 1047559
    %v2312 = vsel %vm2311, %v2298, %v2310
    %vm2314 = vcmask 15360
    %2315 = vst.msk [vmem:[%s9] sm:$0xff] %vm2314, %v2312
    // Predicated region
    $region54: #{tpu_custom_call.1} parent=1 // pred_check
      _
    $region55: #{tpu_custom_call.1} parent=1 // pred_check_branch
      %2317 = sbr.rel (0) target = $region57
    $region56: #{tpu_custom_call.1} parent=1 // pred_region
      _
    $region57: #{tpu_custom_call.1} parent=1 // pred_fallthru
      _
    // Predicated region
    $region58: #{tpu_custom_call.1} parent=1 // pred_check
      _
    $region59: #{tpu_custom_call.1} parent=1 // pred_check_branch
      %2319 = sbr.rel (0) target = $region61
    $region60: #{tpu_custom_call.1} parent=1 // pred_region
      _
    $region61: #{tpu_custom_call.1} parent=1 // pred_fallthru
      _
    %2320 = vsyncpa [#allocation8], 1
    %2321 = vsyncpa [#allocation10], 1
    %2322 = vsyncpa [#allocation13], 1

</llo_original>
